<compile_context>
chip_gen: v7x
topology: tpu7x:2x2x1
jax: 0.10.0
libtpu: 0.0.40
codegen_flags: <defaults>
</compile_context>

<pallas_src>
import functools

import numpy as np
import jax
import jax.numpy as jnp
from jax import lax
from jax.experimental import pallas as pl
from jax.experimental.pallas import tpu as pltpu

MIRNA_SPLIT = 812   # hard-coded node-type threshold from the reference module
CP = 128            # padded channel width (one full lane group)
TM = 256            # row tile for both kernels


# --------------------------------------------------------------------------
# Kernel 1: fused homo+hete normalized-adjacency aggregation (+ bias).
# A single bf16 adjacency block is split in-kernel into homo / hete parts:
#   out[:, :CP] = where(same_type, A, 0) @ xW_homo + b_homo
#   out[:, CP:] = where(same_type, 0, A) @ xW_hete + b_hete
# bf16 MXU inputs, f32 accumulation, bf16 lane-dense (tm, 256) writeback.
# --------------------------------------------------------------------------
def agg_split_kernel(a_ref, xwh_ref, xwt_ref, bh_ref, bt_ref, o_ref, *, cp, tm, split):
    a = a_ref[...]                                              # [tm, N] bf16
    r_idx = lax.broadcasted_iota(jnp.int32, a.shape, 0) + pl.program_id(0) * tm
    c_idx = lax.broadcasted_iota(jnp.int32, a.shape, 1)
    same = (r_idx < split) == (c_idx < split)                   # same node type => homo
    zero = jnp.zeros_like(a)
    a_homo = jnp.where(same, a, zero)                           # VPU selects hide under MXU
    a_hete = jnp.where(same, zero, a)
    h = jnp.dot(a_homo, xwh_ref[...], preferred_element_type=jnp.float32)
    t = jnp.dot(a_hete, xwt_ref[...], preferred_element_type=jnp.float32)
    o_ref[:, :cp] = (h + bh_ref[...]).astype(o_ref.dtype)
    o_ref[:, cp:] = (t + bt_ref[...]).astype(o_ref.dtype)


def agg_split(A, xW_homo, xW_hete, b_homo, b_hete, *, tm, cp=CP, split=MIRNA_SPLIT):
    NPAD, N = A.shape
    kern = functools.partial(agg_split_kernel, cp=cp, tm=tm, split=split)
    return pl.pallas_call(
        kern,
        out_shape=jax.ShapeDtypeStruct((NPAD, 2 * cp), jnp.bfloat16),
        grid_spec=pltpu.PrefetchScalarGridSpec(
            num_scalar_prefetch=0,
            grid=(NPAD // tm,),
            in_specs=[
                pl.BlockSpec((tm, N), lambda i: (i, 0)),    # A block (bf16, streamed)
                pl.BlockSpec((N, cp), lambda i: (0, 0)),    # xW_homo (bf16, resident)
                pl.BlockSpec((N, cp), lambda i: (0, 0)),    # xW_hete (bf16, resident)
                pl.BlockSpec((1, cp), lambda i: (0, 0)),    # b_homo (f32, padded)
                pl.BlockSpec((1, cp), lambda i: (0, 0)),    # b_hete (f32, padded)
            ],
            out_specs=pl.BlockSpec((tm, 2 * cp), lambda i: (i, 0)),
        ),
        compiler_params=pltpu.CompilerParams(
            dimension_semantics=("parallel",),
            vmem_limit_bytes=32 * 1024 * 1024,
        ),
    )(A, xW_homo, xW_hete, b_homo, b_hete)


# --------------------------------------------------------------------------
# Kernel 2: bilinear pooling against the masked neighbour-mean zbar + gated
# leaky-relu fusion + residual.  Flattened outer-product bilinear form:
#   xr = xi @ R  (R[p, p*O+q] = 1, exact bf16) ; zr = zbar @ T (T[q, p*O+q] = 1)
#   y  = (xr * zr) @ Wf  with  Wf[p*O+q, o] = W_bil[o, p, q]
# chunked over the O*O axis.  zbar lane `Cout` carries the has-neighbour flag;
# the bilinear bias is gated in-kernel as has * b_bil.
# --------------------------------------------------------------------------
def bilinear_fuse_kernel(agg_ref, z_ref, b_ref, r_ref, t_ref, wf_ref, g_ref,
                         o_ref, *, cp, cout, chunk):
    xh = agg_ref[:, :cp]                                  # [tm, CP] bf16 x_homo_t
    xi = agg_ref[:, cp:]                                  # [tm, CP] bf16 x_hete_t
    z = z_ref[...]                                        # [tm, CP] bf16 (lane cout = has)
    oo = r_ref.shape[1]
    acc = jnp.zeros((xi.shape[0], cp), jnp.float32)
    for lo in range(0, oo, chunk):                        # small static loop (OO / chunk)
        xr = jnp.dot(xi, r_ref[:, lo:lo + chunk], preferred_element_type=jnp.float32)
        zr = jnp.dot(z, t_ref[:, lo:lo + chunk], preferred_element_type=jnp.float32)
        prod = (xr * zr).astype(jnp.bfloat16)             # bf16 MXU operand, exact-ish
        acc = acc + jnp.dot(prod, wf_ref[lo:lo + chunk, :],
                            preferred_element_type=jnp.float32)
    has = z[:, cout:cout + 1].astype(jnp.float32)         # [tm, 1] 0/1 flag
    bil = acc + has * b_ref[...]                          # bias only where a neighbour exists
    leaky = jnp.where(bil >= 0.0, bil, 0.01 * bil)        # F.leaky_relu
    g = g_ref[...]                                        # [1, CP], zero in padding lanes
    o_ref[...] = xh.astype(jnp.float32) + g * leaky + (1.0 - g) * xi.astype(jnp.float32)


def bilinear_fuse(agg, zbar_pad, b_bil, R, T, Wf, gate_pad, *, tm, cp=CP, cout=None, chunk=256):
    NPAD = agg.shape[0]
    oo = R.shape[1]
    kern = functools.partial(bilinear_fuse_kernel, cp=cp, cout=cout, chunk=chunk)
    return pl.pallas_call(
        kern,
        out_shape=jax.ShapeDtypeStruct((NPAD, cp), jnp.float32),
        grid_spec=pltpu.PrefetchScalarGridSpec(
            num_scalar_prefetch=0,
            grid=(NPAD // tm,),
            in_specs=[
                pl.BlockSpec((tm, 2 * cp), lambda i: (i, 0)),   # [x_homo_t | x_hete_t] bf16
                pl.BlockSpec((tm, cp), lambda i: (i, 0)),       # zbar bf16 (lane cout = has)
                pl.BlockSpec((1, cp), lambda i: (0, 0)),        # b_bil (f32, padded)
                pl.BlockSpec((cp, oo), lambda i: (0, 0)),       # R bf16 (resident)
                pl.BlockSpec((cp, oo), lambda i: (0, 0)),       # T bf16 (resident)
                pl.BlockSpec((oo, cp), lambda i: (0, 0)),       # Wf bf16 (resident)
                pl.BlockSpec((1, cp), lambda i: (0, 0)),        # sigmoid(gate_weight)
            ],
            out_specs=pl.BlockSpec((tm, cp), lambda i: (i, 0)),
        ),
        compiler_params=pltpu.CompilerParams(
            dimension_semantics=("parallel",),
            vmem_limit_bytes=32 * 1024 * 1024,
        ),
    )(agg, zbar_pad, b_bil, R, T, Wf, gate_pad)


# --------------------------------------------------------------------------
# Forward pass (glue in plain JAX, hot paths in the two kernels above)
# --------------------------------------------------------------------------
def gated_graph_conv_forward(params, x, edge_index, *, k=3):
    N, _ = x.shape
    Cout = params["W_homo"].shape[0]
    NPAD = ((N + TM - 1) // TM) * TM
    pad_rows = NPAD - N

    row, col = edge_index[0], edge_index[1]

    # degree / symmetric normalization (guard zero-degree nodes)
    deg = jnp.zeros((N,), jnp.float32).at[col].add(jnp.ones_like(col, jnp.float32))
    deg_inv_sqrt = jnp.where(deg > 0, deg ** -0.5, 0.0)
    norm = deg_inv_sqrt[row] * deg_inv_sqrt[col]

    # ONE dense normalized adjacency (kernel 1 splits homo/hete in-kernel)
    A = jnp.zeros((N, N), jnp.float32).at[row, col].add(norm)
    A_p = jnp.pad(A, ((0, pad_rows), (0, 0))).astype(jnp.bfloat16)

    # hoist the Linear weight matmuls out of the kernel; pad channels to 128 lanes
    def prep_xw(W):
        xw = x.astype(jnp.float32) @ W.T
        return jnp.pad(xw, ((0, 0), (0, CP - Cout))).astype(jnp.bfloat16)

    xW_homo = prep_xw(params["W_homo"])
    xW_hete = prep_xw(params["W_hete"])
    b_homo = jnp.pad(params["b_homo"], (0, CP - Cout)).reshape(1, CP).astype(jnp.float32)
    b_hete = jnp.pad(params["b_hete"], (0, CP - Cout)).reshape(1, CP).astype(jnp.float32)

    agg = agg_split(A_p, xW_homo, xW_hete, b_homo, b_hete, tm=TM)   # [NPAD, 2*CP] bf16
    x_hete_t = agg[:N, CP:]                                         # bf16, padding lanes zero

    # top-k hetero neighbours per node (by edge norm), masked neighbour mean.
    # TODO(synk): the reference loops index bilinear_feats / neighbours by *edge*
    # positions (an apparent bug); we implement the intended node-indexed top-k
    # semantics the loops describe.
    node_is_mir = jnp.arange(N) < MIRNA_SPLIT
    hete_mask = node_is_mir[:, None] != node_is_mir[None, :]
    A_hete_vals = jnp.where(hete_mask, A, 0.0)
    vals, idx = lax.top_k(A_hete_vals, k)                           # [N, k]
    nbr_mask = (vals > 0.0).astype(jnp.float32)                     # [N, k]
    gathered = x_hete_t[idx]                                        # [N, k, CP] bf16
    z = jnp.einsum("nk,nkc->nc", nbr_mask, gathered.astype(jnp.float32))
    count = jnp.sum(nbr_mask, axis=1, keepdims=True)                # [N, 1]
    zbar = z / jnp.maximum(count, 1.0)                              # masked neighbour mean
    has = (count > 0.0).astype(jnp.float32)                         # [N, 1]
    zbar = zbar.at[:, Cout].set(has[:, 0])                          # stash flag in padding lane
    zbar_pad = jnp.pad(zbar, ((0, pad_rows), (0, 0))).astype(jnp.bfloat16)

    # flattening matrices + bilinear weight (bf16, R/T are 0/1 so exact)
    OO = Cout * Cout
    eyeO = jnp.eye(Cout, dtype=jnp.float32)
    R = jnp.zeros((CP, OO), jnp.float32).at[:Cout].set(
        jnp.repeat(eyeO, Cout, axis=1)).astype(jnp.bfloat16)
    T = jnp.zeros((CP, OO), jnp.float32).at[:Cout].set(
        jnp.tile(eyeO, (1, Cout))).astype(jnp.bfloat16)
    Wf = jnp.transpose(params["W_bil"], (1, 2, 0)).reshape(OO, Cout)
    Wf = jnp.pad(Wf, ((0, 0), (0, CP - Cout))).astype(jnp.bfloat16)
    b_bil = jnp.pad(params["b_bil"], (0, CP - Cout)).reshape(1, CP).astype(jnp.float32)
    gate = jax.nn.sigmoid(params["gate_weight"])
    gate_pad = jnp.pad(gate, (0, CP - Cout)).reshape(1, CP).astype(jnp.float32)

    chunk = 256 if OO % 256 == 0 else OO
    out_pad = bilinear_fuse(agg, zbar_pad, b_bil, R, T, Wf, gate_pad,
                            tm=TM, cp=CP, cout=Cout, chunk=chunk)
    return out_pad[:N, :Cout]


# --------------------------------------------------------------------------
# pure-JAX f32 reference (same math, no Pallas, no bf16) for a sanity check
# --------------------------------------------------------------------------
def reference_forward(params, x, edge_index, *, k=3):
    N = x.shape[0]
    row, col = edge_index[0], edge_index[1]
    deg = jnp.zeros((N,), jnp.float32).at[col].add(jnp.ones_like(col, jnp.float32))
    dis = jnp.where(deg > 0, deg ** -0.5, 0.0)
    norm = dis[row] * dis[col]
    mir_r = row < MIRNA_SPLIT
    mir_c = col < MIRNA_SPLIT
    mask_homo = (mir_r & mir_c) | (~mir_r & ~mir_c)
    mask_hete = ~mask_homo
    A_homo = jnp.zeros((N, N), jnp.float32).at[row, col].add(jnp.where(mask_homo, norm, 0.0))
    A_hete = jnp.zeros((N, N), jnp.float32).at[row, col].add(jnp.where(mask_hete, norm, 0.0))
    x_homo_t = (A_homo @ x) @ params["W_homo"].T + params["b_homo"]
    x_hete_t = (A_hete @ x) @ params["W_hete"].T + params["b_hete"]
    vals, idx = lax.top_k(A_hete, k)
    mask = (vals > 0.0).astype(jnp.float32)                     # [N, k]
    xnk = x_hete_t[idx]                                         # [N, k, O]
    y = jnp.einsum("np,opq,nkq->nko", x_hete_t, params["W_bil"], xnk) + params["b_bil"]
    acc = jnp.sum(mask[:, :, None] * y, axis=1)
    count = jnp.sum(mask, axis=1, keepdims=True)
    bil = jnp.where(count > 0.0, acc / jnp.maximum(count, 1.0), 0.0)
    leaky = jnp.where(bil >= 0.0, bil, 0.01 * bil)
    gate = jax.nn.sigmoid(params["gate_weight"])
    fused = gate * leaky + (1.0 - gate) * x_hete_t
    return x_homo_t + fused


# --------------------------------------------------------------------------
if __name__ == "__main__":
    N = 1024           # 812 miRNA nodes + 212 disease nodes (threshold is 812)
    C_IN = 32
    C_OUT = 32
    K = 3
    E0 = 2000

    key = jax.random.PRNGKey(0)
    k0, k1, k2, k3, k4, k5, k6 = jax.random.split(key, 7)

    # deterministic parameter init (synthetic; shapes from the module __init__)
    params = {
        "W_homo": 0.10 * jax.random.normal(k0, (C_OUT, C_IN), jnp.float32),
        "b_homo": 0.05 * jax.random.normal(k1, (C_OUT,), jnp.float32),
        "W_hete": 0.10 * jax.random.normal(k2, (C_OUT, C_IN), jnp.float32),
        "b_hete": 0.05 * jax.random.normal(k3, (C_OUT,), jnp.float32),
        "W_bil": 0.05 * jax.random.normal(k4, (C_OUT, C_OUT, C_OUT), jnp.float32),
        "b_bil": 0.05 * jax.random.normal(k5, (C_OUT,), jnp.float32),
        "gate_weight": jnp.full((C_OUT,), 0.5, jnp.float32),   # nn.init.constant_(0.5)
    }

    # node features
    x = jax.random.normal(k6, (N, C_IN), jnp.float32)

    # deterministic symmetric, de-duplicated edge list
    eu, ev = jax.random.split(jax.random.PRNGKey(42))
    u = np.asarray(jax.random.randint(eu, (E0,), 0, N))
    v = np.asarray(jax.random.randint(ev, (E0,), 0, N))
    keep = u != v
    u, v = u[keep], v[keep]
    rows = np.concatenate([u, v])
    cols = np.concatenate([v, u])
    codes = np.unique(rows.astype(np.int64) * N + cols.astype(np.int64))
    rows = (codes // N).astype(np.int32)
    cols = (codes % N).astype(np.int32)
    edge_index = jnp.stack([jnp.asarray(rows), jnp.asarray(cols)], axis=0)

    out = gated_graph_conv_forward(params, x, edge_index, k=K)
    out = jax.block_until_ready(out)

    ref = jax.block_until_ready(reference_forward(params, x, edge_index, k=K))
    assert out.shape == (N, C_OUT)
    assert bool(jnp.all(jnp.isfinite(out)))
    # bf16 adjacency / xW / aggregated features / bilinear operands (all with
    # f32 MXU accumulation) vs. the pure-f32 reference -> 2.5e-2 tolerance
    np.testing.assert_allclose(np.asarray(out), np.asarray(ref), rtol=2.5e-2, atol=2.5e-2)

    print("KERNEL_OK")
</pallas_src>

<mosaic_0001>
module attributes {stable_mosaic.version = 11 : i64} {
  func.func @agg_split_kernel(%arg0: i32, %arg1: memref<256x1024xbf16, #tpu.memory_space<vmem>>, %arg2: memref<1024x128xbf16, #tpu.memory_space<vmem>>, %arg3: memref<1024x128xbf16, #tpu.memory_space<vmem>>, %arg4: memref<1x128xf32, #tpu.memory_space<vmem>>, %arg5: memref<1x128xf32, #tpu.memory_space<vmem>>, %arg6: memref<256x256xbf16, #tpu.memory_space<vmem>>) attributes {dimension_semantics = [#tpu.dimension_semantics<parallel>], iteration_bounds = array<i64: 4>, scalar_prefetch = 0 : i64, scratch_operands = 0 : i64, tpu.core_type = #tpu.core_type<tc>, window_params = [{transform_indices = @transform_0, window_bounds = array<i64: 256, 1024>}, {pipeline_mode = #tpu.pipeline_mode<synchronous>, transform_indices = @transform_1, window_bounds = array<i64: 1024, 128>}, {pipeline_mode = #tpu.pipeline_mode<synchronous>, transform_indices = @transform_2, window_bounds = array<i64: 1024, 128>}, {pipeline_mode = #tpu.pipeline_mode<synchronous>, transform_indices = @transform_3, window_bounds = array<i64: 1, 128>}, {pipeline_mode = #tpu.pipeline_mode<synchronous>, transform_indices = @transform_4, window_bounds = array<i64: 1, 128>}, {transform_indices = @transform_5, window_bounds = array<i64: 256, 256>}]} {
    %c0 = arith.constant 0 : index
    %c0_0 = arith.constant 0 : index
    %0 = vector.load %arg1[%c0, %c0_0] : memref<256x1024xbf16, #tpu.memory_space<vmem>>, vector<256x1024xbf16>
    %1 = tpu.iota {dimensions = array<i32: 0>} : vector<256x1024xi32>
    %c256_i32 = arith.constant 256 : i32
    %2 = arith.muli %arg0, %c256_i32 : i32
    %3 = vector.broadcast %2 : i32 to vector<256x1024xi32>
    %4 = arith.addi %1, %3 : vector<256x1024xi32>
    %5 = tpu.iota {dimensions = array<i32: 1>} : vector<256x1024xi32>
    %c812_i32 = arith.constant 812 : i32
    %6 = vector.broadcast %c812_i32 : i32 to vector<256x1024xi32>
    %7 = arith.cmpi slt, %4, %6 : vector<256x1024xi32>
    %c812_i32_1 = arith.constant 812 : i32
    %8 = vector.broadcast %c812_i32_1 : i32 to vector<256x1024xi32>
    %9 = arith.cmpi slt, %5, %8 : vector<256x1024xi32>
    %10 = arith.xori %7, %9 : vector<256x1024xi1>
    %cst = arith.constant dense<true> : vector<256x1024xi1>
    %11 = arith.xori %10, %cst : vector<256x1024xi1>
    %cst_2 = arith.constant 0.000000e+00 : bf16
    %12 = vector.broadcast %cst_2 : bf16 to vector<256x1024xbf16>
    %13 = arith.select %11, %0, %12 : vector<256x1024xi1>, vector<256x1024xbf16>
    %14 = arith.select %11, %12, %0 : vector<256x1024xi1>, vector<256x1024xbf16>
    %c0_3 = arith.constant 0 : index
    %c0_4 = arith.constant 0 : index
    %15 = vector.load %arg2[%c0_3, %c0_4] : memref<1024x128xbf16, #tpu.memory_space<vmem>>, vector<1024x128xbf16>
    %cst_5 = arith.constant dense<0.000000e+00> : vector<256x128xf32>
    %16 = tpu.matmul %13, %15, %cst_5 {dimension_numbers = #tpu.dot_dimension_numbers<[1], [0], [0], [1], [0, 0, 1, 1], [], []>} : vector<256x1024xbf16>, vector<1024x128xbf16>, vector<256x128xf32> -> vector<256x128xf32>
    %c0_6 = arith.constant 0 : index
    %c0_7 = arith.constant 0 : index
    %17 = vector.load %arg3[%c0_6, %c0_7] : memref<1024x128xbf16, #tpu.memory_space<vmem>>, vector<1024x128xbf16>
    %cst_8 = arith.constant dense<0.000000e+00> : vector<256x128xf32>
    %18 = tpu.matmul %14, %17, %cst_8 {dimension_numbers = #tpu.dot_dimension_numbers<[1], [0], [0], [1], [0, 0, 1, 1], [], []>} : vector<256x1024xbf16>, vector<1024x128xbf16>, vector<256x128xf32> -> vector<256x128xf32>
    %c0_9 = arith.constant 0 : index
    %c0_10 = arith.constant 0 : index
    %19 = vector.load %arg4[%c0_9, %c0_10] : memref<1x128xf32, #tpu.memory_space<vmem>>, vector<1x128xf32>
    %20 = vector.broadcast %19 : vector<1x128xf32> to vector<256x128xf32>
    %21 = arith.addf %16, %20 : vector<256x128xf32>
    %22 = arith.truncf %21 : vector<256x128xf32> to vector<256x128xbf16>
    %c0_11 = arith.constant 0 : index
    %c0_12 = arith.constant 0 : index
    %23 = vector.load %arg6[%c0_11, %c0_12] : memref<256x256xbf16, #tpu.memory_space<vmem>>, vector<256x128xbf16>
    tpu.vector_store %arg6[%c0_11, %c0_12], %22 {strides = array<i32>} : memref<256x256xbf16, #tpu.memory_space<vmem>>, vector<256x128xbf16>,
    %c0_13 = arith.constant 0 : index
    %c0_14 = arith.constant 0 : index
    %24 = vector.load %arg5[%c0_13, %c0_14] : memref<1x128xf32, #tpu.memory_space<vmem>>, vector<1x128xf32>
    %25 = vector.broadcast %24 : vector<1x128xf32> to vector<256x128xf32>
    %26 = arith.addf %18, %25 : vector<256x128xf32>
    %27 = arith.truncf %26 : vector<256x128xf32> to vector<256x128xbf16>
    %c0_15 = arith.constant 0 : index
    %c128 = arith.constant 128 : index
    %28 = vector.load %arg6[%c0_15, %c128] : memref<256x256xbf16, #tpu.memory_space<vmem>>, vector<256x128xbf16>
    tpu.vector_store %arg6[%c0_15, %c128], %27 {strides = array<i32>} : memref<256x256xbf16, #tpu.memory_space<vmem>>, vector<256x128xbf16>,
    return
  }
  func.func @transform_0(%arg0: i32) -> (i32, i32) {
    %c0_i32 = arith.constant 0 : i32
    %c0_i32_0 = arith.constant 0 : i32
    return %arg0, %c0_i32 : i32, i32
  }
  func.func @transform_1(%arg0: i32) -> (i32, i32) {
    %c0_i32 = arith.constant 0 : i32
    %c0_i32_0 = arith.constant 0 : i32
    %c0_i32_1 = arith.constant 0 : i32
    return %c0_i32, %c0_i32_0 : i32, i32
  }
  func.func @transform_2(%arg0: i32) -> (i32, i32) {
    %c0_i32 = arith.constant 0 : i32
    %c0_i32_0 = arith.constant 0 : i32
    %c0_i32_1 = arith.constant 0 : i32
    return %c0_i32, %c0_i32_0 : i32, i32
  }
  func.func @transform_3(%arg0: i32) -> (i32, i32) {
    %c0_i32 = arith.constant 0 : i32
    %c0_i32_0 = arith.constant 0 : i32
    %c0_i32_1 = arith.constant 0 : i32
    return %c0_i32, %c0_i32_0 : i32, i32
  }
  func.func @transform_4(%arg0: i32) -> (i32, i32) {
    %c0_i32 = arith.constant 0 : i32
    %c0_i32_0 = arith.constant 0 : i32
    %c0_i32_1 = arith.constant 0 : i32
    return %c0_i32, %c0_i32_0 : i32, i32
  }
  func.func @transform_5(%arg0: i32) -> (i32, i32) {
    %c0_i32 = arith.constant 0 : i32
    %c0_i32_0 = arith.constant 0 : i32
    return %arg0, %c0_i32 : i32, i32
  }
}

</mosaic_0001>

<llo_original>
// kernel: tpu_custom_call.1
$region0: #{tpu_custom_call.1}
  #allocation0 [shape = 'u32[]', space=smem, size = 0x4, offset = 0x4, fixed_abs, tag = 'smem constant byte address 0x4 - core index']
  #allocation1 [shape = 'u32[144,128]{1,0:T(1,128)}', space=vmem, size = 0x12000, scoped, tag = 'internal scratch']
  %s0 = inlined_call_operand.hbm [shape: bf16[1024,1024], index: 0, kind: input, shape index: {}]
  %s1 = inlined_call_operand.hbm [shape: bf16[1024,128], index: 1, kind: input, shape index: {}]
  %s2 = inlined_call_operand.hbm [shape: bf16[1024,128], index: 2, kind: input, shape index: {}]
  %s3 = inlined_call_operand.hbm [shape: f32[1,128], index: 3, kind: input, shape index: {}]
  %s4 = inlined_call_operand.hbm [shape: f32[1,128], index: 4, kind: input, shape index: {}]
  %s5 = inlined_call_operand.hbm [shape: bf16[1024,256], index: 5, kind: output, shape index: {}]
  %s6 = sld [smem:[#allocation0]]
  $region73: #{tpu_custom_call.1} parent=0
    _
  %s8 = ssub.s32 1, %s6
  %s9 = scalar_select 0, %s8, %s6
  $region1: #{tpu_custom_call.1} parent=0
    #allocation2 [shape = 'u8[1048576]{0}', space=vmem, size = 0x100000, scoped, tag = 'input window, operand 0']
    #allocation3 [shape = 's32[2]{0}', space=sflag, size = 0x8, scoped, tag = 'scoped memory for tpu_custom_call.1']
    #allocation4 [shape = 's32[2]{0}', space=sflag, size = 0x8, scoped, tag = 'scoped memory for tpu_custom_call.1']
    #allocation5 [shape = 'u8[262144]{0}', space=vmem, size = 0x40000, scoped, tag = 'input window, operand 1, single buffered']
    #allocation6 [shape = 's32[1]{0}', space=sflag, size = 0x4, scoped, tag = 'scoped memory for tpu_custom_call.1']
    #allocation7 [shape = 'u8[262144]{0}', space=vmem, size = 0x40000, scoped, tag = 'input window, operand 2, single buffered']
    #allocation8 [shape = 'u8[512]{0}', space=vmem, size = 0x400, scoped, tag = 'input window, operand 3, single buffered']
    #allocation9 [shape = 's32[1]{0}', space=sflag, size = 0x4, scoped, tag = 'scoped memory for tpu_custom_call.1']
    #allocation10 [shape = 'u8[512]{0}', space=vmem, size = 0x400, scoped, tag = 'input window, operand 4, single buffered']
    #allocation11 [shape = 'u8[262144]{0}', space=vmem, size = 0x40000, scoped, tag = 'output window, operand 0']
    %10 = vsyncpa [#allocation3], 0
    %s11 = scalar_lea.sflag [#allocation3], 1
    %12 = vsyncpa %s11, 0
    %13 = vsyncpa [#allocation6], 0
    %14 = vsyncpa [#allocation9], 0
    %15 = vsyncpa [#allocation4], 0
    %s16 = scalar_lea.sflag [#allocation4], 1
    %17 = vsyncpa %s16, 0
    loop: start=0, step=1, limit=6
    $region2: #{tpu_custom_call.1} parent=1 // loop_pre_header
      _
    $region3: #{tpu_custom_call.1} parent=1 // loop_header
      %s19 = sphi 0, %s23
      %p20 = scmp.ge.s32.totalorder %s19, 6
      %s29 = sphi 0, %s31
      %s32 = sphi 0, %s29
      %s33 = sphi 0, %s32
      %s49 = sphi 0, %s33
      %s53 = sphi 0, %s53
      %s55 = sphi 0, %s53
      %s56 = sphi 0, %s55
      %s70 = sphi 0, %s56
      %s74 = sphi 0, %s74
      %s76 = sphi 0, %s74
      %s77 = sphi 0, %s76
      %s91 = sphi 0, %s77
      %s95 = sphi 0, %s95
      %s97 = sphi 0, %s95
      %s98 = sphi 0, %s97
      %s112 = sphi 0, %s98
      %s116 = sphi 0, %s116
      %s118 = sphi 0, %s116
      %s119 = sphi 0, %s118
      %s133 = sphi 0, %s119
      %s139 = sphi 0, %s141
      %s142 = sphi 0, %s139
      %s143 = sphi 0, %s142
      %s159 = sphi 0, %s143
    $region4: #{tpu_custom_call.1} parent=1 // loop_header_branch
      %22 = sbr.rel (%p20) target = $region8
    $region5: #{tpu_custom_call.1} parent=1 // loop_body
      %s24 = ssub.s32 %s19, 1
      %s25 = ssub.s32 %s19, 2
      %s26 = sadd.s32 %s19, 1
      %s27 = ssub.s32 %s19, %s26
      %p28 = scmp.eq.s32.totalorder %s27, 0
      %s30 = sadd.s32 %s29, 1
      %s31 = scalar_select %p28, %s29, %s30
      %p34 = pneg %p28
      %p35 = scmp.eq.s32.totalorder %s19, 3
      %p36 = por %p34, %p35
      %p37 = scmp.ne.s32.totalorder %s29, %s32
      %p38 = scmp.eq.s32.totalorder %s19, 0
      %p39 = por %p37, %p38
      %p40 = scmp.ne.s32.totalorder %s29, %s32
      %p41 = scmp.eq.s32.totalorder %s24, 3
      %p42 = por %p40, %p41
      %p43 = scmp.ne.s32.totalorder %s32, %s33
      %p44 = scmp.eq.s32.totalorder %s24, 0
      %p45 = por %p43, %p44
      %p46 = scmp.ne.s32.totalorder %s32, %s33
      %p47 = scmp.eq.s32.totalorder %s25, 3
      %p48 = por %p46, %p47
      %p50 = scmp.ne.s32.totalorder %s33, %s49
      %p51 = scmp.eq.s32.totalorder %s25, 0
      %p52 = por %p50, %p51
      %s54 = sadd.s32 %s53, 1
      %p57 = scmp.eq.s32.totalorder %s19, 3
      %p58 = scmp.ne.s32.totalorder %s53, %s55
      %p59 = scmp.eq.s32.totalorder %s19, 0
      %p60 = por %p58, %p59
      %p61 = scmp.ne.s32.totalorder %s53, %s55
      %p62 = scmp.eq.s32.totalorder %s24, 3
      %p63 = por %p61, %p62
      %p64 = scmp.ne.s32.totalorder %s55, %s56
      %p65 = scmp.eq.s32.totalorder %s24, 0
      %p66 = por %p64, %p65
      %p67 = scmp.ne.s32.totalorder %s55, %s56
      %p68 = scmp.eq.s32.totalorder %s25, 3
      %p69 = por %p67, %p68
      %p71 = scmp.ne.s32.totalorder %s56, %s70
      %p72 = scmp.eq.s32.totalorder %s25, 0
      %p73 = por %p71, %p72
      %s75 = sadd.s32 %s74, 1
      %p78 = scmp.eq.s32.totalorder %s19, 3
      %p79 = scmp.ne.s32.totalorder %s74, %s76
      %p80 = scmp.eq.s32.totalorder %s19, 0
      %p81 = por %p79, %p80
      %p82 = scmp.ne.s32.totalorder %s74, %s76
      %p83 = scmp.eq.s32.totalorder %s24, 3
      %p84 = por %p82, %p83
      %p85 = scmp.ne.s32.totalorder %s76, %s77
      %p86 = scmp.eq.s32.totalorder %s24, 0
      %p87 = por %p85, %p86
      %p88 = scmp.ne.s32.totalorder %s76, %s77
      %p89 = scmp.eq.s32.totalorder %s25, 3
      %p90 = por %p88, %p89
      %p92 = scmp.ne.s32.totalorder %s77, %s91
      %p93 = scmp.eq.s32.totalorder %s25, 0
      %p94 = por %p92, %p93
      %s96 = sadd.s32 %s95, 1
      %p99 = scmp.eq.s32.totalorder %s19, 3
      %p100 = scmp.ne.s32.totalorder %s95, %s97
      %p101 = scmp.eq.s32.totalorder %s19, 0
      %p102 = por %p100, %p101
      %p103 = scmp.ne.s32.totalorder %s95, %s97
      %p104 = scmp.eq.s32.totalorder %s24, 3
      %p105 = por %p103, %p104
      %p106 = scmp.ne.s32.totalorder %s97, %s98
      %p107 = scmp.eq.s32.totalorder %s24, 0
      %p108 = por %p106, %p107
      %p109 = scmp.ne.s32.totalorder %s97, %s98
      %p110 = scmp.eq.s32.totalorder %s25, 3
      %p111 = por %p109, %p110
      %p113 = scmp.ne.s32.totalorder %s98, %s112
      %p114 = scmp.eq.s32.totalorder %s25, 0
      %p115 = por %p113, %p114
      %s117 = sadd.s32 %s116, 1
      %p120 = scmp.eq.s32.totalorder %s19, 3
      %p121 = scmp.ne.s32.totalorder %s116, %s118
      %p122 = scmp.eq.s32.totalorder %s19, 0
      %p123 = por %p121, %p122
      %p124 = scmp.ne.s32.totalorder %s116, %s118
      %p125 = scmp.eq.s32.totalorder %s24, 3
      %p126 = por %p124, %p125
      %p127 = scmp.ne.s32.totalorder %s118, %s119
      %p128 = scmp.eq.s32.totalorder %s24, 0
      %p129 = por %p127, %p128
      %p130 = scmp.ne.s32.totalorder %s118, %s119
      %p131 = scmp.eq.s32.totalorder %s25, 3
      %p132 = por %p130, %p131
      %p134 = scmp.ne.s32.totalorder %s119, %s133
      %p135 = scmp.eq.s32.totalorder %s25, 0
      %p136 = por %p134, %p135
      %s137 = ssub.s32 %s19, %s26
      %p138 = scmp.eq.s32.totalorder %s137, 0
      %s140 = sadd.s32 %s139, 1
      %s141 = scalar_select %p138, %s139, %s140
      %p144 = pneg %p138
      %p145 = scmp.eq.s32.totalorder %s19, 3
      %p146 = por %p144, %p145
      %p147 = scmp.ne.s32.totalorder %s139, %s142
      %p148 = scmp.eq.s32.totalorder %s19, 0
      %p149 = por %p147, %p148
      %p150 = scmp.ne.s32.totalorder %s139, %s142
      %p151 = scmp.eq.s32.totalorder %s24, 3
      %p152 = por %p150, %p151
      %p153 = scmp.ne.s32.totalorder %s142, %s143
      %p154 = scmp.eq.s32.totalorder %s24, 0
      %p155 = por %p153, %p154
      %p156 = scmp.ne.s32.totalorder %s142, %s143
      %p157 = scmp.eq.s32.totalorder %s25, 3
      %p158 = por %p156, %p157
      %p160 = scmp.ne.s32.totalorder %s143, %s159
      %p161 = scmp.eq.s32.totalorder %s25, 0
      %p162 = por %p160, %p161
      %p163 = scmp.le.s32.totalorder 1, %s19
      %p164 = scmp.lt.s32.totalorder %s19, 5
      %p165 = pnand %p163, %p164
      %p166 = pneg %p165
      // Predicated region
      $region9: #{tpu_custom_call.1} parent=5 // pred_check
        _
      $region10: #{tpu_custom_call.1} parent=5 // pred_check_branch
        %168 = sbr.rel (%p165) target = $region12
      $region11: #{tpu_custom_call.1} parent=5 // pred_region
        %s169 = ssub.s32 %s19, 1
        // Predicated region
        $region13: #{tpu_custom_call.1} parent=11 // pred_check
          %p170 = pneg %p66
        $region14: #{tpu_custom_call.1} parent=11 // pred_check_branch
          %172 = sbr.rel (%p170) target = $region16
        $region15: #{tpu_custom_call.1} parent=11 // pred_region
          %s174 = ssub.s32 8192, 8192
          %175 = vsyncadd [#allocation6], %s174
          %s176 = sshll.u32 [#allocation5], 4
          %s177 = int_to_ptr.vmem [resolvable:$true] %s176
          %182 = dma.hbm_to_vmem [thread:$0]  %s1, 8192, %s177, [#allocation6], 64, 64, 4
        $region16: #{tpu_custom_call.1} parent=11 // pred_fallthru
          _
        // Predicated region
        $region17: #{tpu_custom_call.1} parent=11 // pred_check
          %p183 = pneg %p87
        $region18: #{tpu_custom_call.1} parent=11 // pred_check_branch
          %185 = sbr.rel (%p183) target = $region20
        $region19: #{tpu_custom_call.1} parent=11 // pred_region
          %s187 = ssub.s32 8192, 8192
          %188 = vsyncadd [#allocation6], %s187
          %s189 = sshll.u32 [#allocation7], 4
          %s190 = int_to_ptr.vmem [resolvable:$true] %s189
          %195 = dma.hbm_to_vmem [thread:$0]  %s2, 8192, %s190, [#allocation6], 64, 64, 4
        $region20: #{tpu_custom_call.1} parent=11 // pred_fallthru
          _
        // Predicated region
        $region21: #{tpu_custom_call.1} parent=11 // pred_check
          %p196 = pneg %p108
        $region22: #{tpu_custom_call.1} parent=11 // pred_check_branch
          %198 = sbr.rel (%p196) target = $region24
        $region23: #{tpu_custom_call.1} parent=11 // pred_region
          %s200 = ssub.s32 16, 16
          %201 = vsyncadd [#allocation9], %s200
          %s203 = sshll.u32 [#allocation8], 4
          %s204 = int_to_ptr.vmem [resolvable:$true] %s203
          %206 = dma.hbm_to_vmem [thread:$0]  %s3, 16, %s204, [#allocation9]
        $region24: #{tpu_custom_call.1} parent=11 // pred_fallthru
          _
        // Predicated region
        $region25: #{tpu_custom_call.1} parent=11 // pred_check
          %p207 = pneg %p129
        $region26: #{tpu_custom_call.1} parent=11 // pred_check_branch
          %209 = sbr.rel (%p207) target = $region28
        $region27: #{tpu_custom_call.1} parent=11 // pred_region
          %s211 = ssub.s32 16, 16
          %212 = vsyncadd [#allocation9], %s211
          %s214 = sshll.u32 [#allocation10], 4
          %s215 = int_to_ptr.vmem [resolvable:$true] %s214
          %217 = dma.hbm_to_vmem [thread:$0]  %s4, 16, %s215, [#allocation9]
        $region28: #{tpu_custom_call.1} parent=11 // pred_fallthru
          _
      $region12: #{tpu_custom_call.1} parent=5 // pred_fallthru
        _
      %p218 = scmp.lt.s32.totalorder %s19, 4
      // Predicated region
      $region29: #{tpu_custom_call.1} parent=5 // pred_check
        %p219 = pneg %p218
      $region30: #{tpu_custom_call.1} parent=5 // pred_check_branch
        %221 = sbr.rel (%p219) target = $region32
      $region31: #{tpu_custom_call.1} parent=5 // pred_region
        // Predicated region
        $region33: #{tpu_custom_call.1} parent=31 // pred_check
          %p222 = pneg %p39
        $region34: #{tpu_custom_call.1} parent=31 // pred_check_branch
          %224 = sbr.rel (%p222) target = $region36
        $region35: #{tpu_custom_call.1} parent=31 // pred_region
          %s225 = sand.u32 %s29, 1
          %s226 = scalar_lea.sflag [#allocation3], %s225
          %s227 = sand.u32 %s29, 1
          %s228 = smul.addr %s227, 1024
          %s229 = scalar_lea.vmem [#allocation2], %s228
          %s230 = smul.u32 32, %s19
          %s232 = ssub.s32 16384, 16384
          %233 = vsyncadd %s226, %s232
          %s234 = smul.addr %s230, 8
          %s235 = smul.addr %s234, 64
          %s236 = scalar_lea.hbm %s0, %s235
          %s237 = sshll.u32 %s229, 4
          %s238 = int_to_ptr.vmem [resolvable:$true] %s237
          %243 = dma.hbm_to_vmem [thread:$0]  %s236, 16384, %s238, %s226, 512, 512, 32
        $region36: #{tpu_custom_call.1} parent=31 // pred_fallthru
          _
      $region32: #{tpu_custom_call.1} parent=5 // pred_fallthru
        _
      %p244 = scmp.le.s32.totalorder 1, %s19
      %p245 = scmp.lt.s32.totalorder %s19, 5
      %p246 = pnand %p244, %p245
      %p247 = pneg %p246
      // Predicated region
      $region37: #{tpu_custom_call.1} parent=5 // pred_check
        _
      $region38: #{tpu_custom_call.1} parent=5 // pred_check_branch
        %249 = sbr.rel (%p246) target = $region40
      $region39: #{tpu_custom_call.1} parent=5 // pred_region
        %s250 = ssub.s32 %s19, 1
        %s251 = sand.u32 %s32, 1
        %s252 = scalar_lea.sflag [#allocation3], %s251
        %s253 = sand.u32 %s32, 1
        %s254 = smul.addr %s253, 1024
        %s255 = scalar_lea.vmem [#allocation2], %s254
        // Predicated region
        $region41: #{tpu_custom_call.1} parent=39 // pred_check
          %p256 = pneg %p45
        $region42: #{tpu_custom_call.1} parent=39 // pred_check_branch
          %258 = sbr.rel (%p256) target = $region44
        $region43: #{tpu_custom_call.1} parent=39 // pred_region
          %259 = dma.done %s252, 16384
        $region44: #{tpu_custom_call.1} parent=39 // pred_fallthru
          _
        // Predicated region
        $region45: #{tpu_custom_call.1} parent=39 // pred_check
          %p260 = pneg %p66
        $region46: #{tpu_custom_call.1} parent=39 // pred_check_branch
          %262 = sbr.rel (%p260) target = $region48
        $region47: #{tpu_custom_call.1} parent=39 // pred_region
          %263 = dma.done [#allocation6], 8192
        $region48: #{tpu_custom_call.1} parent=39 // pred_fallthru
          _
        // Predicated region
        $region49: #{tpu_custom_call.1} parent=39 // pred_check
          %p264 = pneg %p87
        $region50: #{tpu_custom_call.1} parent=39 // pred_check_branch
          %266 = sbr.rel (%p264) target = $region52
        $region51: #{tpu_custom_call.1} parent=39 // pred_region
          %267 = dma.done [#allocation6], 8192
        $region52: #{tpu_custom_call.1} parent=39 // pred_fallthru
          _
        // Predicated region
        $region53: #{tpu_custom_call.1} parent=39 // pred_check
          %p268 = pneg %p108
        $region54: #{tpu_custom_call.1} parent=39 // pred_check_branch
          %270 = sbr.rel (%p268) target = $region56
        $region55: #{tpu_custom_call.1} parent=39 // pred_region
          %271 = dma.done [#allocation9], 16
        $region56: #{tpu_custom_call.1} parent=39 // pred_fallthru
          _
        // Predicated region
        $region57: #{tpu_custom_call.1} parent=39 // pred_check
          %p272 = pneg %p129
        $region58: #{tpu_custom_call.1} parent=39 // pred_check_branch
          %274 = sbr.rel (%p272) target = $region60
        $region59: #{tpu_custom_call.1} parent=39 // pred_region
          %275 = dma.done [#allocation9], 16
        $region60: #{tpu_custom_call.1} parent=39 // pred_fallthru
          _
        %s276 = sand.u32 %s32, 1
        %s277 = scalar_lea.sflag [#allocation3], %s276
        %s278 = sand.u32 %s32, 1
        %s279 = smul.addr %s278, 1024
        %s280 = scalar_lea.vmem [#allocation2], %s279
        %p281 = pneg %p45
        %p282 = pneg %p42
        %p283 = pneg %p66
        %p284 = pneg %p63
        %p285 = pneg %p87
        %p286 = pneg %p84
        %p287 = pneg %p108
        %p288 = pneg %p105
        %p289 = pneg %p129
        %p290 = pneg %p126
        %p291 = pneg %p155
        %p292 = pneg %p152
        %s293 = sand.u32 %s142, 1
        %s294 = scalar_lea.sflag [#allocation4], %s293
        %s295 = sand.u32 %s142, 1
        %s296 = smul.addr %s295, 256
        %s297 = scalar_lea.vmem [#allocation11], %s296
        %s298 = smul.u32 32, %s24
        %s299 = smul.u32 32, %s24
        %v301 = vld [vmem:[%s255] sm:$0xff]
        %v302 = vld [vmem:[%s255 + $0x8] sm:$0xff]
        %v303 = vld [vmem:[%s255 + $0x10] sm:$0xff]
        %v304 = vld [vmem:[%s255 + $0x18] sm:$0xff]
        %v305 = vld [vmem:[%s255 + $0x20] sm:$0xff]
        %v306 = vld [vmem:[%s255 + $0x28] sm:$0xff]
        %v307 = vld [vmem:[%s255 + $0x30] sm:$0xff]
        %v308 = vld [vmem:[%s255 + $0x38] sm:$0xff]
        %v309 = vld [vmem:[%s255 + $0x40] sm:$0xff]
        %v310 = vld [vmem:[%s255 + $0x48] sm:$0xff]
        %v311 = vld [vmem:[%s255 + $0x50] sm:$0xff]
        %v312 = vld [vmem:[%s255 + $0x58] sm:$0xff]
        %v313 = vld [vmem:[%s255 + $0x60] sm:$0xff]
        %v314 = vld [vmem:[%s255 + $0x68] sm:$0xff]
        %v315 = vld [vmem:[%s255 + $0x70] sm:$0xff]
        %v316 = vld [vmem:[%s255 + $0x78] sm:$0xff]
        %v317 = vld [vmem:[%s255 + $0x80] sm:$0xff]
        %v318 = vld [vmem:[%s255 + $0x88] sm:$0xff]
        %v319 = vld [vmem:[%s255 + $0x90] sm:$0xff]
        %v320 = vld [vmem:[%s255 + $0x98] sm:$0xff]
        %v321 = vld [vmem:[%s255 + $0xa0] sm:$0xff]
        %v322 = vld [vmem:[%s255 + $0xa8] sm:$0xff]
        %v323 = vld [vmem:[%s255 + $0xb0] sm:$0xff]
        %v324 = vld [vmem:[%s255 + $0xb8] sm:$0xff]
        %v325 = vld [vmem:[%s255 + $0xc0] sm:$0xff]
        %v326 = vld [vmem:[%s255 + $0xc8] sm:$0xff]
        %v327 = vld [vmem:[%s255 + $0xd0] sm:$0xff]
        %v328 = vld [vmem:[%s255 + $0xd8] sm:$0xff]
        %v329 = vld [vmem:[%s255 + $0xe0] sm:$0xff]
        %v330 = vld [vmem:[%s255 + $0xe8] sm:$0xff]
        %v331 = vld [vmem:[%s255 + $0xf0] sm:$0xff]
        %v332 = vld [vmem:[%s255 + $0xf8] sm:$0xff]
        %v333 = vld [vmem:[%s255 + $0x100] sm:$0xff]
        %v334 = vld [vmem:[%s255 + $0x108] sm:$0xff]
        %v335 = vld [vmem:[%s255 + $0x110] sm:$0xff]
        %v336 = vld [vmem:[%s255 + $0x118] sm:$0xff]
        %v337 = vld [vmem:[%s255 + $0x120] sm:$0xff]
        %v338 = vld [vmem:[%s255 + $0x128] sm:$0xff]
        %v339 = vld [vmem:[%s255 + $0x130] sm:$0xff]
        %v340 = vld [vmem:[%s255 + $0x138] sm:$0xff]
        %v341 = vld [vmem:[%s255 + $0x140] sm:$0xff]
        %v342 = vld [vmem:[%s255 + $0x148] sm:$0xff]
        %v343 = vld [vmem:[%s255 + $0x150] sm:$0xff]
        %v344 = vld [vmem:[%s255 + $0x158] sm:$0xff]
        %v345 = vld [vmem:[%s255 + $0x160] sm:$0xff]
        %v346 = vld [vmem:[%s255 + $0x168] sm:$0xff]
        %v347 = vld [vmem:[%s255 + $0x170] sm:$0xff]
        %v348 = vld [vmem:[%s255 + $0x178] sm:$0xff]
        %v349 = vld [vmem:[%s255 + $0x180] sm:$0xff]
        %v350 = vld [vmem:[%s255 + $0x188] sm:$0xff]
        %v351 = vld [vmem:[%s255 + $0x190] sm:$0xff]
        %v352 = vld [vmem:[%s255 + $0x198] sm:$0xff]
        %v353 = vld [vmem:[%s255 + $0x1a0] sm:$0xff]
        %v354 = vld [vmem:[%s255 + $0x1a8] sm:$0xff]
        %v355 = vld [vmem:[%s255 + $0x1b0] sm:$0xff]
        %v356 = vld [vmem:[%s255 + $0x1b8] sm:$0xff]
        %v357 = vld [vmem:[%s255 + $0x1c0] sm:$0xff]
        %v358 = vld [vmem:[%s255 + $0x1c8] sm:$0xff]
        %v359 = vld [vmem:[%s255 + $0x1d0] sm:$0xff]
        %v360 = vld [vmem:[%s255 + $0x1d8] sm:$0xff]
        %v361 = vld [vmem:[%s255 + $0x1e0] sm:$0xff]
        %v362 = vld [vmem:[%s255 + $0x1e8] sm:$0xff]
        %v363 = vld [vmem:[%s255 + $0x1f0] sm:$0xff]
        %v364 = vld [vmem:[%s255 + $0x1f8] sm:$0xff]
        %v365 = vld [vmem:[%s255 + $0x200] sm:$0xff]
        %v366 = vld [vmem:[%s255 + $0x208] sm:$0xff]
        %v367 = vld [vmem:[%s255 + $0x210] sm:$0xff]
        %v368 = vld [vmem:[%s255 + $0x218] sm:$0xff]
        %v369 = vld [vmem:[%s255 + $0x220] sm:$0xff]
        %v370 = vld [vmem:[%s255 + $0x228] sm:$0xff]
        %v371 = vld [vmem:[%s255 + $0x230] sm:$0xff]
        %v372 = vld [vmem:[%s255 + $0x238] sm:$0xff]
        %v373 = vld [vmem:[%s255 + $0x240] sm:$0xff]
        %v374 = vld [vmem:[%s255 + $0x248] sm:$0xff]
        %v375 = vld [vmem:[%s255 + $0x250] sm:$0xff]
        %v376 = vld [vmem:[%s255 + $0x258] sm:$0xff]
        %v377 = vld [vmem:[%s255 + $0x260] sm:$0xff]
        %v378 = vld [vmem:[%s255 + $0x268] sm:$0xff]
        %v379 = vld [vmem:[%s255 + $0x270] sm:$0xff]
        %v380 = vld [vmem:[%s255 + $0x278] sm:$0xff]
        %v381 = vld [vmem:[%s255 + $0x280] sm:$0xff]
        %v382 = vld [vmem:[%s255 + $0x288] sm:$0xff]
        %v383 = vld [vmem:[%s255 + $0x290] sm:$0xff]
        %v384 = vld [vmem:[%s255 + $0x298] sm:$0xff]
        %v385 = vld [vmem:[%s255 + $0x2a0] sm:$0xff]
        %v386 = vld [vmem:[%s255 + $0x2a8] sm:$0xff]
        %v387 = vld [vmem:[%s255 + $0x2b0] sm:$0xff]
        %v388 = vld [vmem:[%s255 + $0x2b8] sm:$0xff]
        %v389 = vld [vmem:[%s255 + $0x2c0] sm:$0xff]
        %v390 = vld [vmem:[%s255 + $0x2c8] sm:$0xff]
        %v391 = vld [vmem:[%s255 + $0x2d0] sm:$0xff]
        %v392 = vld [vmem:[%s255 + $0x2d8] sm:$0xff]
        %v393 = vld [vmem:[%s255 + $0x2e0] sm:$0xff]
        %v394 = vld [vmem:[%s255 + $0x2e8] sm:$0xff]
        %v395 = vld [vmem:[%s255 + $0x2f0] sm:$0xff]
        %v396 = vld [vmem:[%s255 + $0x2f8] sm:$0xff]
        %v397 = vld [vmem:[%s255 + $0x300] sm:$0xff]
        %v398 = vld [vmem:[%s255 + $0x308] sm:$0xff]
        %v399 = vld [vmem:[%s255 + $0x310] sm:$0xff]
        %v400 = vld [vmem:[%s255 + $0x318] sm:$0xff]
        %v401 = vld [vmem:[%s255 + $0x320] sm:$0xff]
        %v402 = vld [vmem:[%s255 + $0x328] sm:$0xff]
        %v403 = vld [vmem:[%s255 + $0x330] sm:$0xff]
        %v404 = vld [vmem:[%s255 + $0x338] sm:$0xff]
        %v405 = vld [vmem:[%s255 + $0x340] sm:$0xff]
        %v406 = vld [vmem:[%s255 + $0x348] sm:$0xff]
        %v407 = vld [vmem:[%s255 + $0x350] sm:$0xff]
        %v408 = vld [vmem:[%s255 + $0x358] sm:$0xff]
        %v409 = vld [vmem:[%s255 + $0x360] sm:$0xff]
        %v410 = vld [vmem:[%s255 + $0x368] sm:$0xff]
        %v411 = vld [vmem:[%s255 + $0x370] sm:$0xff]
        %v412 = vld [vmem:[%s255 + $0x378] sm:$0xff]
        %v413 = vld [vmem:[%s255 + $0x380] sm:$0xff]
        %v414 = vld [vmem:[%s255 + $0x388] sm:$0xff]
        %v415 = vld [vmem:[%s255 + $0x390] sm:$0xff]
        %v416 = vld [vmem:[%s255 + $0x398] sm:$0xff]
        %v417 = vld [vmem:[%s255 + $0x3a0] sm:$0xff]
        %v418 = vld [vmem:[%s255 + $0x3a8] sm:$0xff]
        %v419 = vld [vmem:[%s255 + $0x3b0] sm:$0xff]
        %v420 = vld [vmem:[%s255 + $0x3b8] sm:$0xff]
        %v421 = vld [vmem:[%s255 + $0x3c0] sm:$0xff]
        %v422 = vld [vmem:[%s255 + $0x3c8] sm:$0xff]
        %v423 = vld [vmem:[%s255 + $0x3d0] sm:$0xff]
        %v424 = vld [vmem:[%s255 + $0x3d8] sm:$0xff]
        %v425 = vld [vmem:[%s255 + $0x3e0] sm:$0xff]
        %v426 = vld [vmem:[%s255 + $0x3e8] sm:$0xff]
        %v427 = vld [vmem:[%s255 + $0x3f0] sm:$0xff]
        %v428 = vld [vmem:[%s255 + $0x3f8] sm:$0xff]
        %v429 = vlaneseq
        %v430 = vshrl.u32 %v429, 7
        %v431 = vadd.s32 %v430, 8
        %v432 = vadd.s32 %v430, 16
        %v433 = vadd.s32 %v430, 24
        %v434 = vadd.s32 %v430, 32
        %v435 = vadd.s32 %v430, 40
        %v436 = vadd.s32 %v430, 48
        %v437 = vadd.s32 %v430, 56
        %v438 = vadd.s32 %v430, 64
        %v439 = vadd.s32 %v430, 72
        %v440 = vadd.s32 %v430, 80
        %v441 = vadd.s32 %v430, 88
        %v442 = vadd.s32 %v430, 96
        %v443 = vadd.s32 %v430, 104
        %v444 = vadd.s32 %v430, 112
        %v445 = vadd.s32 %v430, 120
        %v446 = vadd.s32 %v430, 128
        %v447 = vadd.s32 %v430, 136
        %v448 = vadd.s32 %v430, 144
        %v449 = vadd.s32 %v430, 152
        %v450 = vadd.s32 %v430, 160
        %v451 = vadd.s32 %v430, 168
        %v452 = vadd.s32 %v430, 176
        %v453 = vadd.s32 %v430, 184
        %v454 = vadd.s32 %v430, 192
        %v455 = vadd.s32 %v430, 200
        %v456 = vadd.s32 %v430, 208
        %v457 = vadd.s32 %v430, 216
        %v458 = vadd.s32 %v430, 224
        %v459 = vadd.s32 %v430, 232
        %v460 = vadd.s32 %v430, 240
        %v461 = vadd.s32 %v430, 248
        %s462 = smul.u32 %s24, 256
        %v463 = vstv %s462
        %v464 = vadd.s32 %v430, %v463
        %v465 = vadd.s32 %v431, %v463
        %v466 = vadd.s32 %v432, %v463
        %v467 = vadd.s32 %v433, %v463
        %v468 = vadd.s32 %v434, %v463
        %v469 = vadd.s32 %v435, %v463
        %v470 = vadd.s32 %v436, %v463
        %v471 = vadd.s32 %v437, %v463
        %v472 = vadd.s32 %v438, %v463
        %v473 = vadd.s32 %v439, %v463
        %v474 = vadd.s32 %v440, %v463
        %v475 = vadd.s32 %v441, %v463
        %v476 = vadd.s32 %v442, %v463
        %v477 = vadd.s32 %v443, %v463
        %v478 = vadd.s32 %v444, %v463
        %v479 = vadd.s32 %v445, %v463
        %v480 = vadd.s32 %v446, %v463
        %v481 = vadd.s32 %v447, %v463
        %v482 = vadd.s32 %v448, %v463
        %v483 = vadd.s32 %v449, %v463
        %v484 = vadd.s32 %v450, %v463
        %v485 = vadd.s32 %v451, %v463
        %v486 = vadd.s32 %v452, %v463
        %v487 = vadd.s32 %v453, %v463
        %v488 = vadd.s32 %v454, %v463
        %v489 = vadd.s32 %v455, %v463
        %v490 = vadd.s32 %v456, %v463
        %v491 = vadd.s32 %v457, %v463
        %v492 = vadd.s32 %v458, %v463
        %v493 = vadd.s32 %v459, %v463
        %v494 = vadd.s32 %v460, %v463
        %v495 = vadd.s32 %v461, %v463
        %v496 = vlaneseq
        %v497 = vand.u32 %v496, 127
        %v498 = vadd.s32 %v497, 128
        %v499 = vadd.s32 %v497, 256
        %v500 = vadd.s32 %v497, 384
        %v501 = vadd.s32 %v497, 512
        %v502 = vadd.s32 %v497, 640
        %v503 = vadd.s32 %v497, 768
        %v504 = vadd.s32 %v497, 896
        %vm505 = vcmp.lt.s32.totalorder %v464, 812
        %vm506 = vcmp.lt.s32.totalorder %v465, 812
        %vm507 = vcmp.lt.s32.totalorder %v466, 812
        %vm508 = vcmp.lt.s32.totalorder %v467, 812
        %vm509 = vcmp.lt.s32.totalorder %v468, 812
        %vm510 = vcmp.lt.s32.totalorder %v469, 812
        %vm511 = vcmp.lt.s32.totalorder %v470, 812
        %vm512 = vcmp.lt.s32.totalorder %v471, 812
        %vm513 = vcmp.lt.s32.totalorder %v472, 812
        %vm514 = vcmp.lt.s32.totalorder %v473, 812
        %vm515 = vcmp.lt.s32.totalorder %v474, 812
        %vm516 = vcmp.lt.s32.totalorder %v475, 812
        %vm517 = vcmp.lt.s32.totalorder %v476, 812
        %vm518 = vcmp.lt.s32.totalorder %v477, 812
        %vm519 = vcmp.lt.s32.totalorder %v478, 812
        %vm520 = vcmp.lt.s32.totalorder %v479, 812
        %vm521 = vcmp.lt.s32.totalorder %v480, 812
        %vm522 = vcmp.lt.s32.totalorder %v481, 812
        %vm523 = vcmp.lt.s32.totalorder %v482, 812
        %vm524 = vcmp.lt.s32.totalorder %v483, 812
        %vm525 = vcmp.lt.s32.totalorder %v484, 812
        %vm526 = vcmp.lt.s32.totalorder %v485, 812
        %vm527 = vcmp.lt.s32.totalorder %v486, 812
        %vm528 = vcmp.lt.s32.totalorder %v487, 812
        %vm529 = vcmp.lt.s32.totalorder %v488, 812
        %vm530 = vcmp.lt.s32.totalorder %v489, 812
        %vm531 = vcmp.lt.s32.totalorder %v490, 812
        %vm532 = vcmp.lt.s32.totalorder %v491, 812
        %vm533 = vcmp.lt.s32.totalorder %v492, 812
        %vm534 = vcmp.lt.s32.totalorder %v493, 812
        %vm535 = vcmp.lt.s32.totalorder %v494, 812
        %vm536 = vcmp.lt.s32.totalorder %v495, 812
        %vm537 = vcmp.lt.s32.totalorder %v497, 812
        %vm538 = vcmp.lt.s32.totalorder %v498, 812
        %vm539 = vcmp.lt.s32.totalorder %v499, 812
        %vm540 = vcmp.lt.s32.totalorder %v500, 812
        %vm541 = vcmp.lt.s32.totalorder %v501, 812
        %vm542 = vcmp.lt.s32.totalorder %v502, 812
        %vm543 = vcmp.lt.s32.totalorder %v503, 812
        %vm544 = vcmp.lt.s32.totalorder %v504, 812
        %vm545 = vmxor %vm505, %vm537
        %vm546 = vmxor %vm505, %vm538
        %vm547 = vmxor %vm505, %vm539
        %vm548 = vmxor %vm505, %vm540
        %vm549 = vmxor %vm505, %vm541
        %vm550 = vmxor %vm505, %vm542
        %vm551 = vmxor %vm505, %vm543
        %vm552 = vmxor %vm505, %vm544
        %vm553 = vmxor %vm506, %vm537
        %vm554 = vmxor %vm506, %vm538
        %vm555 = vmxor %vm506, %vm539
        %vm556 = vmxor %vm506, %vm540
        %vm557 = vmxor %vm506, %vm541
        %vm558 = vmxor %vm506, %vm542
        %vm559 = vmxor %vm506, %vm543
        %vm560 = vmxor %vm506, %vm544
        %vm561 = vmxor %vm507, %vm537
        %vm562 = vmxor %vm507, %vm538
        %vm563 = vmxor %vm507, %vm539
        %vm564 = vmxor %vm507, %vm540
        %vm565 = vmxor %vm507, %vm541
        %vm566 = vmxor %vm507, %vm542
        %vm567 = vmxor %vm507, %vm543
        %vm568 = vmxor %vm507, %vm544
        %vm569 = vmxor %vm508, %vm537
        %vm570 = vmxor %vm508, %vm538
        %vm571 = vmxor %vm508, %vm539
        %vm572 = vmxor %vm508, %vm540
        %vm573 = vmxor %vm508, %vm541
        %vm574 = vmxor %vm508, %vm542
        %vm575 = vmxor %vm508, %vm543
        %vm576 = vmxor %vm508, %vm544
        %vm577 = vmxor %vm509, %vm537
        %vm578 = vmxor %vm509, %vm538
        %vm579 = vmxor %vm509, %vm539
        %vm580 = vmxor %vm509, %vm540
        %vm581 = vmxor %vm509, %vm541
        %vm582 = vmxor %vm509, %vm542
        %vm583 = vmxor %vm509, %vm543
        %vm584 = vmxor %vm509, %vm544
        %vm585 = vmxor %vm510, %vm537
        %vm586 = vmxor %vm510, %vm538
        %vm587 = vmxor %vm510, %vm539
        %vm588 = vmxor %vm510, %vm540
        %vm589 = vmxor %vm510, %vm541
        %vm590 = vmxor %vm510, %vm542
        %vm591 = vmxor %vm510, %vm543
        %vm592 = vmxor %vm510, %vm544
        %vm593 = vmxor %vm511, %vm537
        %vm594 = vmxor %vm511, %vm538
        %vm595 = vmxor %vm511, %vm539
        %vm596 = vmxor %vm511, %vm540
        %vm597 = vmxor %vm511, %vm541
        %vm598 = vmxor %vm511, %vm542
        %vm599 = vmxor %vm511, %vm543
        %vm600 = vmxor %vm511, %vm544
        %vm601 = vmxor %vm512, %vm537
        %vm602 = vmxor %vm512, %vm538
        %vm603 = vmxor %vm512, %vm539
        %vm604 = vmxor %vm512, %vm540
        %vm605 = vmxor %vm512, %vm541
        %vm606 = vmxor %vm512, %vm542
        %vm607 = vmxor %vm512, %vm543
        %vm608 = vmxor %vm512, %vm544
        %vm609 = vmxor %vm513, %vm537
        %vm610 = vmxor %vm513, %vm538
        %vm611 = vmxor %vm513, %vm539
        %vm612 = vmxor %vm513, %vm540
        %vm613 = vmxor %vm513, %vm541
        %vm614 = vmxor %vm513, %vm542
        %vm615 = vmxor %vm513, %vm543
        %vm616 = vmxor %vm513, %vm544
        %vm617 = vmxor %vm514, %vm537
        %vm618 = vmxor %vm514, %vm538
        %vm619 = vmxor %vm514, %vm539
        %vm620 = vmxor %vm514, %vm540
        %vm621 = vmxor %vm514, %vm541
        %vm622 = vmxor %vm514, %vm542
        %vm623 = vmxor %vm514, %vm543
        %vm624 = vmxor %vm514, %vm544
        %vm625 = vmxor %vm515, %vm537
        %vm626 = vmxor %vm515, %vm538
        %vm627 = vmxor %vm515, %vm539
        %vm628 = vmxor %vm515, %vm540
        %vm629 = vmxor %vm515, %vm541
        %vm630 = vmxor %vm515, %vm542
        %vm631 = vmxor %vm515, %vm543
        %vm632 = vmxor %vm515, %vm544
        %vm633 = vmxor %vm516, %vm537
        %vm634 = vmxor %vm516, %vm538
        %vm635 = vmxor %vm516, %vm539
        %vm636 = vmxor %vm516, %vm540
        %vm637 = vmxor %vm516, %vm541
        %vm638 = vmxor %vm516, %vm542
        %vm639 = vmxor %vm516, %vm543
        %vm640 = vmxor %vm516, %vm544
        %vm641 = vmxor %vm517, %vm537
        %vm642 = vmxor %vm517, %vm538
        %vm643 = vmxor %vm517, %vm539
        %vm644 = vmxor %vm517, %vm540
        %vm645 = vmxor %vm517, %vm541
        %vm646 = vmxor %vm517, %vm542
        %vm647 = vmxor %vm517, %vm543
        %vm648 = vmxor %vm517, %vm544
        %vm649 = vmxor %vm518, %vm537
        %vm650 = vmxor %vm518, %vm538
        %vm651 = vmxor %vm518, %vm539
        %vm652 = vmxor %vm518, %vm540
        %vm653 = vmxor %vm518, %vm541
        %vm654 = vmxor %vm518, %vm542
        %vm655 = vmxor %vm518, %vm543
        %vm656 = vmxor %vm518, %vm544
        %vm657 = vmxor %vm519, %vm537
        %vm658 = vmxor %vm519, %vm538
        %vm659 = vmxor %vm519, %vm539
        %vm660 = vmxor %vm519, %vm540
        %vm661 = vmxor %vm519, %vm541
        %vm662 = vmxor %vm519, %vm542
        %vm663 = vmxor %vm519, %vm543
        %vm664 = vmxor %vm519, %vm544
        %vm665 = vmxor %vm520, %vm537
        %vm666 = vmxor %vm520, %vm538
        %vm667 = vmxor %vm520, %vm539
        %vm668 = vmxor %vm520, %vm540
        %vm669 = vmxor %vm520, %vm541
        %vm670 = vmxor %vm520, %vm542
        %vm671 = vmxor %vm520, %vm543
        %vm672 = vmxor %vm520, %vm544
        %vm673 = vmxor %vm521, %vm537
        %vm674 = vmxor %vm521, %vm538
        %vm675 = vmxor %vm521, %vm539
        %vm676 = vmxor %vm521, %vm540
        %vm677 = vmxor %vm521, %vm541
        %vm678 = vmxor %vm521, %vm542
        %vm679 = vmxor %vm521, %vm543
        %vm680 = vmxor %vm521, %vm544
        %vm681 = vmxor %vm522, %vm537
        %vm682 = vmxor %vm522, %vm538
        %vm683 = vmxor %vm522, %vm539
        %vm684 = vmxor %vm522, %vm540
        %vm685 = vmxor %vm522, %vm541
        %vm686 = vmxor %vm522, %vm542
        %vm687 = vmxor %vm522, %vm543
        %vm688 = vmxor %vm522, %vm544
        %vm689 = vmxor %vm523, %vm537
        %vm690 = vmxor %vm523, %vm538
        %vm691 = vmxor %vm523, %vm539
        %vm692 = vmxor %vm523, %vm540
        %vm693 = vmxor %vm523, %vm541
        %vm694 = vmxor %vm523, %vm542
        %vm695 = vmxor %vm523, %vm543
        %vm696 = vmxor %vm523, %vm544
        %vm697 = vmxor %vm524, %vm537
        %vm698 = vmxor %vm524, %vm538
        %vm699 = vmxor %vm524, %vm539
        %vm700 = vmxor %vm524, %vm540
        %vm701 = vmxor %vm524, %vm541
        %vm702 = vmxor %vm524, %vm542
        %vm703 = vmxor %vm524, %vm543
        %vm704 = vmxor %vm524, %vm544
        %vm705 = vmxor %vm525, %vm537
        %vm706 = vmxor %vm525, %vm538
        %vm707 = vmxor %vm525, %vm539
        %vm708 = vmxor %vm525, %vm540
        %vm709 = vmxor %vm525, %vm541
        %vm710 = vmxor %vm525, %vm542
        %vm711 = vmxor %vm525, %vm543
        %vm712 = vmxor %vm525, %vm544
        %vm713 = vmxor %vm526, %vm537
        %vm714 = vmxor %vm526, %vm538
        %vm715 = vmxor %vm526, %vm539
        %vm716 = vmxor %vm526, %vm540
        %vm717 = vmxor %vm526, %vm541
        %vm718 = vmxor %vm526, %vm542
        %vm719 = vmxor %vm526, %vm543
        %vm720 = vmxor %vm526, %vm544
        %vm721 = vmxor %vm527, %vm537
        %vm722 = vmxor %vm527, %vm538
        %vm723 = vmxor %vm527, %vm539
        %vm724 = vmxor %vm527, %vm540
        %vm725 = vmxor %vm527, %vm541
        %vm726 = vmxor %vm527, %vm542
        %vm727 = vmxor %vm527, %vm543
        %vm728 = vmxor %vm527, %vm544
        %vm729 = vmxor %vm528, %vm537
        %vm730 = vmxor %vm528, %vm538
        %vm731 = vmxor %vm528, %vm539
        %vm732 = vmxor %vm528, %vm540
        %vm733 = vmxor %vm528, %vm541
        %vm734 = vmxor %vm528, %vm542
        %vm735 = vmxor %vm528, %vm543
        %vm736 = vmxor %vm528, %vm544
        %vm737 = vmxor %vm529, %vm537
        %vm738 = vmxor %vm529, %vm538
        %vm739 = vmxor %vm529, %vm539
        %vm740 = vmxor %vm529, %vm540
        %vm741 = vmxor %vm529, %vm541
        %vm742 = vmxor %vm529, %vm542
        %vm743 = vmxor %vm529, %vm543
        %vm744 = vmxor %vm529, %vm544
        %vm745 = vmxor %vm530, %vm537
        %vm746 = vmxor %vm530, %vm538
        %vm747 = vmxor %vm530, %vm539
        %vm748 = vmxor %vm530, %vm540
        %vm749 = vmxor %vm530, %vm541
        %vm750 = vmxor %vm530, %vm542
        %vm751 = vmxor %vm530, %vm543
        %vm752 = vmxor %vm530, %vm544
        %vm753 = vmxor %vm531, %vm537
        %vm754 = vmxor %vm531, %vm538
        %vm755 = vmxor %vm531, %vm539
        %vm756 = vmxor %vm531, %vm540
        %vm757 = vmxor %vm531, %vm541
        %vm758 = vmxor %vm531, %vm542
        %vm759 = vmxor %vm531, %vm543
        %vm760 = vmxor %vm531, %vm544
        %vm761 = vmxor %vm532, %vm537
        %vm762 = vmxor %vm532, %vm538
        %vm763 = vmxor %vm532, %vm539
        %vm764 = vmxor %vm532, %vm540
        %vm765 = vmxor %vm532, %vm541
        %vm766 = vmxor %vm532, %vm542
        %vm767 = vmxor %vm532, %vm543
        %vm768 = vmxor %vm532, %vm544
        %vm769 = vmxor %vm533, %vm537
        %vm770 = vmxor %vm533, %vm538
        %vm771 = vmxor %vm533, %vm539
        %vm772 = vmxor %vm533, %vm540
        %vm773 = vmxor %vm533, %vm541
        %vm774 = vmxor %vm533, %vm542
        %vm775 = vmxor %vm533, %vm543
        %vm776 = vmxor %vm533, %vm544
        %vm777 = vmxor %vm534, %vm537
        %vm778 = vmxor %vm534, %vm538
        %vm779 = vmxor %vm534, %vm539
        %vm780 = vmxor %vm534, %vm540
        %vm781 = vmxor %vm534, %vm541
        %vm782 = vmxor %vm534, %vm542
        %vm783 = vmxor %vm534, %vm543
        %vm784 = vmxor %vm534, %vm544
        %vm785 = vmxor %vm535, %vm537
        %vm786 = vmxor %vm535, %vm538
        %vm787 = vmxor %vm535, %vm539
        %vm788 = vmxor %vm535, %vm540
        %vm789 = vmxor %vm535, %vm541
        %vm790 = vmxor %vm535, %vm542
        %vm791 = vmxor %vm535, %vm543
        %vm792 = vmxor %vm535, %vm544
        %vm793 = vmxor %vm536, %vm537
        %vm794 = vmxor %vm536, %vm538
        %vm795 = vmxor %vm536, %vm539
        %vm796 = vmxor %vm536, %vm540
        %vm797 = vmxor %vm536, %vm541
        %vm798 = vmxor %vm536, %vm542
        %vm799 = vmxor %vm536, %vm543
        %vm800 = vmxor %vm536, %vm544
        %vm801 = vmxor %vm545, 1
        %vm802 = vmxor %vm546, 1
        %vm803 = vmxor %vm547, 1
        %vm804 = vmxor %vm548, 1
        %vm805 = vmxor %vm549, 1
        %vm806 = vmxor %vm550, 1
        %vm807 = vmxor %vm551, 1
        %vm808 = vmxor %vm552, 1
        %vm809 = vmxor %vm553, 1
        %vm810 = vmxor %vm554, 1
        %vm811 = vmxor %vm555, 1
        %vm812 = vmxor %vm556, 1
        %vm813 = vmxor %vm557, 1
        %vm814 = vmxor %vm558, 1
        %vm815 = vmxor %vm559, 1
        %vm816 = vmxor %vm560, 1
        %vm817 = vmxor %vm561, 1
        %vm818 = vmxor %vm562, 1
        %vm819 = vmxor %vm563, 1
        %vm820 = vmxor %vm564, 1
        %vm821 = vmxor %vm565, 1
        %vm822 = vmxor %vm566, 1
        %vm823 = vmxor %vm567, 1
        %vm824 = vmxor %vm568, 1
        %vm825 = vmxor %vm569, 1
        %vm826 = vmxor %vm570, 1
        %vm827 = vmxor %vm571, 1
        %vm828 = vmxor %vm572, 1
        %vm829 = vmxor %vm573, 1
        %vm830 = vmxor %vm574, 1
        %vm831 = vmxor %vm575, 1
        %vm832 = vmxor %vm576, 1
        %vm833 = vmxor %vm577, 1
        %vm834 = vmxor %vm578, 1
        %vm835 = vmxor %vm579, 1
        %vm836 = vmxor %vm580, 1
        %vm837 = vmxor %vm581, 1
        %vm838 = vmxor %vm582, 1
        %vm839 = vmxor %vm583, 1
        %vm840 = vmxor %vm584, 1
        %vm841 = vmxor %vm585, 1
        %vm842 = vmxor %vm586, 1
        %vm843 = vmxor %vm587, 1
        %vm844 = vmxor %vm588, 1
        %vm845 = vmxor %vm589, 1
        %vm846 = vmxor %vm590, 1
        %vm847 = vmxor %vm591, 1
        %vm848 = vmxor %vm592, 1
        %vm849 = vmxor %vm593, 1
        %vm850 = vmxor %vm594, 1
        %vm851 = vmxor %vm595, 1
        %vm852 = vmxor %vm596, 1
        %vm853 = vmxor %vm597, 1
        %vm854 = vmxor %vm598, 1
        %vm855 = vmxor %vm599, 1
        %vm856 = vmxor %vm600, 1
        %vm857 = vmxor %vm601, 1
        %vm858 = vmxor %vm602, 1
        %vm859 = vmxor %vm603, 1
        %vm860 = vmxor %vm604, 1
        %vm861 = vmxor %vm605, 1
        %vm862 = vmxor %vm606, 1
        %vm863 = vmxor %vm607, 1
        %vm864 = vmxor %vm608, 1
        %vm865 = vmxor %vm609, 1
        %vm866 = vmxor %vm610, 1
        %vm867 = vmxor %vm611, 1
        %vm868 = vmxor %vm612, 1
        %vm869 = vmxor %vm613, 1
        %vm870 = vmxor %vm614, 1
        %vm871 = vmxor %vm615, 1
        %vm872 = vmxor %vm616, 1
        %vm873 = vmxor %vm617, 1
        %vm874 = vmxor %vm618, 1
        %vm875 = vmxor %vm619, 1
        %vm876 = vmxor %vm620, 1
        %vm877 = vmxor %vm621, 1
        %vm878 = vmxor %vm622, 1
        %vm879 = vmxor %vm623, 1
        %vm880 = vmxor %vm624, 1
        %vm881 = vmxor %vm625, 1
        %vm882 = vmxor %vm626, 1
        %vm883 = vmxor %vm627, 1
        %vm884 = vmxor %vm628, 1
        %vm885 = vmxor %vm629, 1
        %vm886 = vmxor %vm630, 1
        %vm887 = vmxor %vm631, 1
        %vm888 = vmxor %vm632, 1
        %vm889 = vmxor %vm633, 1
        %vm890 = vmxor %vm634, 1
        %vm891 = vmxor %vm635, 1
        %vm892 = vmxor %vm636, 1
        %vm893 = vmxor %vm637, 1
        %vm894 = vmxor %vm638, 1
        %vm895 = vmxor %vm639, 1
        %vm896 = vmxor %vm640, 1
        %vm897 = vmxor %vm641, 1
        %vm898 = vmxor %vm642, 1
        %vm899 = vmxor %vm643, 1
        %vm900 = vmxor %vm644, 1
        %vm901 = vmxor %vm645, 1
        %vm902 = vmxor %vm646, 1
        %vm903 = vmxor %vm647, 1
        %vm904 = vmxor %vm648, 1
        %vm905 = vmxor %vm649, 1
        %vm906 = vmxor %vm650, 1
        %vm907 = vmxor %vm651, 1
        %vm908 = vmxor %vm652, 1
        %vm909 = vmxor %vm653, 1
        %vm910 = vmxor %vm654, 1
        %vm911 = vmxor %vm655, 1
        %vm912 = vmxor %vm656, 1
        %vm913 = vmxor %vm657, 1
        %vm914 = vmxor %vm658, 1
        %vm915 = vmxor %vm659, 1
        %vm916 = vmxor %vm660, 1
        %vm917 = vmxor %vm661, 1
        %vm918 = vmxor %vm662, 1
        %vm919 = vmxor %vm663, 1
        %vm920 = vmxor %vm664, 1
        %vm921 = vmxor %vm665, 1
        %vm922 = vmxor %vm666, 1
        %vm923 = vmxor %vm667, 1
        %vm924 = vmxor %vm668, 1
        %vm925 = vmxor %vm669, 1
        %vm926 = vmxor %vm670, 1
        %vm927 = vmxor %vm671, 1
        %vm928 = vmxor %vm672, 1
        %vm929 = vmxor %vm673, 1
        %vm930 = vmxor %vm674, 1
        %vm931 = vmxor %vm675, 1
        %vm932 = vmxor %vm676, 1
        %vm933 = vmxor %vm677, 1
        %vm934 = vmxor %vm678, 1
        %vm935 = vmxor %vm679, 1
        %vm936 = vmxor %vm680, 1
        %vm937 = vmxor %vm681, 1
        %vm938 = vmxor %vm682, 1
        %vm939 = vmxor %vm683, 1
        %vm940 = vmxor %vm684, 1
        %vm941 = vmxor %vm685, 1
        %vm942 = vmxor %vm686, 1
        %vm943 = vmxor %vm687, 1
        %vm944 = vmxor %vm688, 1
        %vm945 = vmxor %vm689, 1
        %vm946 = vmxor %vm690, 1
        %vm947 = vmxor %vm691, 1
        %vm948 = vmxor %vm692, 1
        %vm949 = vmxor %vm693, 1
        %vm950 = vmxor %vm694, 1
        %vm951 = vmxor %vm695, 1
        %vm952 = vmxor %vm696, 1
        %vm953 = vmxor %vm697, 1
        %vm954 = vmxor %vm698, 1
        %vm955 = vmxor %vm699, 1
        %vm956 = vmxor %vm700, 1
        %vm957 = vmxor %vm701, 1
        %vm958 = vmxor %vm702, 1
        %vm959 = vmxor %vm703, 1
        %vm960 = vmxor %vm704, 1
        %vm961 = vmxor %vm705, 1
        %vm962 = vmxor %vm706, 1
        %vm963 = vmxor %vm707, 1
        %vm964 = vmxor %vm708, 1
        %vm965 = vmxor %vm709, 1
        %vm966 = vmxor %vm710, 1
        %vm967 = vmxor %vm711, 1
        %vm968 = vmxor %vm712, 1
        %vm969 = vmxor %vm713, 1
        %vm970 = vmxor %vm714, 1
        %vm971 = vmxor %vm715, 1
        %vm972 = vmxor %vm716, 1
        %vm973 = vmxor %vm717, 1
        %vm974 = vmxor %vm718, 1
        %vm975 = vmxor %vm719, 1
        %vm976 = vmxor %vm720, 1
        %vm977 = vmxor %vm721, 1
        %vm978 = vmxor %vm722, 1
        %vm979 = vmxor %vm723, 1
        %vm980 = vmxor %vm724, 1
        %vm981 = vmxor %vm725, 1
        %vm982 = vmxor %vm726, 1
        %vm983 = vmxor %vm727, 1
        %vm984 = vmxor %vm728, 1
        %vm985 = vmxor %vm729, 1
        %vm986 = vmxor %vm730, 1
        %vm987 = vmxor %vm731, 1
        %vm988 = vmxor %vm732, 1
        %vm989 = vmxor %vm733, 1
        %vm990 = vmxor %vm734, 1
        %vm991 = vmxor %vm735, 1
        %vm992 = vmxor %vm736, 1
        %vm993 = vmxor %vm737, 1
        %vm994 = vmxor %vm738, 1
        %vm995 = vmxor %vm739, 1
        %vm996 = vmxor %vm740, 1
        %vm997 = vmxor %vm741, 1
        %vm998 = vmxor %vm742, 1
        %vm999 = vmxor %vm743, 1
        %vm1000 = vmxor %vm744, 1
        %vm1001 = vmxor %vm745, 1
        %vm1002 = vmxor %vm746, 1
        %vm1003 = vmxor %vm747, 1
        %vm1004 = vmxor %vm748, 1
        %vm1005 = vmxor %vm749, 1
        %vm1006 = vmxor %vm750, 1
        %vm1007 = vmxor %vm751, 1
        %vm1008 = vmxor %vm752, 1
        %vm1009 = vmxor %vm753, 1
        %vm1010 = vmxor %vm754, 1
        %vm1011 = vmxor %vm755, 1
        %vm1012 = vmxor %vm756, 1
        %vm1013 = vmxor %vm757, 1
        %vm1014 = vmxor %vm758, 1
        %vm1015 = vmxor %vm759, 1
        %vm1016 = vmxor %vm760, 1
        %vm1017 = vmxor %vm761, 1
        %vm1018 = vmxor %vm762, 1
        %vm1019 = vmxor %vm763, 1
        %vm1020 = vmxor %vm764, 1
        %vm1021 = vmxor %vm765, 1
        %vm1022 = vmxor %vm766, 1
        %vm1023 = vmxor %vm767, 1
        %vm1024 = vmxor %vm768, 1
        %vm1025 = vmxor %vm769, 1
        %vm1026 = vmxor %vm770, 1
        %vm1027 = vmxor %vm771, 1
        %vm1028 = vmxor %vm772, 1
        %vm1029 = vmxor %vm773, 1
        %vm1030 = vmxor %vm774, 1
        %vm1031 = vmxor %vm775, 1
        %vm1032 = vmxor %vm776, 1
        %vm1033 = vmxor %vm777, 1
        %vm1034 = vmxor %vm778, 1
        %vm1035 = vmxor %vm779, 1
        %vm1036 = vmxor %vm780, 1
        %vm1037 = vmxor %vm781, 1
        %vm1038 = vmxor %vm782, 1
        %vm1039 = vmxor %vm783, 1
        %vm1040 = vmxor %vm784, 1
        %vm1041 = vmxor %vm785, 1
        %vm1042 = vmxor %vm786, 1
        %vm1043 = vmxor %vm787, 1
        %vm1044 = vmxor %vm788, 1
        %vm1045 = vmxor %vm789, 1
        %vm1046 = vmxor %vm790, 1
        %vm1047 = vmxor %vm791, 1
        %vm1048 = vmxor %vm792, 1
        %vm1049 = vmxor %vm793, 1
        %vm1050 = vmxor %vm794, 1
        %vm1051 = vmxor %vm795, 1
        %vm1052 = vmxor %vm796, 1
        %vm1053 = vmxor %vm797, 1
        %vm1054 = vmxor %vm798, 1
        %vm1055 = vmxor %vm799, 1
        %vm1056 = vmxor %vm800, 1
        %vm1057 = vmpackc.low %vm802, %vm801
        %vm1058 = vmpackc.low %vm804, %vm803
        %vm1059 = vmpackc.low %vm806, %vm805
        %vm1060 = vmpackc.low %vm808, %vm807
        %vm1061 = vmpackc.low %vm810, %vm809
        %vm1062 = vmpackc.low %vm812, %vm811
        %vm1063 = vmpackc.low %vm814, %vm813
        %vm1064 = vmpackc.low %vm816, %vm815
        %vm1065 = vmpackc.low %vm818, %vm817
        %vm1066 = vmpackc.low %vm820, %vm819
        %vm1067 = vmpackc.low %vm822, %vm821
        %vm1068 = vmpackc.low %vm824, %vm823
        %vm1069 = vmpackc.low %vm826, %vm825
        %vm1070 = vmpackc.low %vm828, %vm827
        %vm1071 = vmpackc.low %vm830, %vm829
        %vm1072 = vmpackc.low %vm832, %vm831
        %vm1073 = vmpackc.low %vm834, %vm833
        %vm1074 = vmpackc.low %vm836, %vm835
        %vm1075 = vmpackc.low %vm838, %vm837
        %vm1076 = vmpackc.low %vm840, %vm839
        %vm1077 = vmpackc.low %vm842, %vm841
        %vm1078 = vmpackc.low %vm844, %vm843
        %vm1079 = vmpackc.low %vm846, %vm845
        %vm1080 = vmpackc.low %vm848, %vm847
        %vm1081 = vmpackc.low %vm850, %vm849
        %vm1082 = vmpackc.low %vm852, %vm851
        %vm1083 = vmpackc.low %vm854, %vm853
        %vm1084 = vmpackc.low %vm856, %vm855
        %vm1085 = vmpackc.low %vm858, %vm857
        %vm1086 = vmpackc.low %vm860, %vm859
        %vm1087 = vmpackc.low %vm862, %vm861
        %vm1088 = vmpackc.low %vm864, %vm863
        %vm1089 = vmpackc.low %vm866, %vm865
        %vm1090 = vmpackc.low %vm868, %vm867
        %vm1091 = vmpackc.low %vm870, %vm869
        %vm1092 = vmpackc.low %vm872, %vm871
        %vm1093 = vmpackc.low %vm874, %vm873
        %vm1094 = vmpackc.low %vm876, %vm875
        %vm1095 = vmpackc.low %vm878, %vm877
        %vm1096 = vmpackc.low %vm880, %vm879
        %vm1097 = vmpackc.low %vm882, %vm881
        %vm1098 = vmpackc.low %vm884, %vm883
        %vm1099 = vmpackc.low %vm886, %vm885
        %vm1100 = vmpackc.low %vm888, %vm887
        %vm1101 = vmpackc.low %vm890, %vm889
        %vm1102 = vmpackc.low %vm892, %vm891
        %vm1103 = vmpackc.low %vm894, %vm893
        %vm1104 = vmpackc.low %vm896, %vm895
        %vm1105 = vmpackc.low %vm898, %vm897
        %vm1106 = vmpackc.low %vm900, %vm899
        %vm1107 = vmpackc.low %vm902, %vm901
        %vm1108 = vmpackc.low %vm904, %vm903
        %vm1109 = vmpackc.low %vm906, %vm905
        %vm1110 = vmpackc.low %vm908, %vm907
        %vm1111 = vmpackc.low %vm910, %vm909
        %vm1112 = vmpackc.low %vm912, %vm911
        %vm1113 = vmpackc.low %vm914, %vm913
        %vm1114 = vmpackc.low %vm916, %vm915
        %vm1115 = vmpackc.low %vm918, %vm917
        %vm1116 = vmpackc.low %vm920, %vm919
        %vm1117 = vmpackc.low %vm922, %vm921
        %vm1118 = vmpackc.low %vm924, %vm923
        %vm1119 = vmpackc.low %vm926, %vm925
        %vm1120 = vmpackc.low %vm928, %vm927
        %vm1121 = vmpackc.low %vm930, %vm929
        %vm1122 = vmpackc.low %vm932, %vm931
        %vm1123 = vmpackc.low %vm934, %vm933
        %vm1124 = vmpackc.low %vm936, %vm935
        %vm1125 = vmpackc.low %vm938, %vm937
        %vm1126 = vmpackc.low %vm940, %vm939
        %vm1127 = vmpackc.low %vm942, %vm941
        %vm1128 = vmpackc.low %vm944, %vm943
        %vm1129 = vmpackc.low %vm946, %vm945
        %vm1130 = vmpackc.low %vm948, %vm947
        %vm1131 = vmpackc.low %vm950, %vm949
        %vm1132 = vmpackc.low %vm952, %vm951
        %vm1133 = vmpackc.low %vm954, %vm953
        %vm1134 = vmpackc.low %vm956, %vm955
        %vm1135 = vmpackc.low %vm958, %vm957
        %vm1136 = vmpackc.low %vm960, %vm959
        %vm1137 = vmpackc.low %vm962, %vm961
        %vm1138 = vmpackc.low %vm964, %vm963
        %vm1139 = vmpackc.low %vm966, %vm965
        %vm1140 = vmpackc.low %vm968, %vm967
        %vm1141 = vmpackc.low %vm970, %vm969
        %vm1142 = vmpackc.low %vm972, %vm971
        %vm1143 = vmpackc.low %vm974, %vm973
        %vm1144 = vmpackc.low %vm976, %vm975
        %vm1145 = vmpackc.low %vm978, %vm977
        %vm1146 = vmpackc.low %vm980, %vm979
        %vm1147 = vmpackc.low %vm982, %vm981
        %vm1148 = vmpackc.low %vm984, %vm983
        %vm1149 = vmpackc.low %vm986, %vm985
        %vm1150 = vmpackc.low %vm988, %vm987
        %vm1151 = vmpackc.low %vm990, %vm989
        %vm1152 = vmpackc.low %vm992, %vm991
        %vm1153 = vmpackc.low %vm994, %vm993
        %vm1154 = vmpackc.low %vm996, %vm995
        %vm1155 = vmpackc.low %vm998, %vm997
        %vm1156 = vmpackc.low %vm1000, %vm999
        %vm1157 = vmpackc.low %vm1002, %vm1001
        %vm1158 = vmpackc.low %vm1004, %vm1003
        %vm1159 = vmpackc.low %vm1006, %vm1005
        %vm1160 = vmpackc.low %vm1008, %vm1007
        %vm1161 = vmpackc.low %vm1010, %vm1009
        %vm1162 = vmpackc.low %vm1012, %vm1011
        %vm1163 = vmpackc.low %vm1014, %vm1013
        %vm1164 = vmpackc.low %vm1016, %vm1015
        %vm1165 = vmpackc.low %vm1018, %vm1017
        %vm1166 = vmpackc.low %vm1020, %vm1019
        %vm1167 = vmpackc.low %vm1022, %vm1021
        %vm1168 = vmpackc.low %vm1024, %vm1023
        %vm1169 = vmpackc.low %vm1026, %vm1025
        %vm1170 = vmpackc.low %vm1028, %vm1027
        %vm1171 = vmpackc.low %vm1030, %vm1029
        %vm1172 = vmpackc.low %vm1032, %vm1031
        %vm1173 = vmpackc.low %vm1034, %vm1033
        %vm1174 = vmpackc.low %vm1036, %vm1035
        %vm1175 = vmpackc.low %vm1038, %vm1037
        %vm1176 = vmpackc.low %vm1040, %vm1039
        %vm1177 = vmpackc.low %vm1042, %vm1041
        %vm1178 = vmpackc.low %vm1044, %vm1043
        %vm1179 = vmpackc.low %vm1046, %vm1045
        %vm1180 = vmpackc.low %vm1048, %vm1047
        %vm1181 = vmpackc.low %vm1050, %vm1049
        %vm1182 = vmpackc.low %vm1052, %vm1051
        %vm1183 = vmpackc.low %vm1054, %vm1053
        %vm1184 = vmpackc.low %vm1056, %vm1055
        %v1185 = vsel %vm1057, %v301, 0
        %v1186 = vsel %vm1058, %v302, 0
        %v1187 = vsel %vm1059, %v303, 0
        %v1188 = vsel %vm1060, %v304, 0
        %v1189 = vsel %vm1061, %v305, 0
        %v1190 = vsel %vm1062, %v306, 0
        %v1191 = vsel %vm1063, %v307, 0
        %v1192 = vsel %vm1064, %v308, 0
        %v1193 = vsel %vm1065, %v309, 0
        %v1194 = vsel %vm1066, %v310, 0
        %v1195 = vsel %vm1067, %v311, 0
        %v1196 = vsel %vm1068, %v312, 0
        %v1197 = vsel %vm1069, %v313, 0
        %v1198 = vsel %vm1070, %v314, 0
        %v1199 = vsel %vm1071, %v315, 0
        %v1200 = vsel %vm1072, %v316, 0
        %v1201 = vsel %vm1073, %v317, 0
        %v1202 = vsel %vm1074, %v318, 0
        %v1203 = vsel %vm1075, %v319, 0
        %v1204 = vsel %vm1076, %v320, 0
        %v1205 = vsel %vm1077, %v321, 0
        %v1206 = vsel %vm1078, %v322, 0
        %v1207 = vsel %vm1079, %v323, 0
        %v1208 = vsel %vm1080, %v324, 0
        %v1209 = vsel %vm1081, %v325, 0
        %v1210 = vsel %vm1082, %v326, 0
        %v1211 = vsel %vm1083, %v327, 0
        %v1212 = vsel %vm1084, %v328, 0
        %v1213 = vsel %vm1085, %v329, 0
        %v1214 = vsel %vm1086, %v330, 0
        %v1215 = vsel %vm1087, %v331, 0
        %v1216 = vsel %vm1088, %v332, 0
        %v1217 = vsel %vm1089, %v333, 0
        %v1218 = vsel %vm1090, %v334, 0
        %v1219 = vsel %vm1091, %v335, 0
        %v1220 = vsel %vm1092, %v336, 0
        %v1221 = vsel %vm1093, %v337, 0
        %v1222 = vsel %vm1094, %v338, 0
        %v1223 = vsel %vm1095, %v339, 0
        %v1224 = vsel %vm1096, %v340, 0
        %v1225 = vsel %vm1097, %v341, 0
        %v1226 = vsel %vm1098, %v342, 0
        %v1227 = vsel %vm1099, %v343, 0
        %v1228 = vsel %vm1100, %v344, 0
        %v1229 = vsel %vm1101, %v345, 0
        %v1230 = vsel %vm1102, %v346, 0
        %v1231 = vsel %vm1103, %v347, 0
        %v1232 = vsel %vm1104, %v348, 0
        %v1233 = vsel %vm1105, %v349, 0
        %v1234 = vsel %vm1106, %v350, 0
        %v1235 = vsel %vm1107, %v351, 0
        %v1236 = vsel %vm1108, %v352, 0
        %v1237 = vsel %vm1109, %v353, 0
        %v1238 = vsel %vm1110, %v354, 0
        %v1239 = vsel %vm1111, %v355, 0
        %v1240 = vsel %vm1112, %v356, 0
        %v1241 = vsel %vm1113, %v357, 0
        %v1242 = vsel %vm1114, %v358, 0
        %v1243 = vsel %vm1115, %v359, 0
        %v1244 = vsel %vm1116, %v360, 0
        %v1245 = vsel %vm1117, %v361, 0
        %v1246 = vsel %vm1118, %v362, 0
        %v1247 = vsel %vm1119, %v363, 0
        %v1248 = vsel %vm1120, %v364, 0
        %v1249 = vsel %vm1121, %v365, 0
        %v1250 = vsel %vm1122, %v366, 0
        %v1251 = vsel %vm1123, %v367, 0
        %v1252 = vsel %vm1124, %v368, 0
        %v1253 = vsel %vm1125, %v369, 0
        %v1254 = vsel %vm1126, %v370, 0
        %v1255 = vsel %vm1127, %v371, 0
        %v1256 = vsel %vm1128, %v372, 0
        %v1257 = vsel %vm1129, %v373, 0
        %v1258 = vsel %vm1130, %v374, 0
        %v1259 = vsel %vm1131, %v375, 0
        %v1260 = vsel %vm1132, %v376, 0
        %v1261 = vsel %vm1133, %v377, 0
        %v1262 = vsel %vm1134, %v378, 0
        %v1263 = vsel %vm1135, %v379, 0
        %v1264 = vsel %vm1136, %v380, 0
        %v1265 = vsel %vm1137, %v381, 0
        %v1266 = vsel %vm1138, %v382, 0
        %v1267 = vsel %vm1139, %v383, 0
        %v1268 = vsel %vm1140, %v384, 0
        %v1269 = vsel %vm1141, %v385, 0
        %v1270 = vsel %vm1142, %v386, 0
        %v1271 = vsel %vm1143, %v387, 0
        %v1272 = vsel %vm1144, %v388, 0
        %v1273 = vsel %vm1145, %v389, 0
        %v1274 = vsel %vm1146, %v390, 0
        %v1275 = vsel %vm1147, %v391, 0
        %v1276 = vsel %vm1148, %v392, 0
        %v1277 = vsel %vm1149, %v393, 0
        %v1278 = vsel %vm1150, %v394, 0
        %v1279 = vsel %vm1151, %v395, 0
        %v1280 = vsel %vm1152, %v396, 0
        %v1281 = vsel %vm1153, %v397, 0
        %v1282 = vsel %vm1154, %v398, 0
        %v1283 = vsel %vm1155, %v399, 0
        %v1284 = vsel %vm1156, %v400, 0
        %v1285 = vsel %vm1157, %v401, 0
        %v1286 = vsel %vm1158, %v402, 0
        %v1287 = vsel %vm1159, %v403, 0
        %v1288 = vsel %vm1160, %v404, 0
        %v1289 = vsel %vm1161, %v405, 0
        %v1290 = vsel %vm1162, %v406, 0
        %v1291 = vsel %vm1163, %v407, 0
        %v1292 = vsel %vm1164, %v408, 0
        %v1293 = vsel %vm1165, %v409, 0
        %v1294 = vsel %vm1166, %v410, 0
        %v1295 = vsel %vm1167, %v411, 0
        %v1296 = vsel %vm1168, %v412, 0
        %v1297 = vsel %vm1169, %v413, 0
        %v1298 = vsel %vm1170, %v414, 0
        %v1299 = vsel %vm1171, %v415, 0
        %v1300 = vsel %vm1172, %v416, 0
        %v1301 = vsel %vm1173, %v417, 0
        %v1302 = vsel %vm1174, %v418, 0
        %v1303 = vsel %vm1175, %v419, 0
        %v1304 = vsel %vm1176, %v420, 0
        %v1305 = vsel %vm1177, %v421, 0
        %v1306 = vsel %vm1178, %v422, 0
        %v1307 = vsel %vm1179, %v423, 0
        %v1308 = vsel %vm1180, %v424, 0
        %v1309 = vsel %vm1181, %v425, 0
        %v1310 = vsel %vm1182, %v426, 0
        %v1311 = vsel %vm1183, %v427, 0
        %v1312 = vsel %vm1184, %v428, 0
        %v1313 = vsel %vm1057, 0, %v301
        %v1314 = vsel %vm1058, 0, %v302
        %v1315 = vsel %vm1059, 0, %v303
        %v1316 = vsel %vm1060, 0, %v304
        %v1317 = vsel %vm1061, 0, %v305
        %v1318 = vsel %vm1062, 0, %v306
        %v1319 = vsel %vm1063, 0, %v307
        %v1320 = vsel %vm1064, 0, %v308
        %v1321 = vsel %vm1065, 0, %v309
        %v1322 = vsel %vm1066, 0, %v310
        %v1323 = vsel %vm1067, 0, %v311
        %v1324 = vsel %vm1068, 0, %v312
        %v1325 = vsel %vm1069, 0, %v313
        %v1326 = vsel %vm1070, 0, %v314
        %v1327 = vsel %vm1071, 0, %v315
        %v1328 = vsel %vm1072, 0, %v316
        %v1329 = vsel %vm1073, 0, %v317
        %v1330 = vsel %vm1074, 0, %v318
        %v1331 = vsel %vm1075, 0, %v319
        %v1332 = vsel %vm1076, 0, %v320
        %v1333 = vsel %vm1077, 0, %v321
        %v1334 = vsel %vm1078, 0, %v322
        %v1335 = vsel %vm1079, 0, %v323
        %v1336 = vsel %vm1080, 0, %v324
        %v1337 = vsel %vm1081, 0, %v325
        %v1338 = vsel %vm1082, 0, %v326
        %v1339 = vsel %vm1083, 0, %v327
        %v1340 = vsel %vm1084, 0, %v328
        %v1341 = vsel %vm1085, 0, %v329
        %v1342 = vsel %vm1086, 0, %v330
        %v1343 = vsel %vm1087, 0, %v331
        %v1344 = vsel %vm1088, 0, %v332
        %v1345 = vsel %vm1089, 0, %v333
        %v1346 = vsel %vm1090, 0, %v334
        %v1347 = vsel %vm1091, 0, %v335
        %v1348 = vsel %vm1092, 0, %v336
        %v1349 = vsel %vm1093, 0, %v337
        %v1350 = vsel %vm1094, 0, %v338
        %v1351 = vsel %vm1095, 0, %v339
        %v1352 = vsel %vm1096, 0, %v340
        %v1353 = vsel %vm1097, 0, %v341
        %v1354 = vsel %vm1098, 0, %v342
        %v1355 = vsel %vm1099, 0, %v343
        %v1356 = vsel %vm1100, 0, %v344
        %v1357 = vsel %vm1101, 0, %v345
        %v1358 = vsel %vm1102, 0, %v346
        %v1359 = vsel %vm1103, 0, %v347
        %v1360 = vsel %vm1104, 0, %v348
        %v1361 = vsel %vm1105, 0, %v349
        %v1362 = vsel %vm1106, 0, %v350
        %v1363 = vsel %vm1107, 0, %v351
        %v1364 = vsel %vm1108, 0, %v352
        %v1365 = vsel %vm1109, 0, %v353
        %v1366 = vsel %vm1110, 0, %v354
        %v1367 = vsel %vm1111, 0, %v355
        %v1368 = vsel %vm1112, 0, %v356
        %v1369 = vsel %vm1113, 0, %v357
        %v1370 = vsel %vm1114, 0, %v358
        %v1371 = vsel %vm1115, 0, %v359
        %v1372 = vsel %vm1116, 0, %v360
        %v1373 = vsel %vm1117, 0, %v361
        %v1374 = vsel %vm1118, 0, %v362
        %v1375 = vsel %vm1119, 0, %v363
        %v1376 = vsel %vm1120, 0, %v364
        %v1377 = vsel %vm1121, 0, %v365
        %v1378 = vsel %vm1122, 0, %v366
        %v1379 = vsel %vm1123, 0, %v367
        %v1380 = vsel %vm1124, 0, %v368
        %v1381 = vsel %vm1125, 0, %v369
        %v1382 = vsel %vm1126, 0, %v370
        %v1383 = vsel %vm1127, 0, %v371
        %v1384 = vsel %vm1128, 0, %v372
        %v1385 = vsel %vm1129, 0, %v373
        %v1386 = vsel %vm1130, 0, %v374
        %v1387 = vsel %vm1131, 0, %v375
        %v1388 = vsel %vm1132, 0, %v376
        %v1389 = vsel %vm1133, 0, %v377
        %v1390 = vsel %vm1134, 0, %v378
        %v1391 = vsel %vm1135, 0, %v379
        %v1392 = vsel %vm1136, 0, %v380
        %v1393 = vsel %vm1137, 0, %v381
        %v1394 = vsel %vm1138, 0, %v382
        %v1395 = vsel %vm1139, 0, %v383
        %v1396 = vsel %vm1140, 0, %v384
        %v1397 = vsel %vm1141, 0, %v385
        %v1398 = vsel %vm1142, 0, %v386
        %v1399 = vsel %vm1143, 0, %v387
        %v1400 = vsel %vm1144, 0, %v388
        %v1401 = vsel %vm1145, 0, %v389
        %v1402 = vsel %vm1146, 0, %v390
        %v1403 = vsel %vm1147, 0, %v391
        %v1404 = vsel %vm1148, 0, %v392
        %v1405 = vsel %vm1149, 0, %v393
        %v1406 = vsel %vm1150, 0, %v394
        %v1407 = vsel %vm1151, 0, %v395
        %v1408 = vsel %vm1152, 0, %v396
        %v1409 = vsel %vm1153, 0, %v397
        %v1410 = vsel %vm1154, 0, %v398
        %v1411 = vsel %vm1155, 0, %v399
        %v1412 = vsel %vm1156, 0, %v400
        %v1413 = vsel %vm1157, 0, %v401
        %v1414 = vsel %vm1158, 0, %v402
        %v1415 = vsel %vm1159, 0, %v403
        %v1416 = vsel %vm1160, 0, %v404
        %v1417 = vsel %vm1161, 0, %v405
        %v1418 = vsel %vm1162, 0, %v406
        %v1419 = vsel %vm1163, 0, %v407
        %v1420 = vsel %vm1164, 0, %v408
        %v1421 = vsel %vm1165, 0, %v409
        %v1422 = vsel %vm1166, 0, %v410
        %v1423 = vsel %vm1167, 0, %v411
        %v1424 = vsel %vm1168, 0, %v412
        %v1425 = vsel %vm1169, 0, %v413
        %v1426 = vsel %vm1170, 0, %v414
        %v1427 = vsel %vm1171, 0, %v415
        %v1428 = vsel %vm1172, 0, %v416
        %v1429 = vsel %vm1173, 0, %v417
        %v1430 = vsel %vm1174, 0, %v418
        %v1431 = vsel %vm1175, 0, %v419
        %v1432 = vsel %vm1176, 0, %v420
        %v1433 = vsel %vm1177, 0, %v421
        %v1434 = vsel %vm1178, 0, %v422
        %v1435 = vsel %vm1179, 0, %v423
        %v1436 = vsel %vm1180, 0, %v424
        %v1437 = vsel %vm1181, 0, %v425
        %v1438 = vsel %vm1182, 0, %v426
        %v1439 = vsel %vm1183, 0, %v427
        %v1440 = vsel %vm1184, 0, %v428
        %v1441 = vld [vmem:[#allocation5] sm:$0xf]
        %v1442 = vld [vmem:[#allocation5 + $0x4] sm:$0xf]
        %v1443 = vld [vmem:[#allocation5 + $0x8] sm:$0xf]
        %v1444 = vld [vmem:[#allocation5 + $0xc] sm:$0xf]
        %v1445 = vld [vmem:[#allocation5 + $0x10] sm:$0xf]
        %v1446 = vld [vmem:[#allocation5 + $0x14] sm:$0xf]
        %v1447 = vld [vmem:[#allocation5 + $0x18] sm:$0xf]
        %v1448 = vld [vmem:[#allocation5 + $0x1c] sm:$0xf]
        %v1449 = vld [vmem:[#allocation5 + $0x20] sm:$0xf]
        %v1450 = vld [vmem:[#allocation5 + $0x24] sm:$0xf]
        %v1451 = vld [vmem:[#allocation5 + $0x28] sm:$0xf]
        %v1452 = vld [vmem:[#allocation5 + $0x2c] sm:$0xf]
        %v1453 = vld [vmem:[#allocation5 + $0x30] sm:$0xf]
        %v1454 = vld [vmem:[#allocation5 + $0x34] sm:$0xf]
        %v1455 = vld [vmem:[#allocation5 + $0x38] sm:$0xf]
        %v1456 = vld [vmem:[#allocation5 + $0x3c] sm:$0xf]
        %v1457 = vld [vmem:[#allocation5 + $0x40] sm:$0xf]
        %v1458 = vld [vmem:[#allocation5 + $0x44] sm:$0xf]
        %v1459 = vld [vmem:[#allocation5 + $0x48] sm:$0xf]
        %v1460 = vld [vmem:[#allocation5 + $0x4c] sm:$0xf]
        %v1461 = vld [vmem:[#allocation5 + $0x50] sm:$0xf]
        %v1462 = vld [vmem:[#allocation5 + $0x54] sm:$0xf]
        %v1463 = vld [vmem:[#allocation5 + $0x58] sm:$0xf]
        %v1464 = vld [vmem:[#allocation5 + $0x5c] sm:$0xf]
        %v1465 = vld [vmem:[#allocation5 + $0x60] sm:$0xf]
        %v1466 = vld [vmem:[#allocation5 + $0x64] sm:$0xf]
        %v1467 = vld [vmem:[#allocation5 + $0x68] sm:$0xf]
        %v1468 = vld [vmem:[#allocation5 + $0x6c] sm:$0xf]
        %v1469 = vld [vmem:[#allocation5 + $0x70] sm:$0xf]
        %v1470 = vld [vmem:[#allocation5 + $0x74] sm:$0xf]
        %v1471 = vld [vmem:[#allocation5 + $0x78] sm:$0xf]
        %v1472 = vld [vmem:[#allocation5 + $0x7c] sm:$0xf]
        %v1473 = vld [vmem:[#allocation5 + $0x80] sm:$0xf]
        %v1474 = vld [vmem:[#allocation5 + $0x84] sm:$0xf]
        %v1475 = vld [vmem:[#allocation5 + $0x88] sm:$0xf]
        %v1476 = vld [vmem:[#allocation5 + $0x8c] sm:$0xf]
        %v1477 = vld [vmem:[#allocation5 + $0x90] sm:$0xf]
        %v1478 = vld [vmem:[#allocation5 + $0x94] sm:$0xf]
        %v1479 = vld [vmem:[#allocation5 + $0x98] sm:$0xf]
        %v1480 = vld [vmem:[#allocation5 + $0x9c] sm:$0xf]
        %v1481 = vld [vmem:[#allocation5 + $0xa0] sm:$0xf]
        %v1482 = vld [vmem:[#allocation5 + $0xa4] sm:$0xf]
        %v1483 = vld [vmem:[#allocation5 + $0xa8] sm:$0xf]
        %v1484 = vld [vmem:[#allocation5 + $0xac] sm:$0xf]
        %v1485 = vld [vmem:[#allocation5 + $0xb0] sm:$0xf]
        %v1486 = vld [vmem:[#allocation5 + $0xb4] sm:$0xf]
        %v1487 = vld [vmem:[#allocation5 + $0xb8] sm:$0xf]
        %v1488 = vld [vmem:[#allocation5 + $0xbc] sm:$0xf]
        %v1489 = vld [vmem:[#allocation5 + $0xc0] sm:$0xf]
        %v1490 = vld [vmem:[#allocation5 + $0xc4] sm:$0xf]
        %v1491 = vld [vmem:[#allocation5 + $0xc8] sm:$0xf]
        %v1492 = vld [vmem:[#allocation5 + $0xcc] sm:$0xf]
        %v1493 = vld [vmem:[#allocation5 + $0xd0] sm:$0xf]
        %v1494 = vld [vmem:[#allocation5 + $0xd4] sm:$0xf]
        %v1495 = vld [vmem:[#allocation5 + $0xd8] sm:$0xf]
        %v1496 = vld [vmem:[#allocation5 + $0xdc] sm:$0xf]
        %v1497 = vld [vmem:[#allocation5 + $0xe0] sm:$0xf]
        %v1498 = vld [vmem:[#allocation5 + $0xe4] sm:$0xf]
        %v1499 = vld [vmem:[#allocation5 + $0xe8] sm:$0xf]
        %v1500 = vld [vmem:[#allocation5 + $0xec] sm:$0xf]
        %v1501 = vld [vmem:[#allocation5 + $0xf0] sm:$0xf]
        %v1502 = vld [vmem:[#allocation5 + $0xf4] sm:$0xf]
        %v1503 = vld [vmem:[#allocation5 + $0xf8] sm:$0xf]
        %v1504 = vld [vmem:[#allocation5 + $0xfc] sm:$0xf]
        %v1505 = vld [vmem:[#allocation5 + $0x100] sm:$0xf]
        %v1506 = vld [vmem:[#allocation5 + $0x104] sm:$0xf]
        %v1507 = vld [vmem:[#allocation5 + $0x108] sm:$0xf]
        %v1508 = vld [vmem:[#allocation5 + $0x10c] sm:$0xf]
        %v1509 = vld [vmem:[#allocation5 + $0x110] sm:$0xf]
        %v1510 = vld [vmem:[#allocation5 + $0x114] sm:$0xf]
        %v1511 = vld [vmem:[#allocation5 + $0x118] sm:$0xf]
        %v1512 = vld [vmem:[#allocation5 + $0x11c] sm:$0xf]
        %v1513 = vld [vmem:[#allocation5 + $0x120] sm:$0xf]
        %v1514 = vld [vmem:[#allocation5 + $0x124] sm:$0xf]
        %v1515 = vld [vmem:[#allocation5 + $0x128] sm:$0xf]
        %v1516 = vld [vmem:[#allocation5 + $0x12c] sm:$0xf]
        %v1517 = vld [vmem:[#allocation5 + $0x130] sm:$0xf]
        %v1518 = vld [vmem:[#allocation5 + $0x134] sm:$0xf]
        %v1519 = vld [vmem:[#allocation5 + $0x138] sm:$0xf]
        %v1520 = vld [vmem:[#allocation5 + $0x13c] sm:$0xf]
        %v1521 = vld [vmem:[#allocation5 + $0x140] sm:$0xf]
        %v1522 = vld [vmem:[#allocation5 + $0x144] sm:$0xf]
        %v1523 = vld [vmem:[#allocation5 + $0x148] sm:$0xf]
        %v1524 = vld [vmem:[#allocation5 + $0x14c] sm:$0xf]
        %v1525 = vld [vmem:[#allocation5 + $0x150] sm:$0xf]
        %v1526 = vld [vmem:[#allocation5 + $0x154] sm:$0xf]
        %v1527 = vld [vmem:[#allocation5 + $0x158] sm:$0xf]
        %v1528 = vld [vmem:[#allocation5 + $0x15c] sm:$0xf]
        %v1529 = vld [vmem:[#allocation5 + $0x160] sm:$0xf]
        %v1530 = vld [vmem:[#allocation5 + $0x164] sm:$0xf]
        %v1531 = vld [vmem:[#allocation5 + $0x168] sm:$0xf]
        %v1532 = vld [vmem:[#allocation5 + $0x16c] sm:$0xf]
        %v1533 = vld [vmem:[#allocation5 + $0x170] sm:$0xf]
        %v1534 = vld [vmem:[#allocation5 + $0x174] sm:$0xf]
        %v1535 = vld [vmem:[#allocation5 + $0x178] sm:$0xf]
        %v1536 = vld [vmem:[#allocation5 + $0x17c] sm:$0xf]
        %v1537 = vld [vmem:[#allocation5 + $0x180] sm:$0xf]
        %v1538 = vld [vmem:[#allocation5 + $0x184] sm:$0xf]
        %v1539 = vld [vmem:[#allocation5 + $0x188] sm:$0xf]
        %v1540 = vld [vmem:[#allocation5 + $0x18c] sm:$0xf]
        %v1541 = vld [vmem:[#allocation5 + $0x190] sm:$0xf]
        %v1542 = vld [vmem:[#allocation5 + $0x194] sm:$0xf]
        %v1543 = vld [vmem:[#allocation5 + $0x198] sm:$0xf]
        %v1544 = vld [vmem:[#allocation5 + $0x19c] sm:$0xf]
        %v1545 = vld [vmem:[#allocation5 + $0x1a0] sm:$0xf]
        %v1546 = vld [vmem:[#allocation5 + $0x1a4] sm:$0xf]
        %v1547 = vld [vmem:[#allocation5 + $0x1a8] sm:$0xf]
        %v1548 = vld [vmem:[#allocation5 + $0x1ac] sm:$0xf]
        %v1549 = vld [vmem:[#allocation5 + $0x1b0] sm:$0xf]
        %v1550 = vld [vmem:[#allocation5 + $0x1b4] sm:$0xf]
        %v1551 = vld [vmem:[#allocation5 + $0x1b8] sm:$0xf]
        %v1552 = vld [vmem:[#allocation5 + $0x1bc] sm:$0xf]
        %v1553 = vld [vmem:[#allocation5 + $0x1c0] sm:$0xf]
        %v1554 = vld [vmem:[#allocation5 + $0x1c4] sm:$0xf]
        %v1555 = vld [vmem:[#allocation5 + $0x1c8] sm:$0xf]
        %v1556 = vld [vmem:[#allocation5 + $0x1cc] sm:$0xf]
        %v1557 = vld [vmem:[#allocation5 + $0x1d0] sm:$0xf]
        %v1558 = vld [vmem:[#allocation5 + $0x1d4] sm:$0xf]
        %v1559 = vld [vmem:[#allocation5 + $0x1d8] sm:$0xf]
        %v1560 = vld [vmem:[#allocation5 + $0x1dc] sm:$0xf]
        %v1561 = vld [vmem:[#allocation5 + $0x1e0] sm:$0xf]
        %v1562 = vld [vmem:[#allocation5 + $0x1e4] sm:$0xf]
        %v1563 = vld [vmem:[#allocation5 + $0x1e8] sm:$0xf]
        %v1564 = vld [vmem:[#allocation5 + $0x1ec] sm:$0xf]
        %v1565 = vld [vmem:[#allocation5 + $0x1f0] sm:$0xf]
        %v1566 = vld [vmem:[#allocation5 + $0x1f4] sm:$0xf]
        %v1567 = vld [vmem:[#allocation5 + $0x1f8] sm:$0xf]
        %v1568 = vld [vmem:[#allocation5 + $0x1fc] sm:$0xf]
        %v1569 = vld [vmem:[#allocation7] sm:$0xf]
        %v1570 = vld [vmem:[#allocation7 + $0x4] sm:$0xf]
        %v1571 = vld [vmem:[#allocation7 + $0x8] sm:$0xf]
        %v1572 = vld [vmem:[#allocation7 + $0xc] sm:$0xf]
        %v1573 = vld [vmem:[#allocation7 + $0x10] sm:$0xf]
        %v1574 = vld [vmem:[#allocation7 + $0x14] sm:$0xf]
        %v1575 = vld [vmem:[#allocation7 + $0x18] sm:$0xf]
        %v1576 = vld [vmem:[#allocation7 + $0x1c] sm:$0xf]
        %v1577 = vld [vmem:[#allocation7 + $0x20] sm:$0xf]
        %v1578 = vld [vmem:[#allocation7 + $0x24] sm:$0xf]
        %v1579 = vld [vmem:[#allocation7 + $0x28] sm:$0xf]
        %v1580 = vld [vmem:[#allocation7 + $0x2c] sm:$0xf]
        %v1581 = vld [vmem:[#allocation7 + $0x30] sm:$0xf]
        %v1582 = vld [vmem:[#allocation7 + $0x34] sm:$0xf]
        %v1583 = vld [vmem:[#allocation7 + $0x38] sm:$0xf]
        %v1584 = vld [vmem:[#allocation7 + $0x3c] sm:$0xf]
        %v1585 = vld [vmem:[#allocation7 + $0x40] sm:$0xf]
        %v1586 = vld [vmem:[#allocation7 + $0x44] sm:$0xf]
        %v1587 = vld [vmem:[#allocation7 + $0x48] sm:$0xf]
        %v1588 = vld [vmem:[#allocation7 + $0x4c] sm:$0xf]
        %v1589 = vld [vmem:[#allocation7 + $0x50] sm:$0xf]
        %v1590 = vld [vmem:[#allocation7 + $0x54] sm:$0xf]
        %v1591 = vld [vmem:[#allocation7 + $0x58] sm:$0xf]
        %v1592 = vld [vmem:[#allocation7 + $0x5c] sm:$0xf]
        %v1593 = vld [vmem:[#allocation7 + $0x60] sm:$0xf]
        %v1594 = vld [vmem:[#allocation7 + $0x64] sm:$0xf]
        %v1595 = vld [vmem:[#allocation7 + $0x68] sm:$0xf]
        %v1596 = vld [vmem:[#allocation7 + $0x6c] sm:$0xf]
        %v1597 = vld [vmem:[#allocation7 + $0x70] sm:$0xf]
        %v1598 = vld [vmem:[#allocation7 + $0x74] sm:$0xf]
        %v1599 = vld [vmem:[#allocation7 + $0x78] sm:$0xf]
        %v1600 = vld [vmem:[#allocation7 + $0x7c] sm:$0xf]
        %v1601 = vld [vmem:[#allocation7 + $0x80] sm:$0xf]
        %v1602 = vld [vmem:[#allocation7 + $0x84] sm:$0xf]
        %v1603 = vld [vmem:[#allocation7 + $0x88] sm:$0xf]
        %v1604 = vld [vmem:[#allocation7 + $0x8c] sm:$0xf]
        %v1605 = vld [vmem:[#allocation7 + $0x90] sm:$0xf]
        %v1606 = vld [vmem:[#allocation7 + $0x94] sm:$0xf]
        %v1607 = vld [vmem:[#allocation7 + $0x98] sm:$0xf]
        %v1608 = vld [vmem:[#allocation7 + $0x9c] sm:$0xf]
        %v1609 = vld [vmem:[#allocation7 + $0xa0] sm:$0xf]
        %v1610 = vld [vmem:[#allocation7 + $0xa4] sm:$0xf]
        %v1611 = vld [vmem:[#allocation7 + $0xa8] sm:$0xf]
        %v1612 = vld [vmem:[#allocation7 + $0xac] sm:$0xf]
        %v1613 = vld [vmem:[#allocation7 + $0xb0] sm:$0xf]
        %v1614 = vld [vmem:[#allocation7 + $0xb4] sm:$0xf]
        %v1615 = vld [vmem:[#allocation7 + $0xb8] sm:$0xf]
        %v1616 = vld [vmem:[#allocation7 + $0xbc] sm:$0xf]
        %v1617 = vld [vmem:[#allocation7 + $0xc0] sm:$0xf]
        %v1618 = vld [vmem:[#allocation7 + $0xc4] sm:$0xf]
        %v1619 = vld [vmem:[#allocation7 + $0xc8] sm:$0xf]
        %v1620 = vld [vmem:[#allocation7 + $0xcc] sm:$0xf]
        %v1621 = vld [vmem:[#allocation7 + $0xd0] sm:$0xf]
        %v1622 = vld [vmem:[#allocation7 + $0xd4] sm:$0xf]
        %v1623 = vld [vmem:[#allocation7 + $0xd8] sm:$0xf]
        %v1624 = vld [vmem:[#allocation7 + $0xdc] sm:$0xf]
        %v1625 = vld [vmem:[#allocation7 + $0xe0] sm:$0xf]
        %v1626 = vld [vmem:[#allocation7 + $0xe4] sm:$0xf]
        %v1627 = vld [vmem:[#allocation7 + $0xe8] sm:$0xf]
        %v1628 = vld [vmem:[#allocation7 + $0xec] sm:$0xf]
        %v1629 = vld [vmem:[#allocation7 + $0xf0] sm:$0xf]
        %v1630 = vld [vmem:[#allocation7 + $0xf4] sm:$0xf]
        %v1631 = vld [vmem:[#allocation7 + $0xf8] sm:$0xf]
        %v1632 = vld [vmem:[#allocation7 + $0xfc] sm:$0xf]
        %v1633 = vld [vmem:[#allocation7 + $0x100] sm:$0xf]
        %v1634 = vld [vmem:[#allocation7 + $0x104] sm:$0xf]
        %v1635 = vld [vmem:[#allocation7 + $0x108] sm:$0xf]
        %v1636 = vld [vmem:[#allocation7 + $0x10c] sm:$0xf]
        %v1637 = vld [vmem:[#allocation7 + $0x110] sm:$0xf]
        %v1638 = vld [vmem:[#allocation7 + $0x114] sm:$0xf]
        %v1639 = vld [vmem:[#allocation7 + $0x118] sm:$0xf]
        %v1640 = vld [vmem:[#allocation7 + $0x11c] sm:$0xf]
        %v1641 = vld [vmem:[#allocation7 + $0x120] sm:$0xf]
        %v1642 = vld [vmem:[#allocation7 + $0x124] sm:$0xf]
        %v1643 = vld [vmem:[#allocation7 + $0x128] sm:$0xf]
        %v1644 = vld [vmem:[#allocation7 + $0x12c] sm:$0xf]
        %v1645 = vld [vmem:[#allocation7 + $0x130] sm:$0xf]
        %v1646 = vld [vmem:[#allocation7 + $0x134] sm:$0xf]
        %v1647 = vld [vmem:[#allocation7 + $0x138] sm:$0xf]
        %v1648 = vld [vmem:[#allocation7 + $0x13c] sm:$0xf]
        %v1649 = vld [vmem:[#allocation7 + $0x140] sm:$0xf]
        %v1650 = vld [vmem:[#allocation7 + $0x144] sm:$0xf]
        %v1651 = vld [vmem:[#allocation7 + $0x148] sm:$0xf]
        %v1652 = vld [vmem:[#allocation7 + $0x14c] sm:$0xf]
        %v1653 = vld [vmem:[#allocation7 + $0x150] sm:$0xf]
        %v1654 = vld [vmem:[#allocation7 + $0x154] sm:$0xf]
        %v1655 = vld [vmem:[#allocation7 + $0x158] sm:$0xf]
        %v1656 = vld [vmem:[#allocation7 + $0x15c] sm:$0xf]
        %v1657 = vld [vmem:[#allocation7 + $0x160] sm:$0xf]
        %v1658 = vld [vmem:[#allocation7 + $0x164] sm:$0xf]
        %v1659 = vld [vmem:[#allocation7 + $0x168] sm:$0xf]
        %v1660 = vld [vmem:[#allocation7 + $0x16c] sm:$0xf]
        %v1661 = vld [vmem:[#allocation7 + $0x170] sm:$0xf]
        %v1662 = vld [vmem:[#allocation7 + $0x174] sm:$0xf]
        %v1663 = vld [vmem:[#allocation7 + $0x178] sm:$0xf]
        %v1664 = vld [vmem:[#allocation7 + $0x17c] sm:$0xf]
        %v1665 = vld [vmem:[#allocation7 + $0x180] sm:$0xf]
        %v1666 = vld [vmem:[#allocation7 + $0x184] sm:$0xf]
        %v1667 = vld [vmem:[#allocation7 + $0x188] sm:$0xf]
        %v1668 = vld [vmem:[#allocation7 + $0x18c] sm:$0xf]
        %v1669 = vld [vmem:[#allocation7 + $0x190] sm:$0xf]
        %v1670 = vld [vmem:[#allocation7 + $0x194] sm:$0xf]
        %v1671 = vld [vmem:[#allocation7 + $0x198] sm:$0xf]
        %v1672 = vld [vmem:[#allocation7 + $0x19c] sm:$0xf]
        %v1673 = vld [vmem:[#allocation7 + $0x1a0] sm:$0xf]
        %v1674 = vld [vmem:[#allocation7 + $0x1a4] sm:$0xf]
        %v1675 = vld [vmem:[#allocation7 + $0x1a8] sm:$0xf]
        %v1676 = vld [vmem:[#allocation7 + $0x1ac] sm:$0xf]
        %v1677 = vld [vmem:[#allocation7 + $0x1b0] sm:$0xf]
        %v1678 = vld [vmem:[#allocation7 + $0x1b4] sm:$0xf]
        %v1679 = vld [vmem:[#allocation7 + $0x1b8] sm:$0xf]
        %v1680 = vld [vmem:[#allocation7 + $0x1bc] sm:$0xf]
        %v1681 = vld [vmem:[#allocation7 + $0x1c0] sm:$0xf]
        %v1682 = vld [vmem:[#allocation7 + $0x1c4] sm:$0xf]
        %v1683 = vld [vmem:[#allocation7 + $0x1c8] sm:$0xf]
        %v1684 = vld [vmem:[#allocation7 + $0x1cc] sm:$0xf]
        %v1685 = vld [vmem:[#allocation7 + $0x1d0] sm:$0xf]
        %v1686 = vld [vmem:[#allocation7 + $0x1d4] sm:$0xf]
        %v1687 = vld [vmem:[#allocation7 + $0x1d8] sm:$0xf]
        %v1688 = vld [vmem:[#allocation7 + $0x1dc] sm:$0xf]
        %v1689 = vld [vmem:[#allocation7 + $0x1e0] sm:$0xf]
        %v1690 = vld [vmem:[#allocation7 + $0x1e4] sm:$0xf]
        %v1691 = vld [vmem:[#allocation7 + $0x1e8] sm:$0xf]
        %v1692 = vld [vmem:[#allocation7 + $0x1ec] sm:$0xf]
        %v1693 = vld [vmem:[#allocation7 + $0x1f0] sm:$0xf]
        %v1694 = vld [vmem:[#allocation7 + $0x1f4] sm:$0xf]
        %v1695 = vld [vmem:[#allocation7 + $0x1f8] sm:$0xf]
        %v1696 = vld [vmem:[#allocation7 + $0x1fc] sm:$0xf]
        %v1697 = vld [vmem:[#allocation8] sm:$0x1]
        %v1699 = vlaneseq
        %v1700 = vshrl.u32 %v1699, 7
        %v1701 = vsub.s32 0, %v1700
        %v1702 = vrot.slane %v1697, %v1701
        %v1832 = vunpack.c.l.b16 %v1185
        %v1833 = vunpack.c.h.b16 %v1185
        %v1834 = vunpack.c.l.b16 %v1186
        %v1835 = vunpack.c.h.b16 %v1186
        %v1836 = vunpack.c.l.b16 %v1187
        %v1837 = vunpack.c.h.b16 %v1187
        %v1838 = vunpack.c.l.b16 %v1188
        %v1839 = vunpack.c.h.b16 %v1188
        %v1840 = vunpack.c.l.b16 %v1189
        %v1841 = vunpack.c.h.b16 %v1189
        %v1842 = vunpack.c.l.b16 %v1190
        %v1843 = vunpack.c.h.b16 %v1190
        %v1844 = vunpack.c.l.b16 %v1191
        %v1845 = vunpack.c.h.b16 %v1191
        %v1846 = vunpack.c.l.b16 %v1192
        %v1847 = vunpack.c.h.b16 %v1192
        %v1848 = vunpack.c.l.b16 %v1193
        %v1849 = vunpack.c.h.b16 %v1193
        %v1850 = vunpack.c.l.b16 %v1194
        %v1851 = vunpack.c.h.b16 %v1194
        %v1852 = vunpack.c.l.b16 %v1195
        %v1853 = vunpack.c.h.b16 %v1195
        %v1854 = vunpack.c.l.b16 %v1196
        %v1855 = vunpack.c.h.b16 %v1196
        %v1856 = vunpack.c.l.b16 %v1197
        %v1857 = vunpack.c.h.b16 %v1197
        %v1858 = vunpack.c.l.b16 %v1198
        %v1859 = vunpack.c.h.b16 %v1198
        %v1860 = vunpack.c.l.b16 %v1199
        %v1861 = vunpack.c.h.b16 %v1199
        %v1862 = vunpack.c.l.b16 %v1200
        %v1863 = vunpack.c.h.b16 %v1200
        %v1864 = vunpack.c.l.b16 %v1201
        %v1865 = vunpack.c.h.b16 %v1201
        %v1866 = vunpack.c.l.b16 %v1202
        %v1867 = vunpack.c.h.b16 %v1202
        %v1868 = vunpack.c.l.b16 %v1203
        %v1869 = vunpack.c.h.b16 %v1203
        %v1870 = vunpack.c.l.b16 %v1204
        %v1871 = vunpack.c.h.b16 %v1204
        %v1872 = vunpack.c.l.b16 %v1205
        %v1873 = vunpack.c.h.b16 %v1205
        %v1874 = vunpack.c.l.b16 %v1206
        %v1875 = vunpack.c.h.b16 %v1206
        %v1876 = vunpack.c.l.b16 %v1207
        %v1877 = vunpack.c.h.b16 %v1207
        %v1878 = vunpack.c.l.b16 %v1208
        %v1879 = vunpack.c.h.b16 %v1208
        %v1880 = vunpack.c.l.b16 %v1209
        %v1881 = vunpack.c.h.b16 %v1209
        %v1882 = vunpack.c.l.b16 %v1210
        %v1883 = vunpack.c.h.b16 %v1210
        %v1884 = vunpack.c.l.b16 %v1211
        %v1885 = vunpack.c.h.b16 %v1211
        %v1886 = vunpack.c.l.b16 %v1212
        %v1887 = vunpack.c.h.b16 %v1212
        %v1888 = vunpack.c.l.b16 %v1213
        %v1889 = vunpack.c.h.b16 %v1213
        %v1890 = vunpack.c.l.b16 %v1214
        %v1891 = vunpack.c.h.b16 %v1214
        %v1892 = vunpack.c.l.b16 %v1215
        %v1893 = vunpack.c.h.b16 %v1215
        %v1894 = vunpack.c.l.b16 %v1216
        %v1895 = vunpack.c.h.b16 %v1216
        %v1896 = vunpack.c.l.b16 %v1217
        %v1897 = vunpack.c.h.b16 %v1217
        %v1898 = vunpack.c.l.b16 %v1218
        %v1899 = vunpack.c.h.b16 %v1218
        %v1900 = vunpack.c.l.b16 %v1219
        %v1901 = vunpack.c.h.b16 %v1219
        %v1902 = vunpack.c.l.b16 %v1220
        %v1903 = vunpack.c.h.b16 %v1220
        %v1904 = vunpack.c.l.b16 %v1221
        %v1905 = vunpack.c.h.b16 %v1221
        %v1906 = vunpack.c.l.b16 %v1222
        %v1907 = vunpack.c.h.b16 %v1222
        %v1908 = vunpack.c.l.b16 %v1223
        %v1909 = vunpack.c.h.b16 %v1223
        %v1910 = vunpack.c.l.b16 %v1224
        %v1911 = vunpack.c.h.b16 %v1224
        %v1912 = vunpack.c.l.b16 %v1225
        %v1913 = vunpack.c.h.b16 %v1225
        %v1914 = vunpack.c.l.b16 %v1226
        %v1915 = vunpack.c.h.b16 %v1226
        %v1916 = vunpack.c.l.b16 %v1227
        %v1917 = vunpack.c.h.b16 %v1227
        %v1918 = vunpack.c.l.b16 %v1228
        %v1919 = vunpack.c.h.b16 %v1228
        %v1920 = vunpack.c.l.b16 %v1229
        %v1921 = vunpack.c.h.b16 %v1229
        %v1922 = vunpack.c.l.b16 %v1230
        %v1923 = vunpack.c.h.b16 %v1230
        %v1924 = vunpack.c.l.b16 %v1231
        %v1925 = vunpack.c.h.b16 %v1231
        %v1926 = vunpack.c.l.b16 %v1232
        %v1927 = vunpack.c.h.b16 %v1232
        %v1928 = vunpack.c.l.b16 %v1233
        %v1929 = vunpack.c.h.b16 %v1233
        %v1930 = vunpack.c.l.b16 %v1234
        %v1931 = vunpack.c.h.b16 %v1234
        %v1932 = vunpack.c.l.b16 %v1235
        %v1933 = vunpack.c.h.b16 %v1235
        %v1934 = vunpack.c.l.b16 %v1236
        %v1935 = vunpack.c.h.b16 %v1236
        %v1936 = vunpack.c.l.b16 %v1237
        %v1937 = vunpack.c.h.b16 %v1237
        %v1938 = vunpack.c.l.b16 %v1238
        %v1939 = vunpack.c.h.b16 %v1238
        %v1940 = vunpack.c.l.b16 %v1239
        %v1941 = vunpack.c.h.b16 %v1239
        %v1942 = vunpack.c.l.b16 %v1240
        %v1943 = vunpack.c.h.b16 %v1240
        %v1944 = vunpack.c.l.b16 %v1241
        %v1945 = vunpack.c.h.b16 %v1241
        %v1946 = vunpack.c.l.b16 %v1242
        %v1947 = vunpack.c.h.b16 %v1242
        %v1948 = vunpack.c.l.b16 %v1243
        %v1949 = vunpack.c.h.b16 %v1243
        %v1950 = vunpack.c.l.b16 %v1244
        %v1951 = vunpack.c.h.b16 %v1244
        %v1952 = vunpack.c.l.b16 %v1245
        %v1953 = vunpack.c.h.b16 %v1245
        %v1954 = vunpack.c.l.b16 %v1246
        %v1955 = vunpack.c.h.b16 %v1246
        %v1956 = vunpack.c.l.b16 %v1247
        %v1957 = vunpack.c.h.b16 %v1247
        %v1958 = vunpack.c.l.b16 %v1248
        %v1959 = vunpack.c.h.b16 %v1248
        %v1960 = vunpack.c.l.b16 %v1249
        %v1961 = vunpack.c.h.b16 %v1249
        %v1962 = vunpack.c.l.b16 %v1250
        %v1963 = vunpack.c.h.b16 %v1250
        %v1964 = vunpack.c.l.b16 %v1251
        %v1965 = vunpack.c.h.b16 %v1251
        %v1966 = vunpack.c.l.b16 %v1252
        %v1967 = vunpack.c.h.b16 %v1252
        %v1968 = vunpack.c.l.b16 %v1253
        %v1969 = vunpack.c.h.b16 %v1253
        %v1970 = vunpack.c.l.b16 %v1254
        %v1971 = vunpack.c.h.b16 %v1254
        %v1972 = vunpack.c.l.b16 %v1255
        %v1973 = vunpack.c.h.b16 %v1255
        %v1974 = vunpack.c.l.b16 %v1256
        %v1975 = vunpack.c.h.b16 %v1256
        %v1976 = vunpack.c.l.b16 %v1257
        %v1977 = vunpack.c.h.b16 %v1257
        %v1978 = vunpack.c.l.b16 %v1258
        %v1979 = vunpack.c.h.b16 %v1258
        %v1980 = vunpack.c.l.b16 %v1259
        %v1981 = vunpack.c.h.b16 %v1259
        %v1982 = vunpack.c.l.b16 %v1260
        %v1983 = vunpack.c.h.b16 %v1260
        %v1984 = vunpack.c.l.b16 %v1261
        %v1985 = vunpack.c.h.b16 %v1261
        %v1986 = vunpack.c.l.b16 %v1262
        %v1987 = vunpack.c.h.b16 %v1262
        %v1988 = vunpack.c.l.b16 %v1263
        %v1989 = vunpack.c.h.b16 %v1263
        %v1990 = vunpack.c.l.b16 %v1264
        %v1991 = vunpack.c.h.b16 %v1264
        %v1992 = vunpack.c.l.b16 %v1265
        %v1993 = vunpack.c.h.b16 %v1265
        %v1994 = vunpack.c.l.b16 %v1266
        %v1995 = vunpack.c.h.b16 %v1266
        %v1996 = vunpack.c.l.b16 %v1267
        %v1997 = vunpack.c.h.b16 %v1267
        %v1998 = vunpack.c.l.b16 %v1268
        %v1999 = vunpack.c.h.b16 %v1268
        %v2000 = vunpack.c.l.b16 %v1269
        %v2001 = vunpack.c.h.b16 %v1269
        %v2002 = vunpack.c.l.b16 %v1270
        %v2003 = vunpack.c.h.b16 %v1270
        %v2004 = vunpack.c.l.b16 %v1271
        %v2005 = vunpack.c.h.b16 %v1271
        %v2006 = vunpack.c.l.b16 %v1272
        %v2007 = vunpack.c.h.b16 %v1272
        %v2008 = vunpack.c.l.b16 %v1273
        %v2009 = vunpack.c.h.b16 %v1273
        %v2010 = vunpack.c.l.b16 %v1274
        %v2011 = vunpack.c.h.b16 %v1274
        %v2012 = vunpack.c.l.b16 %v1275
        %v2013 = vunpack.c.h.b16 %v1275
        %v2014 = vunpack.c.l.b16 %v1276
        %v2015 = vunpack.c.h.b16 %v1276
        %v2016 = vunpack.c.l.b16 %v1277
        %v2017 = vunpack.c.h.b16 %v1277
        %v2018 = vunpack.c.l.b16 %v1278
        %v2019 = vunpack.c.h.b16 %v1278
        %v2020 = vunpack.c.l.b16 %v1279
        %v2021 = vunpack.c.h.b16 %v1279
        %v2022 = vunpack.c.l.b16 %v1280
        %v2023 = vunpack.c.h.b16 %v1280
        %v2024 = vunpack.c.l.b16 %v1281
        %v2025 = vunpack.c.h.b16 %v1281
        %v2026 = vunpack.c.l.b16 %v1282
        %v2027 = vunpack.c.h.b16 %v1282
        %v2028 = vunpack.c.l.b16 %v1283
        %v2029 = vunpack.c.h.b16 %v1283
        %v2030 = vunpack.c.l.b16 %v1284
        %v2031 = vunpack.c.h.b16 %v1284
        %v2032 = vunpack.c.l.b16 %v1285
        %v2033 = vunpack.c.h.b16 %v1285
        %v2034 = vunpack.c.l.b16 %v1286
        %v2035 = vunpack.c.h.b16 %v1286
        %v2036 = vunpack.c.l.b16 %v1287
        %v2037 = vunpack.c.h.b16 %v1287
        %v2038 = vunpack.c.l.b16 %v1288
        %v2039 = vunpack.c.h.b16 %v1288
        %v2040 = vunpack.c.l.b16 %v1289
        %v2041 = vunpack.c.h.b16 %v1289
        %v2042 = vunpack.c.l.b16 %v1290
        %v2043 = vunpack.c.h.b16 %v1290
        %v2044 = vunpack.c.l.b16 %v1291
        %v2045 = vunpack.c.h.b16 %v1291
        %v2046 = vunpack.c.l.b16 %v1292
        %v2047 = vunpack.c.h.b16 %v1292
        %v2048 = vunpack.c.l.b16 %v1293
        %v2049 = vunpack.c.h.b16 %v1293
        %v2050 = vunpack.c.l.b16 %v1294
        %v2051 = vunpack.c.h.b16 %v1294
        %v2052 = vunpack.c.l.b16 %v1295
        %v2053 = vunpack.c.h.b16 %v1295
        %v2054 = vunpack.c.l.b16 %v1296
        %v2055 = vunpack.c.h.b16 %v1296
        %v2056 = vunpack.c.l.b16 %v1297
        %v2057 = vunpack.c.h.b16 %v1297
        %v2058 = vunpack.c.l.b16 %v1298
        %v2059 = vunpack.c.h.b16 %v1298
        %v2060 = vunpack.c.l.b16 %v1299
        %v2061 = vunpack.c.h.b16 %v1299
        %v2062 = vunpack.c.l.b16 %v1300
        %v2063 = vunpack.c.h.b16 %v1300
        %v2064 = vunpack.c.l.b16 %v1301
        %v2065 = vunpack.c.h.b16 %v1301
        %v2066 = vunpack.c.l.b16 %v1302
        %v2067 = vunpack.c.h.b16 %v1302
        %v2068 = vunpack.c.l.b16 %v1303
        %v2069 = vunpack.c.h.b16 %v1303
        %v2070 = vunpack.c.l.b16 %v1304
        %v2071 = vunpack.c.h.b16 %v1304
        %v2072 = vunpack.c.l.b16 %v1305
        %v2073 = vunpack.c.h.b16 %v1305
        %v2074 = vunpack.c.l.b16 %v1306
        %v2075 = vunpack.c.h.b16 %v1306
        %v2076 = vunpack.c.l.b16 %v1307
        %v2077 = vunpack.c.h.b16 %v1307
        %v2078 = vunpack.c.l.b16 %v1308
        %v2079 = vunpack.c.h.b16 %v1308
        %v2080 = vunpack.c.l.b16 %v1309
        %v2081 = vunpack.c.h.b16 %v1309
        %v2082 = vunpack.c.l.b16 %v1310
        %v2083 = vunpack.c.h.b16 %v1310
        %v2084 = vunpack.c.l.b16 %v1311
        %v2085 = vunpack.c.h.b16 %v1311
        %v2086 = vunpack.c.l.b16 %v1312
        %v2087 = vunpack.c.h.b16 %v1312
        %v2088 = vpack.c.b16 %v1840, %v1832
        %v2089 = vpack.c.b16 %v1841, %v1833
        %v2090 = vpack.c.b16 %v1842, %v1834
        %v2091 = vpack.c.b16 %v1843, %v1835
        %v2092 = vpack.c.b16 %v1844, %v1836
        %v2093 = vpack.c.b16 %v1845, %v1837
        %v2094 = vpack.c.b16 %v1846, %v1838
        %v2095 = vpack.c.b16 %v1847, %v1839
        %v2096 = vpack.c.b16 %v1856, %v1848
        %v2097 = vpack.c.b16 %v1857, %v1849
        %v2098 = vpack.c.b16 %v1858, %v1850
        %v2099 = vpack.c.b16 %v1859, %v1851
        %v2100 = vpack.c.b16 %v1860, %v1852
        %v2101 = vpack.c.b16 %v1861, %v1853
        %v2102 = vpack.c.b16 %v1862, %v1854
        %v2103 = vpack.c.b16 %v1863, %v1855
        %v2104 = vpack.c.b16 %v1872, %v1864
        %v2105 = vpack.c.b16 %v1873, %v1865
        %v2106 = vpack.c.b16 %v1874, %v1866
        %v2107 = vpack.c.b16 %v1875, %v1867
        %v2108 = vpack.c.b16 %v1876, %v1868
        %v2109 = vpack.c.b16 %v1877, %v1869
        %v2110 = vpack.c.b16 %v1878, %v1870
        %v2111 = vpack.c.b16 %v1879, %v1871
        %v2112 = vpack.c.b16 %v1888, %v1880
        %v2113 = vpack.c.b16 %v1889, %v1881
        %v2114 = vpack.c.b16 %v1890, %v1882
        %v2115 = vpack.c.b16 %v1891, %v1883
        %v2116 = vpack.c.b16 %v1892, %v1884
        %v2117 = vpack.c.b16 %v1893, %v1885
        %v2118 = vpack.c.b16 %v1894, %v1886
        %v2119 = vpack.c.b16 %v1895, %v1887
        %v2120 = vpack.c.b16 %v1904, %v1896
        %v2121 = vpack.c.b16 %v1905, %v1897
        %v2122 = vpack.c.b16 %v1906, %v1898
        %v2123 = vpack.c.b16 %v1907, %v1899
        %v2124 = vpack.c.b16 %v1908, %v1900
        %v2125 = vpack.c.b16 %v1909, %v1901
        %v2126 = vpack.c.b16 %v1910, %v1902
        %v2127 = vpack.c.b16 %v1911, %v1903
        %v2128 = vpack.c.b16 %v1920, %v1912
        %v2129 = vpack.c.b16 %v1921, %v1913
        %v2130 = vpack.c.b16 %v1922, %v1914
        %v2131 = vpack.c.b16 %v1923, %v1915
        %v2132 = vpack.c.b16 %v1924, %v1916
        %v2133 = vpack.c.b16 %v1925, %v1917
        %v2134 = vpack.c.b16 %v1926, %v1918
        %v2135 = vpack.c.b16 %v1927, %v1919
        %v2136 = vpack.c.b16 %v1936, %v1928
        %v2137 = vpack.c.b16 %v1937, %v1929
        %v2138 = vpack.c.b16 %v1938, %v1930
        %v2139 = vpack.c.b16 %v1939, %v1931
        %v2140 = vpack.c.b16 %v1940, %v1932
        %v2141 = vpack.c.b16 %v1941, %v1933
        %v2142 = vpack.c.b16 %v1942, %v1934
        %v2143 = vpack.c.b16 %v1943, %v1935
        %v2144 = vpack.c.b16 %v1952, %v1944
        %v2145 = vpack.c.b16 %v1953, %v1945
        %v2146 = vpack.c.b16 %v1954, %v1946
        %v2147 = vpack.c.b16 %v1955, %v1947
        %v2148 = vpack.c.b16 %v1956, %v1948
        %v2149 = vpack.c.b16 %v1957, %v1949
        %v2150 = vpack.c.b16 %v1958, %v1950
        %v2151 = vpack.c.b16 %v1959, %v1951
        %v2152 = vpack.c.b16 %v1968, %v1960
        %v2153 = vpack.c.b16 %v1969, %v1961
        %v2154 = vpack.c.b16 %v1970, %v1962
        %v2155 = vpack.c.b16 %v1971, %v1963
        %v2156 = vpack.c.b16 %v1972, %v1964
        %v2157 = vpack.c.b16 %v1973, %v1965
        %v2158 = vpack.c.b16 %v1974, %v1966
        %v2159 = vpack.c.b16 %v1975, %v1967
        %v2160 = vpack.c.b16 %v1984, %v1976
        %v2161 = vpack.c.b16 %v1985, %v1977
        %v2162 = vpack.c.b16 %v1986, %v1978
        %v2163 = vpack.c.b16 %v1987, %v1979
        %v2164 = vpack.c.b16 %v1988, %v1980
        %v2165 = vpack.c.b16 %v1989, %v1981
        %v2166 = vpack.c.b16 %v1990, %v1982
        %v2167 = vpack.c.b16 %v1991, %v1983
        %v2168 = vpack.c.b16 %v2000, %v1992
        %v2169 = vpack.c.b16 %v2001, %v1993
        %v2170 = vpack.c.b16 %v2002, %v1994
        %v2171 = vpack.c.b16 %v2003, %v1995
        %v2172 = vpack.c.b16 %v2004, %v1996
        %v2173 = vpack.c.b16 %v2005, %v1997
        %v2174 = vpack.c.b16 %v2006, %v1998
        %v2175 = vpack.c.b16 %v2007, %v1999
        %v2176 = vpack.c.b16 %v2016, %v2008
        %v2177 = vpack.c.b16 %v2017, %v2009
        %v2178 = vpack.c.b16 %v2018, %v2010
        %v2179 = vpack.c.b16 %v2019, %v2011
        %v2180 = vpack.c.b16 %v2020, %v2012
        %v2181 = vpack.c.b16 %v2021, %v2013
        %v2182 = vpack.c.b16 %v2022, %v2014
        %v2183 = vpack.c.b16 %v2023, %v2015
        %v2184 = vpack.c.b16 %v2032, %v2024
        %v2185 = vpack.c.b16 %v2033, %v2025
        %v2186 = vpack.c.b16 %v2034, %v2026
        %v2187 = vpack.c.b16 %v2035, %v2027
        %v2188 = vpack.c.b16 %v2036, %v2028
        %v2189 = vpack.c.b16 %v2037, %v2029
        %v2190 = vpack.c.b16 %v2038, %v2030
        %v2191 = vpack.c.b16 %v2039, %v2031
        %v2192 = vpack.c.b16 %v2048, %v2040
        %v2193 = vpack.c.b16 %v2049, %v2041
        %v2194 = vpack.c.b16 %v2050, %v2042
        %v2195 = vpack.c.b16 %v2051, %v2043
        %v2196 = vpack.c.b16 %v2052, %v2044
        %v2197 = vpack.c.b16 %v2053, %v2045
        %v2198 = vpack.c.b16 %v2054, %v2046
        %v2199 = vpack.c.b16 %v2055, %v2047
        %v2200 = vpack.c.b16 %v2064, %v2056
        %v2201 = vpack.c.b16 %v2065, %v2057
        %v2202 = vpack.c.b16 %v2066, %v2058
        %v2203 = vpack.c.b16 %v2067, %v2059
        %v2204 = vpack.c.b16 %v2068, %v2060
        %v2205 = vpack.c.b16 %v2069, %v2061
        %v2206 = vpack.c.b16 %v2070, %v2062
        %v2207 = vpack.c.b16 %v2071, %v2063
        %v2208 = vpack.c.b16 %v2080, %v2072
        %v2209 = vpack.c.b16 %v2081, %v2073
        %v2210 = vpack.c.b16 %v2082, %v2074
        %v2211 = vpack.c.b16 %v2083, %v2075
        %v2212 = vpack.c.b16 %v2084, %v2076
        %v2213 = vpack.c.b16 %v2085, %v2077
        %v2214 = vpack.c.b16 %v2086, %v2078
        %v2215 = vpack.c.b16 %v2087, %v2079
        %v2472 = vunpack.c.l.b16 %v1441
        %v2473 = vunpack.c.l.b16 %v1442
        %v2474 = vunpack.c.l.b16 %v1443
        %v2475 = vunpack.c.l.b16 %v1444
        %v2476 = vunpack.c.l.b16 %v1445
        %v2477 = vunpack.c.l.b16 %v1446
        %v2478 = vunpack.c.l.b16 %v1447
        %v2479 = vunpack.c.l.b16 %v1448
        %v2480 = vunpack.c.l.b16 %v1449
        %v2481 = vunpack.c.l.b16 %v1450
        %v2482 = vunpack.c.l.b16 %v1451
        %v2483 = vunpack.c.l.b16 %v1452
        %v2484 = vunpack.c.l.b16 %v1453
        %v2485 = vunpack.c.l.b16 %v1454
        %v2486 = vunpack.c.l.b16 %v1455
        %v2487 = vunpack.c.l.b16 %v1456
        %v2488 = vunpack.c.l.b16 %v1457
        %v2489 = vunpack.c.l.b16 %v1458
        %v2490 = vunpack.c.l.b16 %v1459
        %v2491 = vunpack.c.l.b16 %v1460
        %v2492 = vunpack.c.l.b16 %v1461
        %v2493 = vunpack.c.l.b16 %v1462
        %v2494 = vunpack.c.l.b16 %v1463
        %v2495 = vunpack.c.l.b16 %v1464
        %v2496 = vunpack.c.l.b16 %v1465
        %v2497 = vunpack.c.l.b16 %v1466
        %v2498 = vunpack.c.l.b16 %v1467
        %v2499 = vunpack.c.l.b16 %v1468
        %v2500 = vunpack.c.l.b16 %v1469
        %v2501 = vunpack.c.l.b16 %v1470
        %v2502 = vunpack.c.l.b16 %v1471
        %v2503 = vunpack.c.l.b16 %v1472
        %v2504 = vunpack.c.l.b16 %v1473
        %v2505 = vunpack.c.l.b16 %v1474
        %v2506 = vunpack.c.l.b16 %v1475
        %v2507 = vunpack.c.l.b16 %v1476
        %v2508 = vunpack.c.l.b16 %v1477
        %v2509 = vunpack.c.l.b16 %v1478
        %v2510 = vunpack.c.l.b16 %v1479
        %v2511 = vunpack.c.l.b16 %v1480
        %v2512 = vunpack.c.l.b16 %v1481
        %v2513 = vunpack.c.l.b16 %v1482
        %v2514 = vunpack.c.l.b16 %v1483
        %v2515 = vunpack.c.l.b16 %v1484
        %v2516 = vunpack.c.l.b16 %v1485
        %v2517 = vunpack.c.l.b16 %v1486
        %v2518 = vunpack.c.l.b16 %v1487
        %v2519 = vunpack.c.l.b16 %v1488
        %v2520 = vunpack.c.l.b16 %v1489
        %v2521 = vunpack.c.l.b16 %v1490
        %v2522 = vunpack.c.l.b16 %v1491
        %v2523 = vunpack.c.l.b16 %v1492
        %v2524 = vunpack.c.l.b16 %v1493
        %v2525 = vunpack.c.l.b16 %v1494
        %v2526 = vunpack.c.l.b16 %v1495
        %v2527 = vunpack.c.l.b16 %v1496
        %v2528 = vunpack.c.l.b16 %v1497
        %v2529 = vunpack.c.l.b16 %v1498
        %v2530 = vunpack.c.l.b16 %v1499
        %v2531 = vunpack.c.l.b16 %v1500
        %v2532 = vunpack.c.l.b16 %v1501
        %v2533 = vunpack.c.l.b16 %v1502
        %v2534 = vunpack.c.l.b16 %v1503
        %v2535 = vunpack.c.l.b16 %v1504
        %v2536 = vunpack.c.l.b16 %v1505
        %v2537 = vunpack.c.l.b16 %v1506
        %v2538 = vunpack.c.l.b16 %v1507
        %v2539 = vunpack.c.l.b16 %v1508
        %v2540 = vunpack.c.l.b16 %v1509
        %v2541 = vunpack.c.l.b16 %v1510
        %v2542 = vunpack.c.l.b16 %v1511
        %v2543 = vunpack.c.l.b16 %v1512
        %v2544 = vunpack.c.l.b16 %v1513
        %v2545 = vunpack.c.l.b16 %v1514
        %v2546 = vunpack.c.l.b16 %v1515
        %v2547 = vunpack.c.l.b16 %v1516
        %v2548 = vunpack.c.l.b16 %v1517
        %v2549 = vunpack.c.l.b16 %v1518
        %v2550 = vunpack.c.l.b16 %v1519
        %v2551 = vunpack.c.l.b16 %v1520
        %v2552 = vunpack.c.l.b16 %v1521
        %v2553 = vunpack.c.l.b16 %v1522
        %v2554 = vunpack.c.l.b16 %v1523
        %v2555 = vunpack.c.l.b16 %v1524
        %v2556 = vunpack.c.l.b16 %v1525
        %v2557 = vunpack.c.l.b16 %v1526
        %v2558 = vunpack.c.l.b16 %v1527
        %v2559 = vunpack.c.l.b16 %v1528
        %v2560 = vunpack.c.l.b16 %v1529
        %v2561 = vunpack.c.l.b16 %v1530
        %v2562 = vunpack.c.l.b16 %v1531
        %v2563 = vunpack.c.l.b16 %v1532
        %v2564 = vunpack.c.l.b16 %v1533
        %v2565 = vunpack.c.l.b16 %v1534
        %v2566 = vunpack.c.l.b16 %v1535
        %v2567 = vunpack.c.l.b16 %v1536
        %v2568 = vunpack.c.l.b16 %v1537
        %v2569 = vunpack.c.l.b16 %v1538
        %v2570 = vunpack.c.l.b16 %v1539
        %v2571 = vunpack.c.l.b16 %v1540
        %v2572 = vunpack.c.l.b16 %v1541
        %v2573 = vunpack.c.l.b16 %v1542
        %v2574 = vunpack.c.l.b16 %v1543
        %v2575 = vunpack.c.l.b16 %v1544
        %v2576 = vunpack.c.l.b16 %v1545
        %v2577 = vunpack.c.l.b16 %v1546
        %v2578 = vunpack.c.l.b16 %v1547
        %v2579 = vunpack.c.l.b16 %v1548
        %v2580 = vunpack.c.l.b16 %v1549
        %v2581 = vunpack.c.l.b16 %v1550
        %v2582 = vunpack.c.l.b16 %v1551
        %v2583 = vunpack.c.l.b16 %v1552
        %v2584 = vunpack.c.l.b16 %v1553
        %v2585 = vunpack.c.l.b16 %v1554
        %v2586 = vunpack.c.l.b16 %v1555
        %v2587 = vunpack.c.l.b16 %v1556
        %v2588 = vunpack.c.l.b16 %v1557
        %v2589 = vunpack.c.l.b16 %v1558
        %v2590 = vunpack.c.l.b16 %v1559
        %v2591 = vunpack.c.l.b16 %v1560
        %v2592 = vunpack.c.l.b16 %v1561
        %v2593 = vunpack.c.l.b16 %v1562
        %v2594 = vunpack.c.l.b16 %v1563
        %v2595 = vunpack.c.l.b16 %v1564
        %v2596 = vunpack.c.l.b16 %v1565
        %v2597 = vunpack.c.l.b16 %v1566
        %v2598 = vunpack.c.l.b16 %v1567
        %v2599 = vunpack.c.l.b16 %v1568
        %v2600 = vpack.c.b16 %v2473, %v2472
        %v2601 = vpack.c.b16 %v2475, %v2474
        %v2602 = vpack.c.b16 %v2477, %v2476
        %v2603 = vpack.c.b16 %v2479, %v2478
        %v2604 = vpack.c.b16 %v2481, %v2480
        %v2605 = vpack.c.b16 %v2483, %v2482
        %v2606 = vpack.c.b16 %v2485, %v2484
        %v2607 = vpack.c.b16 %v2487, %v2486
        %v2608 = vpack.c.b16 %v2489, %v2488
        %v2609 = vpack.c.b16 %v2491, %v2490
        %v2610 = vpack.c.b16 %v2493, %v2492
        %v2611 = vpack.c.b16 %v2495, %v2494
        %v2612 = vpack.c.b16 %v2497, %v2496
        %v2613 = vpack.c.b16 %v2499, %v2498
        %v2614 = vpack.c.b16 %v2501, %v2500
        %v2615 = vpack.c.b16 %v2503, %v2502
        %v2616 = vpack.c.b16 %v2505, %v2504
        %v2617 = vpack.c.b16 %v2507, %v2506
        %v2618 = vpack.c.b16 %v2509, %v2508
        %v2619 = vpack.c.b16 %v2511, %v2510
        %v2620 = vpack.c.b16 %v2513, %v2512
        %v2621 = vpack.c.b16 %v2515, %v2514
        %v2622 = vpack.c.b16 %v2517, %v2516
        %v2623 = vpack.c.b16 %v2519, %v2518
        %v2624 = vpack.c.b16 %v2521, %v2520
        %v2625 = vpack.c.b16 %v2523, %v2522
        %v2626 = vpack.c.b16 %v2525, %v2524
        %v2627 = vpack.c.b16 %v2527, %v2526
        %v2628 = vpack.c.b16 %v2529, %v2528
        %v2629 = vpack.c.b16 %v2531, %v2530
        %v2630 = vpack.c.b16 %v2533, %v2532
        %v2631 = vpack.c.b16 %v2535, %v2534
        %v2632 = vpack.c.b16 %v2537, %v2536
        %v2633 = vpack.c.b16 %v2539, %v2538
        %v2634 = vpack.c.b16 %v2541, %v2540
        %v2635 = vpack.c.b16 %v2543, %v2542
        %v2636 = vpack.c.b16 %v2545, %v2544
        %v2637 = vpack.c.b16 %v2547, %v2546
        %v2638 = vpack.c.b16 %v2549, %v2548
        %v2639 = vpack.c.b16 %v2551, %v2550
        %v2640 = vpack.c.b16 %v2553, %v2552
        %v2641 = vpack.c.b16 %v2555, %v2554
        %v2642 = vpack.c.b16 %v2557, %v2556
        %v2643 = vpack.c.b16 %v2559, %v2558
        %v2644 = vpack.c.b16 %v2561, %v2560
        %v2645 = vpack.c.b16 %v2563, %v2562
        %v2646 = vpack.c.b16 %v2565, %v2564
        %v2647 = vpack.c.b16 %v2567, %v2566
        %v2648 = vpack.c.b16 %v2569, %v2568
        %v2649 = vpack.c.b16 %v2571, %v2570
        %v2650 = vpack.c.b16 %v2573, %v2572
        %v2651 = vpack.c.b16 %v2575, %v2574
        %v2652 = vpack.c.b16 %v2577, %v2576
        %v2653 = vpack.c.b16 %v2579, %v2578
        %v2654 = vpack.c.b16 %v2581, %v2580
        %v2655 = vpack.c.b16 %v2583, %v2582
        %v2656 = vpack.c.b16 %v2585, %v2584
        %v2657 = vpack.c.b16 %v2587, %v2586
        %v2658 = vpack.c.b16 %v2589, %v2588
        %v2659 = vpack.c.b16 %v2591, %v2590
        %v2660 = vpack.c.b16 %v2593, %v2592
        %v2661 = vpack.c.b16 %v2595, %v2594
        %v2662 = vpack.c.b16 %v2597, %v2596
        %v2663 = vpack.c.b16 %v2599, %v2598
        %2728 = vmatprep.subr.bf16.mxu0 0
        %2729 = vmatpush1.bf16.msra.mxu0 %v2600
        %2730 = vmatprep.subr.bf16.mxu0 0
        %2731 = vmatpush1.bf16.msra.mxu0 %v2601
        %2732 = vmatprep.subr.bf16.mxu0 0
        %2733 = vmatpush1.bf16.msra.mxu0 %v2602
        %2734 = vmatprep.subr.bf16.mxu0 0
        %2735 = vmatpush1.bf16.msra.mxu0 %v2603
        %2736 = vmatprep.subr.bf16.mxu0 0
        %2737 = vmatpush1.bf16.msra.mxu0 %v2604
        %2738 = vmatprep.subr.bf16.mxu0 0
        %2739 = vmatpush1.bf16.msra.mxu0 %v2605
        %2740 = vmatprep.subr.bf16.mxu0 0
        %2741 = vmatpush1.bf16.msra.mxu0 %v2606
        %2742 = vmatprep.subr.bf16.mxu0 0
        %2743 = vmatpush1.bf16.msra.mxu0 %v2607
        %2744 = vmatprep.subr.bf16.mxu0 0
        %2745 = vmatpush1.bf16.msra.mxu0 %v2608
        %2746 = vmatprep.subr.bf16.mxu0 0
        %2747 = vmatpush1.bf16.msra.mxu0 %v2609
        %2748 = vmatprep.subr.bf16.mxu0 0
        %2749 = vmatpush1.bf16.msra.mxu0 %v2610
        %2750 = vmatprep.subr.bf16.mxu0 0
        %2751 = vmatpush1.bf16.msra.mxu0 %v2611
        %2752 = vmatprep.subr.bf16.mxu0 0
        %2753 = vmatpush1.bf16.msra.mxu0 %v2612
        %2754 = vmatprep.subr.bf16.mxu0 0
        %2755 = vmatpush1.bf16.msra.mxu0 %v2613
        %2756 = vmatprep.subr.bf16.mxu0 0
        %2757 = vmatpush1.bf16.msra.mxu0 %v2614
        %2758 = vmatprep.subr.bf16.mxu0 0
        %2759 = vmatpush1.bf16.msra.mxu0 %v2615
        %2760 = vmatprep.mubr.bf16.mxu0 %v2089
        %2761 = vmatmul.mubr.bf16.gmra.mrb[0].mxu0 %v2088
        %v2762 = vpop.f32.mrb[0].mxu0
        %v2763 = vadd.f32 %v1702, %v2762
        %v2764 = vpop.f32.mrb[0].mxu0
        %v2765 = vpop.f32.mrb[0].mxu0
        %v2766 = vadd.f32 %v1702, %v2765
        %v2767 = vpop.f32.mrb[0].mxu0
        %2768 = vmatprep.mubr.bf16.mxu0 %v2097
        %2769 = vmatmul.mubr.bf16.gmra.mrb[0].mxu0 %v2096
        %v2770 = vpop.f32.mrb[0].mxu0
        %v2771 = vadd.f32 %v1702, %v2770
        %v2772 = vpop.f32.mrb[0].mxu0
        %v2773 = vpop.f32.mrb[0].mxu0
        %v2774 = vadd.f32 %v1702, %v2773
        %v2775 = vpop.f32.mrb[0].mxu0
        %2776 = vmatprep.mubr.bf16.mxu0 %v2105
        %2777 = vmatmul.mubr.bf16.gmra.mrb[0].mxu0 %v2104
        %v2778 = vpop.f32.mrb[0].mxu0
        %v2779 = vadd.f32 %v1702, %v2778
        %v2780 = vpop.f32.mrb[0].mxu0
        %v2781 = vpop.f32.mrb[0].mxu0
        %v2782 = vadd.f32 %v1702, %v2781
        %v2783 = vpop.f32.mrb[0].mxu0
        %2784 = vmatprep.mubr.bf16.mxu0 %v2113
        %2785 = vmatmul.mubr.bf16.gmra.mrb[0].mxu0 %v2112
        %v2786 = vpop.f32.mrb[0].mxu0
        %v2787 = vadd.f32 %v1702, %v2786
        %v2788 = vpop.f32.mrb[0].mxu0
        %v2789 = vpop.f32.mrb[0].mxu0
        %v2790 = vadd.f32 %v1702, %v2789
        %v2791 = vpop.f32.mrb[0].mxu0
        %2792 = vmatprep.mubr.bf16.mxu0 %v2121
        %2793 = vmatmul.mubr.bf16.gmra.mrb[0].mxu0 %v2120
        %v2794 = vpop.f32.mrb[0].mxu0
        %v2795 = vadd.f32 %v1702, %v2794
        %v2796 = vpop.f32.mrb[0].mxu0
        %v2797 = vpop.f32.mrb[0].mxu0
        %v2798 = vadd.f32 %v1702, %v2797
        %v2799 = vpop.f32.mrb[0].mxu0
        %2800 = vmatprep.mubr.bf16.mxu0 %v2129
        %2801 = vmatmul.mubr.bf16.gmra.mrb[0].mxu0 %v2128
        %v2802 = vpop.f32.mrb[0].mxu0
        %v2803 = vadd.f32 %v1702, %v2802
        %v2804 = vpop.f32.mrb[0].mxu0
        %v2805 = vpop.f32.mrb[0].mxu0
        %v2806 = vadd.f32 %v1702, %v2805
        %v2807 = vpop.f32.mrb[0].mxu0
        %2808 = vmatprep.mubr.bf16.mxu0 %v2137
        %2809 = vmatmul.mubr.bf16.gmra.mrb[0].mxu0 %v2136
        %v2810 = vpop.f32.mrb[0].mxu0
        %v2811 = vadd.f32 %v1702, %v2810
        %v2812 = vpop.f32.mrb[0].mxu0
        %v2813 = vpop.f32.mrb[0].mxu0
        %v2814 = vadd.f32 %v1702, %v2813
        %v2815 = vpop.f32.mrb[0].mxu0
        %2816 = vmatprep.mubr.bf16.mxu0 %v2145
        %2817 = vmatmul.mubr.bf16.gmra.mrb[0].mxu0 %v2144
        %v2818 = vpop.f32.mrb[0].mxu0
        %v2819 = vadd.f32 %v1702, %v2818
        %v2820 = vpop.f32.mrb[0].mxu0
        %v2821 = vpop.f32.mrb[0].mxu0
        %v2822 = vadd.f32 %v1702, %v2821
        %v2823 = vpop.f32.mrb[0].mxu0
        %2824 = vmatprep.mubr.bf16.mxu0 %v2153
        %2825 = vmatmul.mubr.bf16.gmra.mrb[0].mxu0 %v2152
        %v2826 = vpop.f32.mrb[0].mxu0
        %v2827 = vadd.f32 %v1702, %v2826
        %v2828 = vpop.f32.mrb[0].mxu0
        %v2829 = vpop.f32.mrb[0].mxu0
        %v2830 = vadd.f32 %v1702, %v2829
        %v2831 = vpop.f32.mrb[0].mxu0
        %2832 = vmatprep.mubr.bf16.mxu0 %v2161
        %2833 = vmatmul.mubr.bf16.gmra.mrb[0].mxu0 %v2160
        %v2834 = vpop.f32.mrb[0].mxu0
        %v2835 = vadd.f32 %v1702, %v2834
        %v2836 = vpop.f32.mrb[0].mxu0
        %v2837 = vpop.f32.mrb[0].mxu0
        %v2838 = vadd.f32 %v1702, %v2837
        %v2839 = vpop.f32.mrb[0].mxu0
        %2840 = vmatprep.mubr.bf16.mxu0 %v2169
        %2841 = vmatmul.mubr.bf16.gmra.mrb[0].mxu0 %v2168
        %v2842 = vpop.f32.mrb[0].mxu0
        %v2843 = vadd.f32 %v1702, %v2842
        %v2844 = vpop.f32.mrb[0].mxu0
        %v2845 = vpop.f32.mrb[0].mxu0
        %v2846 = vadd.f32 %v1702, %v2845
        %v2847 = vpop.f32.mrb[0].mxu0
        %2848 = vmatprep.mubr.bf16.mxu0 %v2177
        %2849 = vmatmul.mubr.bf16.gmra.mrb[0].mxu0 %v2176
        %v2850 = vpop.f32.mrb[0].mxu0
        %v2851 = vadd.f32 %v1702, %v2850
        %v2852 = vpop.f32.mrb[0].mxu0
        %v2853 = vpop.f32.mrb[0].mxu0
        %v2854 = vadd.f32 %v1702, %v2853
        %v2855 = vpop.f32.mrb[0].mxu0
        %2856 = vmatprep.mubr.bf16.mxu0 %v2185
        %2857 = vmatmul.mubr.bf16.gmra.mrb[0].mxu0 %v2184
        %v2858 = vpop.f32.mrb[0].mxu0
        %v2859 = vadd.f32 %v1702, %v2858
        %v2860 = vpop.f32.mrb[0].mxu0
        %v2861 = vpop.f32.mrb[0].mxu0
        %v2862 = vadd.f32 %v1702, %v2861
        %v2863 = vpop.f32.mrb[0].mxu0
        %2864 = vmatprep.mubr.bf16.mxu0 %v2193
        %2865 = vmatmul.mubr.bf16.gmra.mrb[0].mxu0 %v2192
        %v2866 = vpop.f32.mrb[0].mxu0
        %v2867 = vadd.f32 %v1702, %v2866
        %v2868 = vpop.f32.mrb[0].mxu0
        %v2869 = vpop.f32.mrb[0].mxu0
        %v2870 = vadd.f32 %v1702, %v2869
        %v2871 = vpop.f32.mrb[0].mxu0
        %2872 = vmatprep.mubr.bf16.mxu0 %v2201
        %2873 = vmatmul.mubr.bf16.gmra.mrb[0].mxu0 %v2200
        %v2874 = vpop.f32.mrb[0].mxu0
        %v2875 = vadd.f32 %v1702, %v2874
        %v2876 = vpop.f32.mrb[0].mxu0
        %v2877 = vpop.f32.mrb[0].mxu0
        %v2878 = vadd.f32 %v1702, %v2877
        %v2879 = vpop.f32.mrb[0].mxu0
        %2880 = vmatprep.mubr.bf16.mxu0 %v2209
        %2881 = vmatmul.mubr.bf16.gmra.mrb[0].mxu0 %v2208
        %v2882 = vpop.f32.mrb[0].mxu0
        %v2883 = vadd.f32 %v1702, %v2882
        %v2884 = vpop.f32.mrb[0].mxu0
        %v2885 = vpop.f32.mrb[0].mxu0
        %v2886 = vadd.f32 %v1702, %v2885
        %v2887 = vpop.f32.mrb[0].mxu0
        %2888 = vdwg.mxu0
        %2889 = vmatprep.subr.bf16.mxu0 0
        %2890 = vmatpush1.bf16.msra.mxu0 %v2616
        %2891 = vmatprep.subr.bf16.mxu0 0
        %2892 = vmatpush1.bf16.msra.mxu0 %v2617
        %2893 = vmatprep.subr.bf16.mxu0 0
        %2894 = vmatpush1.bf16.msra.mxu0 %v2618
        %2895 = vmatprep.subr.bf16.mxu0 0
        %2896 = vmatpush1.bf16.msra.mxu0 %v2619
        %2897 = vmatprep.subr.bf16.mxu0 0
        %2898 = vmatpush1.bf16.msra.mxu0 %v2620
        %2899 = vmatprep.subr.bf16.mxu0 0
        %2900 = vmatpush1.bf16.msra.mxu0 %v2621
        %2901 = vmatprep.subr.bf16.mxu0 0
        %2902 = vmatpush1.bf16.msra.mxu0 %v2622
        %2903 = vmatprep.subr.bf16.mxu0 0
        %2904 = vmatpush1.bf16.msra.mxu0 %v2623
        %2905 = vmatprep.subr.bf16.mxu0 0
        %2906 = vmatpush1.bf16.msra.mxu0 %v2624
        %2907 = vmatprep.subr.bf16.mxu0 0
        %2908 = vmatpush1.bf16.msra.mxu0 %v2625
        %2909 = vmatprep.subr.bf16.mxu0 0
        %2910 = vmatpush1.bf16.msra.mxu0 %v2626
        %2911 = vmatprep.subr.bf16.mxu0 0
        %2912 = vmatpush1.bf16.msra.mxu0 %v2627
        %2913 = vmatprep.subr.bf16.mxu0 0
        %2914 = vmatpush1.bf16.msra.mxu0 %v2628
        %2915 = vmatprep.subr.bf16.mxu0 0
        %2916 = vmatpush1.bf16.msra.mxu0 %v2629
        %2917 = vmatprep.subr.bf16.mxu0 0
        %2918 = vmatpush1.bf16.msra.mxu0 %v2630
        %2919 = vmatprep.subr.bf16.mxu0 0
        %2920 = vmatpush1.bf16.msra.mxu0 %v2631
        %2921 = vmatprep.mubr.bf16.mxu0 %v2091
        %2922 = vmatmul.mubr.bf16.gmra.mrb[0].mxu0 %v2090
        %v2923 = vpop.f32.mrb[0].mxu0
        %v2924 = vadd.f32 %v2763, %v2923
        %v2925 = vpop.f32.mrb[0].mxu0
        %v2926 = vpop.f32.mrb[0].mxu0
        %v2927 = vadd.f32 %v2766, %v2926
        %v2928 = vpop.f32.mrb[0].mxu0
        %2929 = vmatprep.mubr.bf16.mxu0 %v2099
        %2930 = vmatmul.mubr.bf16.gmra.mrb[0].mxu0 %v2098
        %v2931 = vpop.f32.mrb[0].mxu0
        %v2932 = vadd.f32 %v2771, %v2931
        %v2933 = vpop.f32.mrb[0].mxu0
        %v2934 = vpop.f32.mrb[0].mxu0
        %v2935 = vadd.f32 %v2774, %v2934
        %v2936 = vpop.f32.mrb[0].mxu0
        %2937 = vmatprep.mubr.bf16.mxu0 %v2107
        %2938 = vmatmul.mubr.bf16.gmra.mrb[0].mxu0 %v2106
        %v2939 = vpop.f32.mrb[0].mxu0
        %v2940 = vadd.f32 %v2779, %v2939
        %v2941 = vpop.f32.mrb[0].mxu0
        %v2942 = vpop.f32.mrb[0].mxu0
        %v2943 = vadd.f32 %v2782, %v2942
        %v2944 = vpop.f32.mrb[0].mxu0
        %2945 = vmatprep.mubr.bf16.mxu0 %v2115
        %2946 = vmatmul.mubr.bf16.gmra.mrb[0].mxu0 %v2114
        %v2947 = vpop.f32.mrb[0].mxu0
        %v2948 = vadd.f32 %v2787, %v2947
        %v2949 = vpop.f32.mrb[0].mxu0
        %v2950 = vpop.f32.mrb[0].mxu0
        %v2951 = vadd.f32 %v2790, %v2950
        %v2952 = vpop.f32.mrb[0].mxu0
        %2953 = vmatprep.mubr.bf16.mxu0 %v2123
        %2954 = vmatmul.mubr.bf16.gmra.mrb[0].mxu0 %v2122
        %v2955 = vpop.f32.mrb[0].mxu0
        %v2956 = vadd.f32 %v2795, %v2955
        %v2957 = vpop.f32.mrb[0].mxu0
        %v2958 = vpop.f32.mrb[0].mxu0
        %v2959 = vadd.f32 %v2798, %v2958
        %v2960 = vpop.f32.mrb[0].mxu0
        %2961 = vmatprep.mubr.bf16.mxu0 %v2131
        %2962 = vmatmul.mubr.bf16.gmra.mrb[0].mxu0 %v2130
        %v2963 = vpop.f32.mrb[0].mxu0
        %v2964 = vadd.f32 %v2803, %v2963
        %v2965 = vpop.f32.mrb[0].mxu0
        %v2966 = vpop.f32.mrb[0].mxu0
        %v2967 = vadd.f32 %v2806, %v2966
        %v2968 = vpop.f32.mrb[0].mxu0
        %2969 = vmatprep.mubr.bf16.mxu0 %v2139
        %2970 = vmatmul.mubr.bf16.gmra.mrb[0].mxu0 %v2138
        %v2971 = vpop.f32.mrb[0].mxu0
        %v2972 = vadd.f32 %v2811, %v2971
        %v2973 = vpop.f32.mrb[0].mxu0
        %v2974 = vpop.f32.mrb[0].mxu0
        %v2975 = vadd.f32 %v2814, %v2974
        %v2976 = vpop.f32.mrb[0].mxu0
        %2977 = vmatprep.mubr.bf16.mxu0 %v2147
        %2978 = vmatmul.mubr.bf16.gmra.mrb[0].mxu0 %v2146
        %v2979 = vpop.f32.mrb[0].mxu0
        %v2980 = vadd.f32 %v2819, %v2979
        %v2981 = vpop.f32.mrb[0].mxu0
        %v2982 = vpop.f32.mrb[0].mxu0
        %v2983 = vadd.f32 %v2822, %v2982
        %v2984 = vpop.f32.mrb[0].mxu0
        %2985 = vmatprep.mubr.bf16.mxu0 %v2155
        %2986 = vmatmul.mubr.bf16.gmra.mrb[0].mxu0 %v2154
        %v2987 = vpop.f32.mrb[0].mxu0
        %v2988 = vadd.f32 %v2827, %v2987
        %v2989 = vpop.f32.mrb[0].mxu0
        %v2990 = vpop.f32.mrb[0].mxu0
        %v2991 = vadd.f32 %v2830, %v2990
        %v2992 = vpop.f32.mrb[0].mxu0
        %2993 = vmatprep.mubr.bf16.mxu0 %v2163
        %2994 = vmatmul.mubr.bf16.gmra.mrb[0].mxu0 %v2162
        %v2995 = vpop.f32.mrb[0].mxu0
        %v2996 = vadd.f32 %v2835, %v2995
        %v2997 = vpop.f32.mrb[0].mxu0
        %v2998 = vpop.f32.mrb[0].mxu0
        %v2999 = vadd.f32 %v2838, %v2998
        %v3000 = vpop.f32.mrb[0].mxu0
        %3001 = vmatprep.mubr.bf16.mxu0 %v2171
        %3002 = vmatmul.mubr.bf16.gmra.mrb[0].mxu0 %v2170
        %v3003 = vpop.f32.mrb[0].mxu0
        %v3004 = vadd.f32 %v2843, %v3003
        %v3005 = vpop.f32.mrb[0].mxu0
        %v3006 = vpop.f32.mrb[0].mxu0
        %v3007 = vadd.f32 %v2846, %v3006
        %v3008 = vpop.f32.mrb[0].mxu0
        %3009 = vmatprep.mubr.bf16.mxu0 %v2179
        %3010 = vmatmul.mubr.bf16.gmra.mrb[0].mxu0 %v2178
        %v3011 = vpop.f32.mrb[0].mxu0
        %v3012 = vadd.f32 %v2851, %v3011
        %v3013 = vpop.f32.mrb[0].mxu0
        %v3014 = vpop.f32.mrb[0].mxu0
        %v3015 = vadd.f32 %v2854, %v3014
        %v3016 = vpop.f32.mrb[0].mxu0
        %3017 = vmatprep.mubr.bf16.mxu0 %v2187
        %3018 = vmatmul.mubr.bf16.gmra.mrb[0].mxu0 %v2186
        %v3019 = vpop.f32.mrb[0].mxu0
        %v3020 = vadd.f32 %v2859, %v3019
        %v3021 = vpop.f32.mrb[0].mxu0
        %v3022 = vpop.f32.mrb[0].mxu0
        %v3023 = vadd.f32 %v2862, %v3022
        %v3024 = vpop.f32.mrb[0].mxu0
        %3025 = vmatprep.mubr.bf16.mxu0 %v2195
        %3026 = vmatmul.mubr.bf16.gmra.mrb[0].mxu0 %v2194
        %v3027 = vpop.f32.mrb[0].mxu0
        %v3028 = vadd.f32 %v2867, %v3027
        %v3029 = vpop.f32.mrb[0].mxu0
        %v3030 = vpop.f32.mrb[0].mxu0
        %v3031 = vadd.f32 %v2870, %v3030
        %v3032 = vpop.f32.mrb[0].mxu0
        %3033 = vmatprep.mubr.bf16.mxu0 %v2203
        %3034 = vmatmul.mubr.bf16.gmra.mrb[0].mxu0 %v2202
        %v3035 = vpop.f32.mrb[0].mxu0
        %v3036 = vadd.f32 %v2875, %v3035
        %v3037 = vpop.f32.mrb[0].mxu0
        %v3038 = vpop.f32.mrb[0].mxu0
        %v3039 = vadd.f32 %v2878, %v3038
        %v3040 = vpop.f32.mrb[0].mxu0
        %3041 = vmatprep.mubr.bf16.mxu0 %v2211
        %3042 = vmatmul.mubr.bf16.gmra.mrb[0].mxu0 %v2210
        %v3043 = vpop.f32.mrb[0].mxu0
        %v3044 = vadd.f32 %v2883, %v3043
        %v3045 = vpop.f32.mrb[0].mxu0
        %v3046 = vpop.f32.mrb[0].mxu0
        %v3047 = vadd.f32 %v2886, %v3046
        %v3048 = vpop.f32.mrb[0].mxu0
        %3049 = vdwg.mxu0
        %3050 = vmatprep.subr.bf16.mxu0 0
        %3051 = vmatpush1.bf16.msra.mxu0 %v2632
        %3052 = vmatprep.subr.bf16.mxu0 0
        %3053 = vmatpush1.bf16.msra.mxu0 %v2633
        %3054 = vmatprep.subr.bf16.mxu0 0
        %3055 = vmatpush1.bf16.msra.mxu0 %v2634
        %3056 = vmatprep.subr.bf16.mxu0 0
        %3057 = vmatpush1.bf16.msra.mxu0 %v2635
        %3058 = vmatprep.subr.bf16.mxu0 0
        %3059 = vmatpush1.bf16.msra.mxu0 %v2636
        %3060 = vmatprep.subr.bf16.mxu0 0
        %3061 = vmatpush1.bf16.msra.mxu0 %v2637
        %3062 = vmatprep.subr.bf16.mxu0 0
        %3063 = vmatpush1.bf16.msra.mxu0 %v2638
        %3064 = vmatprep.subr.bf16.mxu0 0
        %3065 = vmatpush1.bf16.msra.mxu0 %v2639
        %3066 = vmatprep.subr.bf16.mxu0 0
        %3067 = vmatpush1.bf16.msra.mxu0 %v2640
        %3068 = vmatprep.subr.bf16.mxu0 0
        %3069 = vmatpush1.bf16.msra.mxu0 %v2641
        %3070 = vmatprep.subr.bf16.mxu0 0
        %3071 = vmatpush1.bf16.msra.mxu0 %v2642
        %3072 = vmatprep.subr.bf16.mxu0 0
        %3073 = vmatpush1.bf16.msra.mxu0 %v2643
        %3074 = vmatprep.subr.bf16.mxu0 0
        %3075 = vmatpush1.bf16.msra.mxu0 %v2644
        %3076 = vmatprep.subr.bf16.mxu0 0
        %3077 = vmatpush1.bf16.msra.mxu0 %v2645
        %3078 = vmatprep.subr.bf16.mxu0 0
        %3079 = vmatpush1.bf16.msra.mxu0 %v2646
        %3080 = vmatprep.subr.bf16.mxu0 0
        %3081 = vmatpush1.bf16.msra.mxu0 %v2647
        %3082 = vmatprep.mubr.bf16.mxu0 %v2093
        %3083 = vmatmul.mubr.bf16.gmra.mrb[0].mxu0 %v2092
        %v3084 = vpop.f32.mrb[0].mxu0
        %v3085 = vadd.f32 %v2924, %v3084
        %v3086 = vpop.f32.mrb[0].mxu0
        %v3087 = vpop.f32.mrb[0].mxu0
        %v3088 = vadd.f32 %v2927, %v3087
        %v3089 = vpop.f32.mrb[0].mxu0
        %3090 = vmatprep.mubr.bf16.mxu0 %v2101
        %3091 = vmatmul.mubr.bf16.gmra.mrb[0].mxu0 %v2100
        %v3092 = vpop.f32.mrb[0].mxu0
        %v3093 = vadd.f32 %v2932, %v3092
        %v3094 = vpop.f32.mrb[0].mxu0
        %v3095 = vpop.f32.mrb[0].mxu0
        %v3096 = vadd.f32 %v2935, %v3095
        %v3097 = vpop.f32.mrb[0].mxu0
        %3098 = vmatprep.mubr.bf16.mxu0 %v2109
        %3099 = vmatmul.mubr.bf16.gmra.mrb[0].mxu0 %v2108
        %v3100 = vpop.f32.mrb[0].mxu0
        %v3101 = vadd.f32 %v2940, %v3100
        %v3102 = vpop.f32.mrb[0].mxu0
        %v3103 = vpop.f32.mrb[0].mxu0
        %v3104 = vadd.f32 %v2943, %v3103
        %v3105 = vpop.f32.mrb[0].mxu0
        %3106 = vmatprep.mubr.bf16.mxu0 %v2117
        %3107 = vmatmul.mubr.bf16.gmra.mrb[0].mxu0 %v2116
        %v3108 = vpop.f32.mrb[0].mxu0
        %v3109 = vadd.f32 %v2948, %v3108
        %v3110 = vpop.f32.mrb[0].mxu0
        %v3111 = vpop.f32.mrb[0].mxu0
        %v3112 = vadd.f32 %v2951, %v3111
        %v3113 = vpop.f32.mrb[0].mxu0
        %3114 = vmatprep.mubr.bf16.mxu0 %v2125
        %3115 = vmatmul.mubr.bf16.gmra.mrb[0].mxu0 %v2124
        %v3116 = vpop.f32.mrb[0].mxu0
        %v3117 = vadd.f32 %v2956, %v3116
        %v3118 = vpop.f32.mrb[0].mxu0
        %v3119 = vpop.f32.mrb[0].mxu0
        %v3120 = vadd.f32 %v2959, %v3119
        %v3121 = vpop.f32.mrb[0].mxu0
        %3122 = vmatprep.mubr.bf16.mxu0 %v2133
        %3123 = vmatmul.mubr.bf16.gmra.mrb[0].mxu0 %v2132
        %v3124 = vpop.f32.mrb[0].mxu0
        %v3125 = vadd.f32 %v2964, %v3124
        %v3126 = vpop.f32.mrb[0].mxu0
        %v3127 = vpop.f32.mrb[0].mxu0
        %v3128 = vadd.f32 %v2967, %v3127
        %v3129 = vpop.f32.mrb[0].mxu0
        %3130 = vmatprep.mubr.bf16.mxu0 %v2141
        %3131 = vmatmul.mubr.bf16.gmra.mrb[0].mxu0 %v2140
        %v3132 = vpop.f32.mrb[0].mxu0
        %v3133 = vadd.f32 %v2972, %v3132
        %v3134 = vpop.f32.mrb[0].mxu0
        %v3135 = vpop.f32.mrb[0].mxu0
        %v3136 = vadd.f32 %v2975, %v3135
        %v3137 = vpop.f32.mrb[0].mxu0
        %3138 = vmatprep.mubr.bf16.mxu0 %v2149
        %3139 = vmatmul.mubr.bf16.gmra.mrb[0].mxu0 %v2148
        %v3140 = vpop.f32.mrb[0].mxu0
        %v3141 = vadd.f32 %v2980, %v3140
        %v3142 = vpop.f32.mrb[0].mxu0
        %v3143 = vpop.f32.mrb[0].mxu0
        %v3144 = vadd.f32 %v2983, %v3143
        %v3145 = vpop.f32.mrb[0].mxu0
        %3146 = vmatprep.mubr.bf16.mxu0 %v2157
        %3147 = vmatmul.mubr.bf16.gmra.mrb[0].mxu0 %v2156
        %v3148 = vpop.f32.mrb[0].mxu0
        %v3149 = vadd.f32 %v2988, %v3148
        %v3150 = vpop.f32.mrb[0].mxu0
        %v3151 = vpop.f32.mrb[0].mxu0
        %v3152 = vadd.f32 %v2991, %v3151
        %v3153 = vpop.f32.mrb[0].mxu0
        %3154 = vmatprep.mubr.bf16.mxu0 %v2165
        %3155 = vmatmul.mubr.bf16.gmra.mrb[0].mxu0 %v2164
        %v3156 = vpop.f32.mrb[0].mxu0
        %v3157 = vadd.f32 %v2996, %v3156
        %v3158 = vpop.f32.mrb[0].mxu0
        %v3159 = vpop.f32.mrb[0].mxu0
        %v3160 = vadd.f32 %v2999, %v3159
        %v3161 = vpop.f32.mrb[0].mxu0
        %3162 = vmatprep.mubr.bf16.mxu0 %v2173
        %3163 = vmatmul.mubr.bf16.gmra.mrb[0].mxu0 %v2172
        %v3164 = vpop.f32.mrb[0].mxu0
        %v3165 = vadd.f32 %v3004, %v3164
        %v3166 = vpop.f32.mrb[0].mxu0
        %v3167 = vpop.f32.mrb[0].mxu0
        %v3168 = vadd.f32 %v3007, %v3167
        %v3169 = vpop.f32.mrb[0].mxu0
        %3170 = vmatprep.mubr.bf16.mxu0 %v2181
        %3171 = vmatmul.mubr.bf16.gmra.mrb[0].mxu0 %v2180
        %v3172 = vpop.f32.mrb[0].mxu0
        %v3173 = vadd.f32 %v3012, %v3172
        %v3174 = vpop.f32.mrb[0].mxu0
        %v3175 = vpop.f32.mrb[0].mxu0
        %v3176 = vadd.f32 %v3015, %v3175
        %v3177 = vpop.f32.mrb[0].mxu0
        %3178 = vmatprep.mubr.bf16.mxu0 %v2189
        %3179 = vmatmul.mubr.bf16.gmra.mrb[0].mxu0 %v2188
        %v3180 = vpop.f32.mrb[0].mxu0
        %v3181 = vadd.f32 %v3020, %v3180
        %v3182 = vpop.f32.mrb[0].mxu0
        %v3183 = vpop.f32.mrb[0].mxu0
        %v3184 = vadd.f32 %v3023, %v3183
        %v3185 = vpop.f32.mrb[0].mxu0
        %3186 = vmatprep.mubr.bf16.mxu0 %v2197
        %3187 = vmatmul.mubr.bf16.gmra.mrb[0].mxu0 %v2196
        %v3188 = vpop.f32.mrb[0].mxu0
        %v3189 = vadd.f32 %v3028, %v3188
        %v3190 = vpop.f32.mrb[0].mxu0
        %v3191 = vpop.f32.mrb[0].mxu0
        %v3192 = vadd.f32 %v3031, %v3191
        %v3193 = vpop.f32.mrb[0].mxu0
        %3194 = vmatprep.mubr.bf16.mxu0 %v2205
        %3195 = vmatmul.mubr.bf16.gmra.mrb[0].mxu0 %v2204
        %v3196 = vpop.f32.mrb[0].mxu0
        %v3197 = vadd.f32 %v3036, %v3196
        %v3198 = vpop.f32.mrb[0].mxu0
        %v3199 = vpop.f32.mrb[0].mxu0
        %v3200 = vadd.f32 %v3039, %v3199
        %v3201 = vpop.f32.mrb[0].mxu0
        %3202 = vmatprep.mubr.bf16.mxu0 %v2213
        %3203 = vmatmul.mubr.bf16.gmra.mrb[0].mxu0 %v2212
        %v3204 = vpop.f32.mrb[0].mxu0
        %v3205 = vadd.f32 %v3044, %v3204
        %v3206 = vpop.f32.mrb[0].mxu0
        %v3207 = vpop.f32.mrb[0].mxu0
        %v3208 = vadd.f32 %v3047, %v3207
        %v3209 = vpop.f32.mrb[0].mxu0
        %3210 = vdwg.mxu0
        %3211 = vmatprep.subr.bf16.mxu0 0
        %3212 = vmatpush1.bf16.msra.mxu0 %v2648
        %3213 = vmatprep.subr.bf16.mxu0 0
        %3214 = vmatpush1.bf16.msra.mxu0 %v2649
        %3215 = vmatprep.subr.bf16.mxu0 0
        %3216 = vmatpush1.bf16.msra.mxu0 %v2650
        %3217 = vmatprep.subr.bf16.mxu0 0
        %3218 = vmatpush1.bf16.msra.mxu0 %v2651
        %3219 = vmatprep.subr.bf16.mxu0 0
        %3220 = vmatpush1.bf16.msra.mxu0 %v2652
        %3221 = vmatprep.subr.bf16.mxu0 0
        %3222 = vmatpush1.bf16.msra.mxu0 %v2653
        %3223 = vmatprep.subr.bf16.mxu0 0
        %3224 = vmatpush1.bf16.msra.mxu0 %v2654
        %3225 = vmatprep.subr.bf16.mxu0 0
        %3226 = vmatpush1.bf16.msra.mxu0 %v2655
        %3227 = vmatprep.subr.bf16.mxu0 0
        %3228 = vmatpush1.bf16.msra.mxu0 %v2656
        %3229 = vmatprep.subr.bf16.mxu0 0
        %3230 = vmatpush1.bf16.msra.mxu0 %v2657
        %3231 = vmatprep.subr.bf16.mxu0 0
        %3232 = vmatpush1.bf16.msra.mxu0 %v2658
        %3233 = vmatprep.subr.bf16.mxu0 0
        %3234 = vmatpush1.bf16.msra.mxu0 %v2659
        %3235 = vmatprep.subr.bf16.mxu0 0
        %3236 = vmatpush1.bf16.msra.mxu0 %v2660
        %3237 = vmatprep.subr.bf16.mxu0 0
        %3238 = vmatpush1.bf16.msra.mxu0 %v2661
        %3239 = vmatprep.subr.bf16.mxu0 0
        %3240 = vmatpush1.bf16.msra.mxu0 %v2662
        %3241 = vmatprep.subr.bf16.mxu0 0
        %3242 = vmatpush1.bf16.msra.mxu0 %v2663
        %3243 = vmatprep.mubr.bf16.mxu0 %v2095
        %3244 = vmatmul.mubr.bf16.gmra.mrb[0].mxu0 %v2094
        %v3245 = vpop.f32.mrb[0].mxu0
        %v3246 = vadd.f32 %v3085, %v3245
        %v3247 = vpop.f32.mrb[0].mxu0
        %v3248 = vpop.f32.mrb[0].mxu0
        %v3249 = vadd.f32 %v3088, %v3248
        %v3250 = vpop.f32.mrb[0].mxu0
        %3251 = vmatprep.mubr.bf16.mxu0 %v2103
        %3252 = vmatmul.mubr.bf16.gmra.mrb[0].mxu0 %v2102
        %v3253 = vpop.f32.mrb[0].mxu0
        %v3254 = vadd.f32 %v3093, %v3253
        %v3255 = vpop.f32.mrb[0].mxu0
        %v3256 = vpop.f32.mrb[0].mxu0
        %v3257 = vadd.f32 %v3096, %v3256
        %v3258 = vpop.f32.mrb[0].mxu0
        %3259 = vmatprep.mubr.bf16.mxu0 %v2111
        %3260 = vmatmul.mubr.bf16.gmra.mrb[0].mxu0 %v2110
        %v3261 = vpop.f32.mrb[0].mxu0
        %v3262 = vadd.f32 %v3101, %v3261
        %v3263 = vpop.f32.mrb[0].mxu0
        %v3264 = vpop.f32.mrb[0].mxu0
        %v3265 = vadd.f32 %v3104, %v3264
        %v3266 = vpop.f32.mrb[0].mxu0
        %3267 = vmatprep.mubr.bf16.mxu0 %v2119
        %3268 = vmatmul.mubr.bf16.gmra.mrb[0].mxu0 %v2118
        %v3269 = vpop.f32.mrb[0].mxu0
        %v3270 = vadd.f32 %v3109, %v3269
        %v3271 = vpop.f32.mrb[0].mxu0
        %v3272 = vpop.f32.mrb[0].mxu0
        %v3273 = vadd.f32 %v3112, %v3272
        %v3274 = vpop.f32.mrb[0].mxu0
        %3275 = vmatprep.mubr.bf16.mxu0 %v2127
        %3276 = vmatmul.mubr.bf16.gmra.mrb[0].mxu0 %v2126
        %v3277 = vpop.f32.mrb[0].mxu0
        %v3278 = vadd.f32 %v3117, %v3277
        %v3279 = vpop.f32.mrb[0].mxu0
        %v3280 = vpop.f32.mrb[0].mxu0
        %v3281 = vadd.f32 %v3120, %v3280
        %v3282 = vpop.f32.mrb[0].mxu0
        %3283 = vmatprep.mubr.bf16.mxu0 %v2135
        %3284 = vmatmul.mubr.bf16.gmra.mrb[0].mxu0 %v2134
        %v3285 = vpop.f32.mrb[0].mxu0
        %v3286 = vadd.f32 %v3125, %v3285
        %v3287 = vpop.f32.mrb[0].mxu0
        %v3288 = vpop.f32.mrb[0].mxu0
        %v3289 = vadd.f32 %v3128, %v3288
        %v3290 = vpop.f32.mrb[0].mxu0
        %3291 = vmatprep.mubr.bf16.mxu0 %v2143
        %3292 = vmatmul.mubr.bf16.gmra.mrb[0].mxu0 %v2142
        %v3293 = vpop.f32.mrb[0].mxu0
        %v3294 = vadd.f32 %v3133, %v3293
        %v3295 = vpop.f32.mrb[0].mxu0
        %v3296 = vpop.f32.mrb[0].mxu0
        %v3297 = vadd.f32 %v3136, %v3296
        %v3298 = vpop.f32.mrb[0].mxu0
        %3299 = vmatprep.mubr.bf16.mxu0 %v2151
        %3300 = vmatmul.mubr.bf16.gmra.mrb[0].mxu0 %v2150
        %v3301 = vpop.f32.mrb[0].mxu0
        %v3302 = vadd.f32 %v3141, %v3301
        %v3303 = vpop.f32.mrb[0].mxu0
        %v3304 = vpop.f32.mrb[0].mxu0
        %v3305 = vadd.f32 %v3144, %v3304
        %v3306 = vpop.f32.mrb[0].mxu0
        %3307 = vmatprep.mubr.bf16.mxu0 %v2159
        %3308 = vmatmul.mubr.bf16.gmra.mrb[0].mxu0 %v2158
        %v3309 = vpop.f32.mrb[0].mxu0
        %v3310 = vadd.f32 %v3149, %v3309
        %v3311 = vpop.f32.mrb[0].mxu0
        %v3312 = vpop.f32.mrb[0].mxu0
        %v3313 = vadd.f32 %v3152, %v3312
        %v3314 = vpop.f32.mrb[0].mxu0
        %3315 = vmatprep.mubr.bf16.mxu0 %v2167
        %3316 = vmatmul.mubr.bf16.gmra.mrb[0].mxu0 %v2166
        %v3317 = vpop.f32.mrb[0].mxu0
        %v3318 = vadd.f32 %v3157, %v3317
        %v3319 = vpop.f32.mrb[0].mxu0
        %v3320 = vpop.f32.mrb[0].mxu0
        %v3321 = vadd.f32 %v3160, %v3320
        %v3322 = vpop.f32.mrb[0].mxu0
        %3323 = vmatprep.mubr.bf16.mxu0 %v2175
        %3324 = vmatmul.mubr.bf16.gmra.mrb[0].mxu0 %v2174
        %v3325 = vpop.f32.mrb[0].mxu0
        %v3326 = vadd.f32 %v3165, %v3325
        %v3327 = vpop.f32.mrb[0].mxu0
        %v3328 = vpop.f32.mrb[0].mxu0
        %v3329 = vadd.f32 %v3168, %v3328
        %v3330 = vpop.f32.mrb[0].mxu0
        %3331 = vmatprep.mubr.bf16.mxu0 %v2183
        %3332 = vmatmul.mubr.bf16.gmra.mrb[0].mxu0 %v2182
        %v3333 = vpop.f32.mrb[0].mxu0
        %v3334 = vadd.f32 %v3173, %v3333
        %v3335 = vpop.f32.mrb[0].mxu0
        %v3336 = vpop.f32.mrb[0].mxu0
        %v3337 = vadd.f32 %v3176, %v3336
        %v3338 = vpop.f32.mrb[0].mxu0
        %3339 = vmatprep.mubr.bf16.mxu0 %v2191
        %3340 = vmatmul.mubr.bf16.gmra.mrb[0].mxu0 %v2190
        %v3341 = vpop.f32.mrb[0].mxu0
        %v3342 = vadd.f32 %v3181, %v3341
        %v3343 = vpop.f32.mrb[0].mxu0
        %v3344 = vpop.f32.mrb[0].mxu0
        %v3345 = vadd.f32 %v3184, %v3344
        %v3346 = vpop.f32.mrb[0].mxu0
        %3347 = vmatprep.mubr.bf16.mxu0 %v2199
        %3348 = vmatmul.mubr.bf16.gmra.mrb[0].mxu0 %v2198
        %v3349 = vpop.f32.mrb[0].mxu0
        %v3350 = vadd.f32 %v3189, %v3349
        %v3351 = vpop.f32.mrb[0].mxu0
        %v3352 = vpop.f32.mrb[0].mxu0
        %v3353 = vadd.f32 %v3192, %v3352
        %v3354 = vpop.f32.mrb[0].mxu0
        %3355 = vmatprep.mubr.bf16.mxu0 %v2207
        %3356 = vmatmul.mubr.bf16.gmra.mrb[0].mxu0 %v2206
        %v3357 = vpop.f32.mrb[0].mxu0
        %v3358 = vadd.f32 %v3197, %v3357
        %v3359 = vpop.f32.mrb[0].mxu0
        %v3360 = vpop.f32.mrb[0].mxu0
        %v3361 = vadd.f32 %v3200, %v3360
        %v3362 = vpop.f32.mrb[0].mxu0
        %3363 = vmatprep.mubr.bf16.mxu0 %v2215
        %3364 = vmatmul.mubr.bf16.gmra.mrb[0].mxu0 %v2214
        %v3365 = vpop.f32.mrb[0].mxu0
        %v3366 = vadd.f32 %v3205, %v3365
        %v3367 = vpop.f32.mrb[0].mxu0
        %v3368 = vpop.f32.mrb[0].mxu0
        %v3369 = vadd.f32 %v3208, %v3368
        %v3370 = vpop.f32.mrb[0].mxu0
        %3371 = vdwg.mxu0
        %v3372 = vpack.c.bf16 %v3249, %v3246
        %v3373 = vpack.c.bf16 %v3257, %v3254
        %v3374 = vpack.c.bf16 %v3265, %v3262
        %v3375 = vpack.c.bf16 %v3273, %v3270
        %v3376 = vpack.c.bf16 %v3281, %v3278
        %v3377 = vpack.c.bf16 %v3289, %v3286
        %v3378 = vpack.c.bf16 %v3297, %v3294
        %v3379 = vpack.c.bf16 %v3305, %v3302
        %v3380 = vpack.c.bf16 %v3313, %v3310
        %v3381 = vpack.c.bf16 %v3321, %v3318
        %v3382 = vpack.c.bf16 %v3329, %v3326
        %v3383 = vpack.c.bf16 %v3337, %v3334
        %v3384 = vpack.c.bf16 %v3345, %v3342
        %v3385 = vpack.c.bf16 %v3353, %v3350
        %v3386 = vpack.c.bf16 %v3361, %v3358
        %v3387 = vpack.c.bf16 %v3369, %v3366
        %v3404 = vunpack.c.l.b16 %v3372
        %v3405 = vunpack.c.h.b16 %v3372
        %v3406 = vunpack.c.l.b16 %v3373
        %v3407 = vunpack.c.h.b16 %v3373
        %v3408 = vunpack.c.l.b16 %v3374
        %v3409 = vunpack.c.h.b16 %v3374
        %v3410 = vunpack.c.l.b16 %v3375
        %v3411 = vunpack.c.h.b16 %v3375
        %v3412 = vunpack.c.l.b16 %v3376
        %v3413 = vunpack.c.h.b16 %v3376
        %v3414 = vunpack.c.l.b16 %v3377
        %v3415 = vunpack.c.h.b16 %v3377
        %v3416 = vunpack.c.l.b16 %v3378
        %v3417 = vunpack.c.h.b16 %v3378
        %v3418 = vunpack.c.l.b16 %v3379
        %v3419 = vunpack.c.h.b16 %v3379
        %v3420 = vunpack.c.l.b16 %v3380
        %v3421 = vunpack.c.h.b16 %v3380
        %v3422 = vunpack.c.l.b16 %v3381
        %v3423 = vunpack.c.h.b16 %v3381
        %v3424 = vunpack.c.l.b16 %v3382
        %v3425 = vunpack.c.h.b16 %v3382
        %v3426 = vunpack.c.l.b16 %v3383
        %v3427 = vunpack.c.h.b16 %v3383
        %v3428 = vunpack.c.l.b16 %v3384
        %v3429 = vunpack.c.h.b16 %v3384
        %v3430 = vunpack.c.l.b16 %v3385
        %v3431 = vunpack.c.h.b16 %v3385
        %v3432 = vunpack.c.l.b16 %v3386
        %v3433 = vunpack.c.h.b16 %v3386
        %v3434 = vunpack.c.l.b16 %v3387
        %v3435 = vunpack.c.h.b16 %v3387
        %v3436 = vpack.c.b16 %v3404, %v3404
        %v3437 = vpack.c.b16 %v3405, %v3405
        %v3438 = vpack.c.b16 %v3406, %v3406
        %v3439 = vpack.c.b16 %v3407, %v3407
        %v3440 = vpack.c.b16 %v3408, %v3408
        %v3441 = vpack.c.b16 %v3409, %v3409
        %v3442 = vpack.c.b16 %v3410, %v3410
        %v3443 = vpack.c.b16 %v3411, %v3411
        %v3444 = vpack.c.b16 %v3412, %v3412
        %v3445 = vpack.c.b16 %v3413, %v3413
        %v3446 = vpack.c.b16 %v3414, %v3414
        %v3447 = vpack.c.b16 %v3415, %v3415
        %v3448 = vpack.c.b16 %v3416, %v3416
        %v3449 = vpack.c.b16 %v3417, %v3417
        %v3450 = vpack.c.b16 %v3418, %v3418
        %v3451 = vpack.c.b16 %v3419, %v3419
        %v3452 = vpack.c.b16 %v3420, %v3420
        %v3453 = vpack.c.b16 %v3421, %v3421
        %v3454 = vpack.c.b16 %v3422, %v3422
        %v3455 = vpack.c.b16 %v3423, %v3423
        %v3456 = vpack.c.b16 %v3424, %v3424
        %v3457 = vpack.c.b16 %v3425, %v3425
        %v3458 = vpack.c.b16 %v3426, %v3426
        %v3459 = vpack.c.b16 %v3427, %v3427
        %v3460 = vpack.c.b16 %v3428, %v3428
        %v3461 = vpack.c.b16 %v3429, %v3429
        %v3462 = vpack.c.b16 %v3430, %v3430
        %v3463 = vpack.c.b16 %v3431, %v3431
        %v3464 = vpack.c.b16 %v3432, %v3432
        %v3465 = vpack.c.b16 %v3433, %v3433
        %v3466 = vpack.c.b16 %v3434, %v3434
        %v3467 = vpack.c.b16 %v3435, %v3435
        %3500 = vst [vmem:[%s297] sm:$0xf] %v3436
        %3501 = vst [vmem:[%s297 + $0x8] sm:$0xf] %v3437
        %3502 = vst [vmem:[%s297 + $0x10] sm:$0xf] %v3438
        %3503 = vst [vmem:[%s297 + $0x18] sm:$0xf] %v3439
        %3504 = vst [vmem:[%s297 + $0x20] sm:$0xf] %v3440
        %3505 = vst [vmem:[%s297 + $0x28] sm:$0xf] %v3441
        %3506 = vst [vmem:[%s297 + $0x30] sm:$0xf] %v3442
        %3507 = vst [vmem:[%s297 + $0x38] sm:$0xf] %v3443
        %3508 = vst [vmem:[%s297 + $0x40] sm:$0xf] %v3444
        %3509 = vst [vmem:[%s297 + $0x48] sm:$0xf] %v3445
        %3510 = vst [vmem:[%s297 + $0x50] sm:$0xf] %v3446
        %3511 = vst [vmem:[%s297 + $0x58] sm:$0xf] %v3447
        %3512 = vst [vmem:[%s297 + $0x60] sm:$0xf] %v3448
        %3513 = vst [vmem:[%s297 + $0x68] sm:$0xf] %v3449
        %3514 = vst [vmem:[%s297 + $0x70] sm:$0xf] %v3450
        %3515 = vst [vmem:[%s297 + $0x78] sm:$0xf] %v3451
        %3516 = vst [vmem:[%s297 + $0x80] sm:$0xf] %v3452
        %3517 = vst [vmem:[%s297 + $0x88] sm:$0xf] %v3453
        %3518 = vst [vmem:[%s297 + $0x90] sm:$0xf] %v3454
        %3519 = vst [vmem:[%s297 + $0x98] sm:$0xf] %v3455
        %3520 = vst [vmem:[%s297 + $0xa0] sm:$0xf] %v3456
        %3521 = vst [vmem:[%s297 + $0xa8] sm:$0xf] %v3457
        %3522 = vst [vmem:[%s297 + $0xb0] sm:$0xf] %v3458
        %3523 = vst [vmem:[%s297 + $0xb8] sm:$0xf] %v3459
        %3524 = vst [vmem:[%s297 + $0xc0] sm:$0xf] %v3460
        %3525 = vst [vmem:[%s297 + $0xc8] sm:$0xf] %v3461
        %3526 = vst [vmem:[%s297 + $0xd0] sm:$0xf] %v3462
        %3527 = vst [vmem:[%s297 + $0xd8] sm:$0xf] %v3463
        %3528 = vst [vmem:[%s297 + $0xe0] sm:$0xf] %v3464
        %3529 = vst [vmem:[%s297 + $0xe8] sm:$0xf] %v3465
        %3530 = vst [vmem:[%s297 + $0xf0] sm:$0xf] %v3466
        %3531 = vst [vmem:[%s297 + $0xf8] sm:$0xf] %v3467
        %v3532 = vld [vmem:[#allocation10] sm:$0x1]
        %v3534 = vlaneseq
        %v3535 = vshrl.u32 %v3534, 7
        %v3536 = vsub.s32 0, %v3535
        %v3537 = vrot.slane %v3532, %v3536
        %v3667 = vunpack.c.l.b16 %v1313
        %v3668 = vunpack.c.h.b16 %v1313
        %v3669 = vunpack.c.l.b16 %v1314
        %v3670 = vunpack.c.h.b16 %v1314
        %v3671 = vunpack.c.l.b16 %v1315
        %v3672 = vunpack.c.h.b16 %v1315
        %v3673 = vunpack.c.l.b16 %v1316
        %v3674 = vunpack.c.h.b16 %v1316
        %v3675 = vunpack.c.l.b16 %v1317
        %v3676 = vunpack.c.h.b16 %v1317
        %v3677 = vunpack.c.l.b16 %v1318
        %v3678 = vunpack.c.h.b16 %v1318
        %v3679 = vunpack.c.l.b16 %v1319
        %v3680 = vunpack.c.h.b16 %v1319
        %v3681 = vunpack.c.l.b16 %v1320
        %v3682 = vunpack.c.h.b16 %v1320
        %v3683 = vunpack.c.l.b16 %v1321
        %v3684 = vunpack.c.h.b16 %v1321
        %v3685 = vunpack.c.l.b16 %v1322
        %v3686 = vunpack.c.h.b16 %v1322
        %v3687 = vunpack.c.l.b16 %v1323
        %v3688 = vunpack.c.h.b16 %v1323
        %v3689 = vunpack.c.l.b16 %v1324
        %v3690 = vunpack.c.h.b16 %v1324
        %v3691 = vunpack.c.l.b16 %v1325
        %v3692 = vunpack.c.h.b16 %v1325
        %v3693 = vunpack.c.l.b16 %v1326
        %v3694 = vunpack.c.h.b16 %v1326
        %v3695 = vunpack.c.l.b16 %v1327
        %v3696 = vunpack.c.h.b16 %v1327
        %v3697 = vunpack.c.l.b16 %v1328
        %v3698 = vunpack.c.h.b16 %v1328
        %v3699 = vunpack.c.l.b16 %v1329
        %v3700 = vunpack.c.h.b16 %v1329
        %v3701 = vunpack.c.l.b16 %v1330
        %v3702 = vunpack.c.h.b16 %v1330
        %v3703 = vunpack.c.l.b16 %v1331
        %v3704 = vunpack.c.h.b16 %v1331
        %v3705 = vunpack.c.l.b16 %v1332
        %v3706 = vunpack.c.h.b16 %v1332
        %v3707 = vunpack.c.l.b16 %v1333
        %v3708 = vunpack.c.h.b16 %v1333
        %v3709 = vunpack.c.l.b16 %v1334
        %v3710 = vunpack.c.h.b16 %v1334
        %v3711 = vunpack.c.l.b16 %v1335
        %v3712 = vunpack.c.h.b16 %v1335
        %v3713 = vunpack.c.l.b16 %v1336
        %v3714 = vunpack.c.h.b16 %v1336
        %v3715 = vunpack.c.l.b16 %v1337
        %v3716 = vunpack.c.h.b16 %v1337
        %v3717 = vunpack.c.l.b16 %v1338
        %v3718 = vunpack.c.h.b16 %v1338
        %v3719 = vunpack.c.l.b16 %v1339
        %v3720 = vunpack.c.h.b16 %v1339
        %v3721 = vunpack.c.l.b16 %v1340
        %v3722 = vunpack.c.h.b16 %v1340
        %v3723 = vunpack.c.l.b16 %v1341
        %v3724 = vunpack.c.h.b16 %v1341
        %v3725 = vunpack.c.l.b16 %v1342
        %v3726 = vunpack.c.h.b16 %v1342
        %v3727 = vunpack.c.l.b16 %v1343
        %v3728 = vunpack.c.h.b16 %v1343
        %v3729 = vunpack.c.l.b16 %v1344
        %v3730 = vunpack.c.h.b16 %v1344
        %v3731 = vunpack.c.l.b16 %v1345
        %v3732 = vunpack.c.h.b16 %v1345
        %v3733 = vunpack.c.l.b16 %v1346
        %v3734 = vunpack.c.h.b16 %v1346
        %v3735 = vunpack.c.l.b16 %v1347
        %v3736 = vunpack.c.h.b16 %v1347
        %v3737 = vunpack.c.l.b16 %v1348
        %v3738 = vunpack.c.h.b16 %v1348
        %v3739 = vunpack.c.l.b16 %v1349
        %v3740 = vunpack.c.h.b16 %v1349
        %v3741 = vunpack.c.l.b16 %v1350
        %v3742 = vunpack.c.h.b16 %v1350
        %v3743 = vunpack.c.l.b16 %v1351
        %v3744 = vunpack.c.h.b16 %v1351
        %v3745 = vunpack.c.l.b16 %v1352
        %v3746 = vunpack.c.h.b16 %v1352
        %v3747 = vunpack.c.l.b16 %v1353
        %v3748 = vunpack.c.h.b16 %v1353
        %v3749 = vunpack.c.l.b16 %v1354
        %v3750 = vunpack.c.h.b16 %v1354
        %v3751 = vunpack.c.l.b16 %v1355
        %v3752 = vunpack.c.h.b16 %v1355
        %v3753 = vunpack.c.l.b16 %v1356
        %v3754 = vunpack.c.h.b16 %v1356
        %v3755 = vunpack.c.l.b16 %v1357
        %v3756 = vunpack.c.h.b16 %v1357
        %v3757 = vunpack.c.l.b16 %v1358
        %v3758 = vunpack.c.h.b16 %v1358
        %v3759 = vunpack.c.l.b16 %v1359
        %v3760 = vunpack.c.h.b16 %v1359
        %v3761 = vunpack.c.l.b16 %v1360
        %v3762 = vunpack.c.h.b16 %v1360
        %v3763 = vunpack.c.l.b16 %v1361
        %v3764 = vunpack.c.h.b16 %v1361
        %v3765 = vunpack.c.l.b16 %v1362
        %v3766 = vunpack.c.h.b16 %v1362
        %v3767 = vunpack.c.l.b16 %v1363
        %v3768 = vunpack.c.h.b16 %v1363
        %v3769 = vunpack.c.l.b16 %v1364
        %v3770 = vunpack.c.h.b16 %v1364
        %v3771 = vunpack.c.l.b16 %v1365
        %v3772 = vunpack.c.h.b16 %v1365
        %v3773 = vunpack.c.l.b16 %v1366
        %v3774 = vunpack.c.h.b16 %v1366
        %v3775 = vunpack.c.l.b16 %v1367
        %v3776 = vunpack.c.h.b16 %v1367
        %v3777 = vunpack.c.l.b16 %v1368
        %v3778 = vunpack.c.h.b16 %v1368
        %v3779 = vunpack.c.l.b16 %v1369
        %v3780 = vunpack.c.h.b16 %v1369
        %v3781 = vunpack.c.l.b16 %v1370
        %v3782 = vunpack.c.h.b16 %v1370
        %v3783 = vunpack.c.l.b16 %v1371
        %v3784 = vunpack.c.h.b16 %v1371
        %v3785 = vunpack.c.l.b16 %v1372
        %v3786 = vunpack.c.h.b16 %v1372
        %v3787 = vunpack.c.l.b16 %v1373
        %v3788 = vunpack.c.h.b16 %v1373
        %v3789 = vunpack.c.l.b16 %v1374
        %v3790 = vunpack.c.h.b16 %v1374
        %v3791 = vunpack.c.l.b16 %v1375
        %v3792 = vunpack.c.h.b16 %v1375
        %v3793 = vunpack.c.l.b16 %v1376
        %v3794 = vunpack.c.h.b16 %v1376
        %v3795 = vunpack.c.l.b16 %v1377
        %v3796 = vunpack.c.h.b16 %v1377
        %v3797 = vunpack.c.l.b16 %v1378
        %v3798 = vunpack.c.h.b16 %v1378
        %v3799 = vunpack.c.l.b16 %v1379
        %v3800 = vunpack.c.h.b16 %v1379
        %v3801 = vunpack.c.l.b16 %v1380
        %v3802 = vunpack.c.h.b16 %v1380
        %v3803 = vunpack.c.l.b16 %v1381
        %v3804 = vunpack.c.h.b16 %v1381
        %v3805 = vunpack.c.l.b16 %v1382
        %v3806 = vunpack.c.h.b16 %v1382
        %v3807 = vunpack.c.l.b16 %v1383
        %v3808 = vunpack.c.h.b16 %v1383
        %v3809 = vunpack.c.l.b16 %v1384
        %v3810 = vunpack.c.h.b16 %v1384
        %v3811 = vunpack.c.l.b16 %v1385
        %v3812 = vunpack.c.h.b16 %v1385
        %v3813 = vunpack.c.l.b16 %v1386
        %v3814 = vunpack.c.h.b16 %v1386
        %v3815 = vunpack.c.l.b16 %v1387
        %v3816 = vunpack.c.h.b16 %v1387
        %v3817 = vunpack.c.l.b16 %v1388
        %v3818 = vunpack.c.h.b16 %v1388
        %v3819 = vunpack.c.l.b16 %v1389
        %v3820 = vunpack.c.h.b16 %v1389
        %v3821 = vunpack.c.l.b16 %v1390
        %v3822 = vunpack.c.h.b16 %v1390
        %v3823 = vunpack.c.l.b16 %v1391
        %v3824 = vunpack.c.h.b16 %v1391
        %v3825 = vunpack.c.l.b16 %v1392
        %v3826 = vunpack.c.h.b16 %v1392
        %v3827 = vunpack.c.l.b16 %v1393
        %v3828 = vunpack.c.h.b16 %v1393
        %v3829 = vunpack.c.l.b16 %v1394
        %v3830 = vunpack.c.h.b16 %v1394
        %v3831 = vunpack.c.l.b16 %v1395
        %v3832 = vunpack.c.h.b16 %v1395
        %v3833 = vunpack.c.l.b16 %v1396
        %v3834 = vunpack.c.h.b16 %v1396
        %v3835 = vunpack.c.l.b16 %v1397
        %v3836 = vunpack.c.h.b16 %v1397
        %v3837 = vunpack.c.l.b16 %v1398
        %v3838 = vunpack.c.h.b16 %v1398
        %v3839 = vunpack.c.l.b16 %v1399
        %v3840 = vunpack.c.h.b16 %v1399
        %v3841 = vunpack.c.l.b16 %v1400
        %v3842 = vunpack.c.h.b16 %v1400
        %v3843 = vunpack.c.l.b16 %v1401
        %v3844 = vunpack.c.h.b16 %v1401
        %v3845 = vunpack.c.l.b16 %v1402
        %v3846 = vunpack.c.h.b16 %v1402
        %v3847 = vunpack.c.l.b16 %v1403
        %v3848 = vunpack.c.h.b16 %v1403
        %v3849 = vunpack.c.l.b16 %v1404
        %v3850 = vunpack.c.h.b16 %v1404
        %v3851 = vunpack.c.l.b16 %v1405
        %v3852 = vunpack.c.h.b16 %v1405
        %v3853 = vunpack.c.l.b16 %v1406
        %v3854 = vunpack.c.h.b16 %v1406
        %v3855 = vunpack.c.l.b16 %v1407
        %v3856 = vunpack.c.h.b16 %v1407
        %v3857 = vunpack.c.l.b16 %v1408
        %v3858 = vunpack.c.h.b16 %v1408
        %v3859 = vunpack.c.l.b16 %v1409
        %v3860 = vunpack.c.h.b16 %v1409
        %v3861 = vunpack.c.l.b16 %v1410
        %v3862 = vunpack.c.h.b16 %v1410
        %v3863 = vunpack.c.l.b16 %v1411
        %v3864 = vunpack.c.h.b16 %v1411
        %v3865 = vunpack.c.l.b16 %v1412
        %v3866 = vunpack.c.h.b16 %v1412
        %v3867 = vunpack.c.l.b16 %v1413
        %v3868 = vunpack.c.h.b16 %v1413
        %v3869 = vunpack.c.l.b16 %v1414
        %v3870 = vunpack.c.h.b16 %v1414
        %v3871 = vunpack.c.l.b16 %v1415
        %v3872 = vunpack.c.h.b16 %v1415
        %v3873 = vunpack.c.l.b16 %v1416
        %v3874 = vunpack.c.h.b16 %v1416
        %v3875 = vunpack.c.l.b16 %v1417
        %v3876 = vunpack.c.h.b16 %v1417
        %v3877 = vunpack.c.l.b16 %v1418
        %v3878 = vunpack.c.h.b16 %v1418
        %v3879 = vunpack.c.l.b16 %v1419
        %v3880 = vunpack.c.h.b16 %v1419
        %v3881 = vunpack.c.l.b16 %v1420
        %v3882 = vunpack.c.h.b16 %v1420
        %v3883 = vunpack.c.l.b16 %v1421
        %v3884 = vunpack.c.h.b16 %v1421
        %v3885 = vunpack.c.l.b16 %v1422
        %v3886 = vunpack.c.h.b16 %v1422
        %v3887 = vunpack.c.l.b16 %v1423
        %v3888 = vunpack.c.h.b16 %v1423
        %v3889 = vunpack.c.l.b16 %v1424
        %v3890 = vunpack.c.h.b16 %v1424
        %v3891 = vunpack.c.l.b16 %v1425
        %v3892 = vunpack.c.h.b16 %v1425
        %v3893 = vunpack.c.l.b16 %v1426
        %v3894 = vunpack.c.h.b16 %v1426
        %v3895 = vunpack.c.l.b16 %v1427
        %v3896 = vunpack.c.h.b16 %v1427
        %v3897 = vunpack.c.l.b16 %v1428
        %v3898 = vunpack.c.h.b16 %v1428
        %v3899 = vunpack.c.l.b16 %v1429
        %v3900 = vunpack.c.h.b16 %v1429
        %v3901 = vunpack.c.l.b16 %v1430
        %v3902 = vunpack.c.h.b16 %v1430
        %v3903 = vunpack.c.l.b16 %v1431
        %v3904 = vunpack.c.h.b16 %v1431
        %v3905 = vunpack.c.l.b16 %v1432
        %v3906 = vunpack.c.h.b16 %v1432
        %v3907 = vunpack.c.l.b16 %v1433
        %v3908 = vunpack.c.h.b16 %v1433
        %v3909 = vunpack.c.l.b16 %v1434
        %v3910 = vunpack.c.h.b16 %v1434
        %v3911 = vunpack.c.l.b16 %v1435
        %v3912 = vunpack.c.h.b16 %v1435
        %v3913 = vunpack.c.l.b16 %v1436
        %v3914 = vunpack.c.h.b16 %v1436
        %v3915 = vunpack.c.l.b16 %v1437
        %v3916 = vunpack.c.h.b16 %v1437
        %v3917 = vunpack.c.l.b16 %v1438
        %v3918 = vunpack.c.h.b16 %v1438
        %v3919 = vunpack.c.l.b16 %v1439
        %v3920 = vunpack.c.h.b16 %v1439
        %v3921 = vunpack.c.l.b16 %v1440
        %v3922 = vunpack.c.h.b16 %v1440
        %v3923 = vpack.c.b16 %v3675, %v3667
        %v3924 = vpack.c.b16 %v3676, %v3668
        %v3925 = vpack.c.b16 %v3677, %v3669
        %v3926 = vpack.c.b16 %v3678, %v3670
        %v3927 = vpack.c.b16 %v3679, %v3671
        %v3928 = vpack.c.b16 %v3680, %v3672
        %v3929 = vpack.c.b16 %v3681, %v3673
        %v3930 = vpack.c.b16 %v3682, %v3674
        %v3931 = vpack.c.b16 %v3691, %v3683
        %v3932 = vpack.c.b16 %v3692, %v3684
        %v3933 = vpack.c.b16 %v3693, %v3685
        %v3934 = vpack.c.b16 %v3694, %v3686
        %v3935 = vpack.c.b16 %v3695, %v3687
        %v3936 = vpack.c.b16 %v3696, %v3688
        %v3937 = vpack.c.b16 %v3697, %v3689
        %v3938 = vpack.c.b16 %v3698, %v3690
        %v3939 = vpack.c.b16 %v3707, %v3699
        %v3940 = vpack.c.b16 %v3708, %v3700
        %v3941 = vpack.c.b16 %v3709, %v3701
        %v3942 = vpack.c.b16 %v3710, %v3702
        %v3943 = vpack.c.b16 %v3711, %v3703
        %v3944 = vpack.c.b16 %v3712, %v3704
        %v3945 = vpack.c.b16 %v3713, %v3705
        %v3946 = vpack.c.b16 %v3714, %v3706
        %v3947 = vpack.c.b16 %v3723, %v3715
        %v3948 = vpack.c.b16 %v3724, %v3716
        %v3949 = vpack.c.b16 %v3725, %v3717
        %v3950 = vpack.c.b16 %v3726, %v3718
        %v3951 = vpack.c.b16 %v3727, %v3719
        %v3952 = vpack.c.b16 %v3728, %v3720
        %v3953 = vpack.c.b16 %v3729, %v3721
        %v3954 = vpack.c.b16 %v3730, %v3722
        %v3955 = vpack.c.b16 %v3739, %v3731
        %v3956 = vpack.c.b16 %v3740, %v3732
        %v3957 = vpack.c.b16 %v3741, %v3733
        %v3958 = vpack.c.b16 %v3742, %v3734
        %v3959 = vpack.c.b16 %v3743, %v3735
        %v3960 = vpack.c.b16 %v3744, %v3736
        %v3961 = vpack.c.b16 %v3745, %v3737
        %v3962 = vpack.c.b16 %v3746, %v3738
        %v3963 = vpack.c.b16 %v3755, %v3747
        %v3964 = vpack.c.b16 %v3756, %v3748
        %v3965 = vpack.c.b16 %v3757, %v3749
        %v3966 = vpack.c.b16 %v3758, %v3750
        %v3967 = vpack.c.b16 %v3759, %v3751
        %v3968 = vpack.c.b16 %v3760, %v3752
        %v3969 = vpack.c.b16 %v3761, %v3753
        %v3970 = vpack.c.b16 %v3762, %v3754
        %v3971 = vpack.c.b16 %v3771, %v3763
        %v3972 = vpack.c.b16 %v3772, %v3764
        %v3973 = vpack.c.b16 %v3773, %v3765
        %v3974 = vpack.c.b16 %v3774, %v3766
        %v3975 = vpack.c.b16 %v3775, %v3767
        %v3976 = vpack.c.b16 %v3776, %v3768
        %v3977 = vpack.c.b16 %v3777, %v3769
        %v3978 = vpack.c.b16 %v3778, %v3770
        %v3979 = vpack.c.b16 %v3787, %v3779
        %v3980 = vpack.c.b16 %v3788, %v3780
        %v3981 = vpack.c.b16 %v3789, %v3781
        %v3982 = vpack.c.b16 %v3790, %v3782
        %v3983 = vpack.c.b16 %v3791, %v3783
        %v3984 = vpack.c.b16 %v3792, %v3784
        %v3985 = vpack.c.b16 %v3793, %v3785
        %v3986 = vpack.c.b16 %v3794, %v3786
        %v3987 = vpack.c.b16 %v3803, %v3795
        %v3988 = vpack.c.b16 %v3804, %v3796
        %v3989 = vpack.c.b16 %v3805, %v3797
        %v3990 = vpack.c.b16 %v3806, %v3798
        %v3991 = vpack.c.b16 %v3807, %v3799
        %v3992 = vpack.c.b16 %v3808, %v3800
        %v3993 = vpack.c.b16 %v3809, %v3801
        %v3994 = vpack.c.b16 %v3810, %v3802
        %v3995 = vpack.c.b16 %v3819, %v3811
        %v3996 = vpack.c.b16 %v3820, %v3812
        %v3997 = vpack.c.b16 %v3821, %v3813
        %v3998 = vpack.c.b16 %v3822, %v3814
        %v3999 = vpack.c.b16 %v3823, %v3815
        %v4000 = vpack.c.b16 %v3824, %v3816
        %v4001 = vpack.c.b16 %v3825, %v3817
        %v4002 = vpack.c.b16 %v3826, %v3818
        %v4003 = vpack.c.b16 %v3835, %v3827
        %v4004 = vpack.c.b16 %v3836, %v3828
        %v4005 = vpack.c.b16 %v3837, %v3829
        %v4006 = vpack.c.b16 %v3838, %v3830
        %v4007 = vpack.c.b16 %v3839, %v3831
        %v4008 = vpack.c.b16 %v3840, %v3832
        %v4009 = vpack.c.b16 %v3841, %v3833
        %v4010 = vpack.c.b16 %v3842, %v3834
        %v4011 = vpack.c.b16 %v3851, %v3843
        %v4012 = vpack.c.b16 %v3852, %v3844
        %v4013 = vpack.c.b16 %v3853, %v3845
        %v4014 = vpack.c.b16 %v3854, %v3846
        %v4015 = vpack.c.b16 %v3855, %v3847
        %v4016 = vpack.c.b16 %v3856, %v3848
        %v4017 = vpack.c.b16 %v3857, %v3849
        %v4018 = vpack.c.b16 %v3858, %v3850
        %v4019 = vpack.c.b16 %v3867, %v3859
        %v4020 = vpack.c.b16 %v3868, %v3860
        %v4021 = vpack.c.b16 %v3869, %v3861
        %v4022 = vpack.c.b16 %v3870, %v3862
        %v4023 = vpack.c.b16 %v3871, %v3863
        %v4024 = vpack.c.b16 %v3872, %v3864
        %v4025 = vpack.c.b16 %v3873, %v3865
        %v4026 = vpack.c.b16 %v3874, %v3866
        %v4027 = vpack.c.b16 %v3883, %v3875
        %v4028 = vpack.c.b16 %v3884, %v3876
        %v4029 = vpack.c.b16 %v3885, %v3877
        %v4030 = vpack.c.b16 %v3886, %v3878
        %v4031 = vpack.c.b16 %v3887, %v3879
        %v4032 = vpack.c.b16 %v3888, %v3880
        %v4033 = vpack.c.b16 %v3889, %v3881
        %v4034 = vpack.c.b16 %v3890, %v3882
        %v4035 = vpack.c.b16 %v3899, %v3891
        %v4036 = vpack.c.b16 %v3900, %v3892
        %v4037 = vpack.c.b16 %v3901, %v3893
        %v4038 = vpack.c.b16 %v3902, %v3894
        %v4039 = vpack.c.b16 %v3903, %v3895
        %v4040 = vpack.c.b16 %v3904, %v3896
        %v4041 = vpack.c.b16 %v3905, %v3897
        %v4042 = vpack.c.b16 %v3906, %v3898
        %v4043 = vpack.c.b16 %v3915, %v3907
        %v4044 = vpack.c.b16 %v3916, %v3908
        %v4045 = vpack.c.b16 %v3917, %v3909
        %v4046 = vpack.c.b16 %v3918, %v3910
        %v4047 = vpack.c.b16 %v3919, %v3911
        %v4048 = vpack.c.b16 %v3920, %v3912
        %v4049 = vpack.c.b16 %v3921, %v3913
        %v4050 = vpack.c.b16 %v3922, %v3914
        %v4307 = vunpack.c.l.b16 %v1569
        %v4308 = vunpack.c.l.b16 %v1570
        %v4309 = vunpack.c.l.b16 %v1571
        %v4310 = vunpack.c.l.b16 %v1572
        %v4311 = vunpack.c.l.b16 %v1573
        %v4312 = vunpack.c.l.b16 %v1574
        %v4313 = vunpack.c.l.b16 %v1575
        %v4314 = vunpack.c.l.b16 %v1576
        %v4315 = vunpack.c.l.b16 %v1577
        %v4316 = vunpack.c.l.b16 %v1578
        %v4317 = vunpack.c.l.b16 %v1579
        %v4318 = vunpack.c.l.b16 %v1580
        %v4319 = vunpack.c.l.b16 %v1581
        %v4320 = vunpack.c.l.b16 %v1582
        %v4321 = vunpack.c.l.b16 %v1583
        %v4322 = vunpack.c.l.b16 %v1584
        %v4323 = vunpack.c.l.b16 %v1585
        %v4324 = vunpack.c.l.b16 %v1586
        %v4325 = vunpack.c.l.b16 %v1587
        %v4326 = vunpack.c.l.b16 %v1588
        %v4327 = vunpack.c.l.b16 %v1589
        %v4328 = vunpack.c.l.b16 %v1590
        %v4329 = vunpack.c.l.b16 %v1591
        %v4330 = vunpack.c.l.b16 %v1592
        %v4331 = vunpack.c.l.b16 %v1593
        %v4332 = vunpack.c.l.b16 %v1594
        %v4333 = vunpack.c.l.b16 %v1595
        %v4334 = vunpack.c.l.b16 %v1596
        %v4335 = vunpack.c.l.b16 %v1597
        %v4336 = vunpack.c.l.b16 %v1598
        %v4337 = vunpack.c.l.b16 %v1599
        %v4338 = vunpack.c.l.b16 %v1600
        %v4339 = vunpack.c.l.b16 %v1601
        %v4340 = vunpack.c.l.b16 %v1602
        %v4341 = vunpack.c.l.b16 %v1603
        %v4342 = vunpack.c.l.b16 %v1604
        %v4343 = vunpack.c.l.b16 %v1605
        %v4344 = vunpack.c.l.b16 %v1606
        %v4345 = vunpack.c.l.b16 %v1607
        %v4346 = vunpack.c.l.b16 %v1608
        %v4347 = vunpack.c.l.b16 %v1609
        %v4348 = vunpack.c.l.b16 %v1610
        %v4349 = vunpack.c.l.b16 %v1611
        %v4350 = vunpack.c.l.b16 %v1612
        %v4351 = vunpack.c.l.b16 %v1613
        %v4352 = vunpack.c.l.b16 %v1614
        %v4353 = vunpack.c.l.b16 %v1615
        %v4354 = vunpack.c.l.b16 %v1616
        %v4355 = vunpack.c.l.b16 %v1617
        %v4356 = vunpack.c.l.b16 %v1618
        %v4357 = vunpack.c.l.b16 %v1619
        %v4358 = vunpack.c.l.b16 %v1620
        %v4359 = vunpack.c.l.b16 %v1621
        %v4360 = vunpack.c.l.b16 %v1622
        %v4361 = vunpack.c.l.b16 %v1623
        %v4362 = vunpack.c.l.b16 %v1624
        %v4363 = vunpack.c.l.b16 %v1625
        %v4364 = vunpack.c.l.b16 %v1626
        %v4365 = vunpack.c.l.b16 %v1627
        %v4366 = vunpack.c.l.b16 %v1628
        %v4367 = vunpack.c.l.b16 %v1629
        %v4368 = vunpack.c.l.b16 %v1630
        %v4369 = vunpack.c.l.b16 %v1631
        %v4370 = vunpack.c.l.b16 %v1632
        %v4371 = vunpack.c.l.b16 %v1633
        %v4372 = vunpack.c.l.b16 %v1634
        %v4373 = vunpack.c.l.b16 %v1635
        %v4374 = vunpack.c.l.b16 %v1636
        %v4375 = vunpack.c.l.b16 %v1637
        %v4376 = vunpack.c.l.b16 %v1638
        %v4377 = vunpack.c.l.b16 %v1639
        %v4378 = vunpack.c.l.b16 %v1640
        %v4379 = vunpack.c.l.b16 %v1641
        %v4380 = vunpack.c.l.b16 %v1642
        %v4381 = vunpack.c.l.b16 %v1643
        %v4382 = vunpack.c.l.b16 %v1644
        %v4383 = vunpack.c.l.b16 %v1645
        %v4384 = vunpack.c.l.b16 %v1646
        %v4385 = vunpack.c.l.b16 %v1647
        %v4386 = vunpack.c.l.b16 %v1648
        %v4387 = vunpack.c.l.b16 %v1649
        %v4388 = vunpack.c.l.b16 %v1650
        %v4389 = vunpack.c.l.b16 %v1651
        %v4390 = vunpack.c.l.b16 %v1652
        %v4391 = vunpack.c.l.b16 %v1653
        %v4392 = vunpack.c.l.b16 %v1654
        %v4393 = vunpack.c.l.b16 %v1655
        %v4394 = vunpack.c.l.b16 %v1656
        %v4395 = vunpack.c.l.b16 %v1657
        %v4396 = vunpack.c.l.b16 %v1658
        %v4397 = vunpack.c.l.b16 %v1659
        %v4398 = vunpack.c.l.b16 %v1660
        %v4399 = vunpack.c.l.b16 %v1661
        %v4400 = vunpack.c.l.b16 %v1662
        %v4401 = vunpack.c.l.b16 %v1663
        %v4402 = vunpack.c.l.b16 %v1664
        %v4403 = vunpack.c.l.b16 %v1665
        %v4404 = vunpack.c.l.b16 %v1666
        %v4405 = vunpack.c.l.b16 %v1667
        %v4406 = vunpack.c.l.b16 %v1668
        %v4407 = vunpack.c.l.b16 %v1669
        %v4408 = vunpack.c.l.b16 %v1670
        %v4409 = vunpack.c.l.b16 %v1671
        %v4410 = vunpack.c.l.b16 %v1672
        %v4411 = vunpack.c.l.b16 %v1673
        %v4412 = vunpack.c.l.b16 %v1674
        %v4413 = vunpack.c.l.b16 %v1675
        %v4414 = vunpack.c.l.b16 %v1676
        %v4415 = vunpack.c.l.b16 %v1677
        %v4416 = vunpack.c.l.b16 %v1678
        %v4417 = vunpack.c.l.b16 %v1679
        %v4418 = vunpack.c.l.b16 %v1680
        %v4419 = vunpack.c.l.b16 %v1681
        %v4420 = vunpack.c.l.b16 %v1682
        %v4421 = vunpack.c.l.b16 %v1683
        %v4422 = vunpack.c.l.b16 %v1684
        %v4423 = vunpack.c.l.b16 %v1685
        %v4424 = vunpack.c.l.b16 %v1686
        %v4425 = vunpack.c.l.b16 %v1687
        %v4426 = vunpack.c.l.b16 %v1688
        %v4427 = vunpack.c.l.b16 %v1689
        %v4428 = vunpack.c.l.b16 %v1690
        %v4429 = vunpack.c.l.b16 %v1691
        %v4430 = vunpack.c.l.b16 %v1692
        %v4431 = vunpack.c.l.b16 %v1693
        %v4432 = vunpack.c.l.b16 %v1694
        %v4433 = vunpack.c.l.b16 %v1695
        %v4434 = vunpack.c.l.b16 %v1696
        %v4435 = vpack.c.b16 %v4308, %v4307
        %v4436 = vpack.c.b16 %v4310, %v4309
        %v4437 = vpack.c.b16 %v4312, %v4311
        %v4438 = vpack.c.b16 %v4314, %v4313
        %v4439 = vpack.c.b16 %v4316, %v4315
        %v4440 = vpack.c.b16 %v4318, %v4317
        %v4441 = vpack.c.b16 %v4320, %v4319
        %v4442 = vpack.c.b16 %v4322, %v4321
        %v4443 = vpack.c.b16 %v4324, %v4323
        %v4444 = vpack.c.b16 %v4326, %v4325
        %v4445 = vpack.c.b16 %v4328, %v4327
        %v4446 = vpack.c.b16 %v4330, %v4329
        %v4447 = vpack.c.b16 %v4332, %v4331
        %v4448 = vpack.c.b16 %v4334, %v4333
        %v4449 = vpack.c.b16 %v4336, %v4335
        %v4450 = vpack.c.b16 %v4338, %v4337
        %v4451 = vpack.c.b16 %v4340, %v4339
        %v4452 = vpack.c.b16 %v4342, %v4341
        %v4453 = vpack.c.b16 %v4344, %v4343
        %v4454 = vpack.c.b16 %v4346, %v4345
        %v4455 = vpack.c.b16 %v4348, %v4347
        %v4456 = vpack.c.b16 %v4350, %v4349
        %v4457 = vpack.c.b16 %v4352, %v4351
        %v4458 = vpack.c.b16 %v4354, %v4353
        %v4459 = vpack.c.b16 %v4356, %v4355
        %v4460 = vpack.c.b16 %v4358, %v4357
        %v4461 = vpack.c.b16 %v4360, %v4359
        %v4462 = vpack.c.b16 %v4362, %v4361
        %v4463 = vpack.c.b16 %v4364, %v4363
        %v4464 = vpack.c.b16 %v4366, %v4365
        %v4465 = vpack.c.b16 %v4368, %v4367
        %v4466 = vpack.c.b16 %v4370, %v4369
        %v4467 = vpack.c.b16 %v4372, %v4371
        %v4468 = vpack.c.b16 %v4374, %v4373
        %v4469 = vpack.c.b16 %v4376, %v4375
        %v4470 = vpack.c.b16 %v4378, %v4377
        %v4471 = vpack.c.b16 %v4380, %v4379
        %v4472 = vpack.c.b16 %v4382, %v4381
        %v4473 = vpack.c.b16 %v4384, %v4383
        %v4474 = vpack.c.b16 %v4386, %v4385
        %v4475 = vpack.c.b16 %v4388, %v4387
        %v4476 = vpack.c.b16 %v4390, %v4389
        %v4477 = vpack.c.b16 %v4392, %v4391
        %v4478 = vpack.c.b16 %v4394, %v4393
        %v4479 = vpack.c.b16 %v4396, %v4395
        %v4480 = vpack.c.b16 %v4398, %v4397
        %v4481 = vpack.c.b16 %v4400, %v4399
        %v4482 = vpack.c.b16 %v4402, %v4401
        %v4483 = vpack.c.b16 %v4404, %v4403
        %v4484 = vpack.c.b16 %v4406, %v4405
        %v4485 = vpack.c.b16 %v4408, %v4407
        %v4486 = vpack.c.b16 %v4410, %v4409
        %v4487 = vpack.c.b16 %v4412, %v4411
        %v4488 = vpack.c.b16 %v4414, %v4413
        %v4489 = vpack.c.b16 %v4416, %v4415
        %v4490 = vpack.c.b16 %v4418, %v4417
        %v4491 = vpack.c.b16 %v4420, %v4419
        %v4492 = vpack.c.b16 %v4422, %v4421
        %v4493 = vpack.c.b16 %v4424, %v4423
        %v4494 = vpack.c.b16 %v4426, %v4425
        %v4495 = vpack.c.b16 %v4428, %v4427
        %v4496 = vpack.c.b16 %v4430, %v4429
        %v4497 = vpack.c.b16 %v4432, %v4431
        %v4498 = vpack.c.b16 %v4434, %v4433
        %4563 = vmatprep.subr.bf16.mxu0 0
        %4564 = vmatpush1.bf16.msra.mxu0 %v4435
        %4565 = vmatprep.subr.bf16.mxu0 0
        %4566 = vmatpush1.bf16.msra.mxu0 %v4436
        %4567 = vmatprep.subr.bf16.mxu0 0
        %4568 = vmatpush1.bf16.msra.mxu0 %v4437
        %4569 = vmatprep.subr.bf16.mxu0 0
        %4570 = vmatpush1.bf16.msra.mxu0 %v4438
        %4571 = vmatprep.subr.bf16.mxu0 0
        %4572 = vmatpush1.bf16.msra.mxu0 %v4439
        %4573 = vmatprep.subr.bf16.mxu0 0
        %4574 = vmatpush1.bf16.msra.mxu0 %v4440
        %4575 = vmatprep.subr.bf16.mxu0 0
        %4576 = vmatpush1.bf16.msra.mxu0 %v4441
        %4577 = vmatprep.subr.bf16.mxu0 0
        %4578 = vmatpush1.bf16.msra.mxu0 %v4442
        %4579 = vmatprep.subr.bf16.mxu0 0
        %4580 = vmatpush1.bf16.msra.mxu0 %v4443
        %4581 = vmatprep.subr.bf16.mxu0 0
        %4582 = vmatpush1.bf16.msra.mxu0 %v4444
        %4583 = vmatprep.subr.bf16.mxu0 0
        %4584 = vmatpush1.bf16.msra.mxu0 %v4445
        %4585 = vmatprep.subr.bf16.mxu0 0
        %4586 = vmatpush1.bf16.msra.mxu0 %v4446
        %4587 = vmatprep.subr.bf16.mxu0 0
        %4588 = vmatpush1.bf16.msra.mxu0 %v4447
        %4589 = vmatprep.subr.bf16.mxu0 0
        %4590 = vmatpush1.bf16.msra.mxu0 %v4448
        %4591 = vmatprep.subr.bf16.mxu0 0
        %4592 = vmatpush1.bf16.msra.mxu0 %v4449
        %4593 = vmatprep.subr.bf16.mxu0 0
        %4594 = vmatpush1.bf16.msra.mxu0 %v4450
        %4595 = vmatprep.mubr.bf16.mxu0 %v3924
        %4596 = vmatmul.mubr.bf16.gmra.mrb[0].mxu0 %v3923
        %v4597 = vpop.f32.mrb[0].mxu0
        %v4598 = vadd.f32 %v3537, %v4597
        %v4599 = vpop.f32.mrb[0].mxu0
        %v4600 = vpop.f32.mrb[0].mxu0
        %v4601 = vadd.f32 %v3537, %v4600
        %v4602 = vpop.f32.mrb[0].mxu0
        %4603 = vmatprep.mubr.bf16.mxu0 %v3932
        %4604 = vmatmul.mubr.bf16.gmra.mrb[0].mxu0 %v3931
        %v4605 = vpop.f32.mrb[0].mxu0
        %v4606 = vadd.f32 %v3537, %v4605
        %v4607 = vpop.f32.mrb[0].mxu0
        %v4608 = vpop.f32.mrb[0].mxu0
        %v4609 = vadd.f32 %v3537, %v4608
        %v4610 = vpop.f32.mrb[0].mxu0
        %4611 = vmatprep.mubr.bf16.mxu0 %v3940
        %4612 = vmatmul.mubr.bf16.gmra.mrb[0].mxu0 %v3939
        %v4613 = vpop.f32.mrb[0].mxu0
        %v4614 = vadd.f32 %v3537, %v4613
        %v4615 = vpop.f32.mrb[0].mxu0
        %v4616 = vpop.f32.mrb[0].mxu0
        %v4617 = vadd.f32 %v3537, %v4616
        %v4618 = vpop.f32.mrb[0].mxu0
        %4619 = vmatprep.mubr.bf16.mxu0 %v3948
        %4620 = vmatmul.mubr.bf16.gmra.mrb[0].mxu0 %v3947
        %v4621 = vpop.f32.mrb[0].mxu0
        %v4622 = vadd.f32 %v3537, %v4621
        %v4623 = vpop.f32.mrb[0].mxu0
        %v4624 = vpop.f32.mrb[0].mxu0
        %v4625 = vadd.f32 %v3537, %v4624
        %v4626 = vpop.f32.mrb[0].mxu0
        %4627 = vmatprep.mubr.bf16.mxu0 %v3956
        %4628 = vmatmul.mubr.bf16.gmra.mrb[0].mxu0 %v3955
        %v4629 = vpop.f32.mrb[0].mxu0
        %v4630 = vadd.f32 %v3537, %v4629
        %v4631 = vpop.f32.mrb[0].mxu0
        %v4632 = vpop.f32.mrb[0].mxu0
        %v4633 = vadd.f32 %v3537, %v4632
        %v4634 = vpop.f32.mrb[0].mxu0
        %4635 = vmatprep.mubr.bf16.mxu0 %v3964
        %4636 = vmatmul.mubr.bf16.gmra.mrb[0].mxu0 %v3963
        %v4637 = vpop.f32.mrb[0].mxu0
        %v4638 = vadd.f32 %v3537, %v4637
        %v4639 = vpop.f32.mrb[0].mxu0
        %v4640 = vpop.f32.mrb[0].mxu0
        %v4641 = vadd.f32 %v3537, %v4640
        %v4642 = vpop.f32.mrb[0].mxu0
        %4643 = vmatprep.mubr.bf16.mxu0 %v3972
        %4644 = vmatmul.mubr.bf16.gmra.mrb[0].mxu0 %v3971
        %v4645 = vpop.f32.mrb[0].mxu0
        %v4646 = vadd.f32 %v3537, %v4645
        %v4647 = vpop.f32.mrb[0].mxu0
        %v4648 = vpop.f32.mrb[0].mxu0
        %v4649 = vadd.f32 %v3537, %v4648
        %v4650 = vpop.f32.mrb[0].mxu0
        %4651 = vmatprep.mubr.bf16.mxu0 %v3980
        %4652 = vmatmul.mubr.bf16.gmra.mrb[0].mxu0 %v3979
        %v4653 = vpop.f32.mrb[0].mxu0
        %v4654 = vadd.f32 %v3537, %v4653
        %v4655 = vpop.f32.mrb[0].mxu0
        %v4656 = vpop.f32.mrb[0].mxu0
        %v4657 = vadd.f32 %v3537, %v4656
        %v4658 = vpop.f32.mrb[0].mxu0
        %4659 = vmatprep.mubr.bf16.mxu0 %v3988
        %4660 = vmatmul.mubr.bf16.gmra.mrb[0].mxu0 %v3987
        %v4661 = vpop.f32.mrb[0].mxu0
        %v4662 = vadd.f32 %v3537, %v4661
        %v4663 = vpop.f32.mrb[0].mxu0
        %v4664 = vpop.f32.mrb[0].mxu0
        %v4665 = vadd.f32 %v3537, %v4664
        %v4666 = vpop.f32.mrb[0].mxu0
        %4667 = vmatprep.mubr.bf16.mxu0 %v3996
        %4668 = vmatmul.mubr.bf16.gmra.mrb[0].mxu0 %v3995
        %v4669 = vpop.f32.mrb[0].mxu0
        %v4670 = vadd.f32 %v3537, %v4669
        %v4671 = vpop.f32.mrb[0].mxu0
        %v4672 = vpop.f32.mrb[0].mxu0
        %v4673 = vadd.f32 %v3537, %v4672
        %v4674 = vpop.f32.mrb[0].mxu0
        %4675 = vmatprep.mubr.bf16.mxu0 %v4004
        %4676 = vmatmul.mubr.bf16.gmra.mrb[0].mxu0 %v4003
        %v4677 = vpop.f32.mrb[0].mxu0
        %v4678 = vadd.f32 %v3537, %v4677
        %v4679 = vpop.f32.mrb[0].mxu0
        %v4680 = vpop.f32.mrb[0].mxu0
        %v4681 = vadd.f32 %v3537, %v4680
        %v4682 = vpop.f32.mrb[0].mxu0
        %4683 = vmatprep.mubr.bf16.mxu0 %v4012
        %4684 = vmatmul.mubr.bf16.gmra.mrb[0].mxu0 %v4011
        %v4685 = vpop.f32.mrb[0].mxu0
        %v4686 = vadd.f32 %v3537, %v4685
        %v4687 = vpop.f32.mrb[0].mxu0
        %v4688 = vpop.f32.mrb[0].mxu0
        %v4689 = vadd.f32 %v3537, %v4688
        %v4690 = vpop.f32.mrb[0].mxu0
        %4691 = vmatprep.mubr.bf16.mxu0 %v4020
        %4692 = vmatmul.mubr.bf16.gmra.mrb[0].mxu0 %v4019
        %v4693 = vpop.f32.mrb[0].mxu0
        %v4694 = vadd.f32 %v3537, %v4693
        %v4695 = vpop.f32.mrb[0].mxu0
        %v4696 = vpop.f32.mrb[0].mxu0
        %v4697 = vadd.f32 %v3537, %v4696
        %v4698 = vpop.f32.mrb[0].mxu0
        %4699 = vmatprep.mubr.bf16.mxu0 %v4028
        %4700 = vmatmul.mubr.bf16.gmra.mrb[0].mxu0 %v4027
        %v4701 = vpop.f32.mrb[0].mxu0
        %v4702 = vadd.f32 %v3537, %v4701
        %v4703 = vpop.f32.mrb[0].mxu0
        %v4704 = vpop.f32.mrb[0].mxu0
        %v4705 = vadd.f32 %v3537, %v4704
        %v4706 = vpop.f32.mrb[0].mxu0
        %4707 = vmatprep.mubr.bf16.mxu0 %v4036
        %4708 = vmatmul.mubr.bf16.gmra.mrb[0].mxu0 %v4035
        %v4709 = vpop.f32.mrb[0].mxu0
        %v4710 = vadd.f32 %v3537, %v4709
        %v4711 = vpop.f32.mrb[0].mxu0
        %v4712 = vpop.f32.mrb[0].mxu0
        %v4713 = vadd.f32 %v3537, %v4712
        %v4714 = vpop.f32.mrb[0].mxu0
        %4715 = vmatprep.mubr.bf16.mxu0 %v4044
        %4716 = vmatmul.mubr.bf16.gmra.mrb[0].mxu0 %v4043
        %v4717 = vpop.f32.mrb[0].mxu0
        %v4718 = vadd.f32 %v3537, %v4717
        %v4719 = vpop.f32.mrb[0].mxu0
        %v4720 = vpop.f32.mrb[0].mxu0
        %v4721 = vadd.f32 %v3537, %v4720
        %v4722 = vpop.f32.mrb[0].mxu0
        %4723 = vdwg.mxu0
        %4724 = vmatprep.subr.bf16.mxu0 0
        %4725 = vmatpush1.bf16.msra.mxu0 %v4451
        %4726 = vmatprep.subr.bf16.mxu0 0
        %4727 = vmatpush1.bf16.msra.mxu0 %v4452
        %4728 = vmatprep.subr.bf16.mxu0 0
        %4729 = vmatpush1.bf16.msra.mxu0 %v4453
        %4730 = vmatprep.subr.bf16.mxu0 0
        %4731 = vmatpush1.bf16.msra.mxu0 %v4454
        %4732 = vmatprep.subr.bf16.mxu0 0
        %4733 = vmatpush1.bf16.msra.mxu0 %v4455
        %4734 = vmatprep.subr.bf16.mxu0 0
        %4735 = vmatpush1.bf16.msra.mxu0 %v4456
        %4736 = vmatprep.subr.bf16.mxu0 0
        %4737 = vmatpush1.bf16.msra.mxu0 %v4457
        %4738 = vmatprep.subr.bf16.mxu0 0
        %4739 = vmatpush1.bf16.msra.mxu0 %v4458
        %4740 = vmatprep.subr.bf16.mxu0 0
        %4741 = vmatpush1.bf16.msra.mxu0 %v4459
        %4742 = vmatprep.subr.bf16.mxu0 0
        %4743 = vmatpush1.bf16.msra.mxu0 %v4460
        %4744 = vmatprep.subr.bf16.mxu0 0
        %4745 = vmatpush1.bf16.msra.mxu0 %v4461
        %4746 = vmatprep.subr.bf16.mxu0 0
        %4747 = vmatpush1.bf16.msra.mxu0 %v4462
        %4748 = vmatprep.subr.bf16.mxu0 0
        %4749 = vmatpush1.bf16.msra.mxu0 %v4463
        %4750 = vmatprep.subr.bf16.mxu0 0
        %4751 = vmatpush1.bf16.msra.mxu0 %v4464
        %4752 = vmatprep.subr.bf16.mxu0 0
        %4753 = vmatpush1.bf16.msra.mxu0 %v4465
        %4754 = vmatprep.subr.bf16.mxu0 0
        %4755 = vmatpush1.bf16.msra.mxu0 %v4466
        %4756 = vmatprep.mubr.bf16.mxu0 %v3926
        %4757 = vmatmul.mubr.bf16.gmra.mrb[0].mxu0 %v3925
        %v4758 = vpop.f32.mrb[0].mxu0
        %v4759 = vadd.f32 %v4598, %v4758
        %v4760 = vpop.f32.mrb[0].mxu0
        %v4761 = vpop.f32.mrb[0].mxu0
        %v4762 = vadd.f32 %v4601, %v4761
        %v4763 = vpop.f32.mrb[0].mxu0
        %4764 = vmatprep.mubr.bf16.mxu0 %v3934
        %4765 = vmatmul.mubr.bf16.gmra.mrb[0].mxu0 %v3933
        %v4766 = vpop.f32.mrb[0].mxu0
        %v4767 = vadd.f32 %v4606, %v4766
        %v4768 = vpop.f32.mrb[0].mxu0
        %v4769 = vpop.f32.mrb[0].mxu0
        %v4770 = vadd.f32 %v4609, %v4769
        %v4771 = vpop.f32.mrb[0].mxu0
        %4772 = vmatprep.mubr.bf16.mxu0 %v3942
        %4773 = vmatmul.mubr.bf16.gmra.mrb[0].mxu0 %v3941
        %v4774 = vpop.f32.mrb[0].mxu0
        %v4775 = vadd.f32 %v4614, %v4774
        %v4776 = vpop.f32.mrb[0].mxu0
        %v4777 = vpop.f32.mrb[0].mxu0
        %v4778 = vadd.f32 %v4617, %v4777
        %v4779 = vpop.f32.mrb[0].mxu0
        %4780 = vmatprep.mubr.bf16.mxu0 %v3950
        %4781 = vmatmul.mubr.bf16.gmra.mrb[0].mxu0 %v3949
        %v4782 = vpop.f32.mrb[0].mxu0
        %v4783 = vadd.f32 %v4622, %v4782
        %v4784 = vpop.f32.mrb[0].mxu0
        %v4785 = vpop.f32.mrb[0].mxu0
        %v4786 = vadd.f32 %v4625, %v4785
        %v4787 = vpop.f32.mrb[0].mxu0
        %4788 = vmatprep.mubr.bf16.mxu0 %v3958
        %4789 = vmatmul.mubr.bf16.gmra.mrb[0].mxu0 %v3957
        %v4790 = vpop.f32.mrb[0].mxu0
        %v4791 = vadd.f32 %v4630, %v4790
        %v4792 = vpop.f32.mrb[0].mxu0
        %v4793 = vpop.f32.mrb[0].mxu0
        %v4794 = vadd.f32 %v4633, %v4793
        %v4795 = vpop.f32.mrb[0].mxu0
        %4796 = vmatprep.mubr.bf16.mxu0 %v3966
        %4797 = vmatmul.mubr.bf16.gmra.mrb[0].mxu0 %v3965
        %v4798 = vpop.f32.mrb[0].mxu0
        %v4799 = vadd.f32 %v4638, %v4798
        %v4800 = vpop.f32.mrb[0].mxu0
        %v4801 = vpop.f32.mrb[0].mxu0
        %v4802 = vadd.f32 %v4641, %v4801
        %v4803 = vpop.f32.mrb[0].mxu0
        %4804 = vmatprep.mubr.bf16.mxu0 %v3974
        %4805 = vmatmul.mubr.bf16.gmra.mrb[0].mxu0 %v3973
        %v4806 = vpop.f32.mrb[0].mxu0
        %v4807 = vadd.f32 %v4646, %v4806
        %v4808 = vpop.f32.mrb[0].mxu0
        %v4809 = vpop.f32.mrb[0].mxu0
        %v4810 = vadd.f32 %v4649, %v4809
        %v4811 = vpop.f32.mrb[0].mxu0
        %4812 = vmatprep.mubr.bf16.mxu0 %v3982
        %4813 = vmatmul.mubr.bf16.gmra.mrb[0].mxu0 %v3981
        %v4814 = vpop.f32.mrb[0].mxu0
        %v4815 = vadd.f32 %v4654, %v4814
        %v4816 = vpop.f32.mrb[0].mxu0
        %v4817 = vpop.f32.mrb[0].mxu0
        %v4818 = vadd.f32 %v4657, %v4817
        %v4819 = vpop.f32.mrb[0].mxu0
        %4820 = vmatprep.mubr.bf16.mxu0 %v3990
        %4821 = vmatmul.mubr.bf16.gmra.mrb[0].mxu0 %v3989
        %v4822 = vpop.f32.mrb[0].mxu0
        %v4823 = vadd.f32 %v4662, %v4822
        %v4824 = vpop.f32.mrb[0].mxu0
        %v4825 = vpop.f32.mrb[0].mxu0
        %v4826 = vadd.f32 %v4665, %v4825
        %v4827 = vpop.f32.mrb[0].mxu0
        %4828 = vmatprep.mubr.bf16.mxu0 %v3998
        %4829 = vmatmul.mubr.bf16.gmra.mrb[0].mxu0 %v3997
        %v4830 = vpop.f32.mrb[0].mxu0
        %v4831 = vadd.f32 %v4670, %v4830
        %v4832 = vpop.f32.mrb[0].mxu0
        %v4833 = vpop.f32.mrb[0].mxu0
        %v4834 = vadd.f32 %v4673, %v4833
        %v4835 = vpop.f32.mrb[0].mxu0
        %4836 = vmatprep.mubr.bf16.mxu0 %v4006
        %4837 = vmatmul.mubr.bf16.gmra.mrb[0].mxu0 %v4005
        %v4838 = vpop.f32.mrb[0].mxu0
        %v4839 = vadd.f32 %v4678, %v4838
        %v4840 = vpop.f32.mrb[0].mxu0
        %v4841 = vpop.f32.mrb[0].mxu0
        %v4842 = vadd.f32 %v4681, %v4841
        %v4843 = vpop.f32.mrb[0].mxu0
        %4844 = vmatprep.mubr.bf16.mxu0 %v4014
        %4845 = vmatmul.mubr.bf16.gmra.mrb[0].mxu0 %v4013
        %v4846 = vpop.f32.mrb[0].mxu0
        %v4847 = vadd.f32 %v4686, %v4846
        %v4848 = vpop.f32.mrb[0].mxu0
        %v4849 = vpop.f32.mrb[0].mxu0
        %v4850 = vadd.f32 %v4689, %v4849
        %v4851 = vpop.f32.mrb[0].mxu0
        %4852 = vmatprep.mubr.bf16.mxu0 %v4022
        %4853 = vmatmul.mubr.bf16.gmra.mrb[0].mxu0 %v4021
        %v4854 = vpop.f32.mrb[0].mxu0
        %v4855 = vadd.f32 %v4694, %v4854
        %v4856 = vpop.f32.mrb[0].mxu0
        %v4857 = vpop.f32.mrb[0].mxu0
        %v4858 = vadd.f32 %v4697, %v4857
        %v4859 = vpop.f32.mrb[0].mxu0
        %4860 = vmatprep.mubr.bf16.mxu0 %v4030
        %4861 = vmatmul.mubr.bf16.gmra.mrb[0].mxu0 %v4029
        %v4862 = vpop.f32.mrb[0].mxu0
        %v4863 = vadd.f32 %v4702, %v4862
        %v4864 = vpop.f32.mrb[0].mxu0
        %v4865 = vpop.f32.mrb[0].mxu0
        %v4866 = vadd.f32 %v4705, %v4865
        %v4867 = vpop.f32.mrb[0].mxu0
        %4868 = vmatprep.mubr.bf16.mxu0 %v4038
        %4869 = vmatmul.mubr.bf16.gmra.mrb[0].mxu0 %v4037
        %v4870 = vpop.f32.mrb[0].mxu0
        %v4871 = vadd.f32 %v4710, %v4870
        %v4872 = vpop.f32.mrb[0].mxu0
        %v4873 = vpop.f32.mrb[0].mxu0
        %v4874 = vadd.f32 %v4713, %v4873
        %v4875 = vpop.f32.mrb[0].mxu0
        %4876 = vmatprep.mubr.bf16.mxu0 %v4046
        %4877 = vmatmul.mubr.bf16.gmra.mrb[0].mxu0 %v4045
        %v4878 = vpop.f32.mrb[0].mxu0
        %v4879 = vadd.f32 %v4718, %v4878
        %v4880 = vpop.f32.mrb[0].mxu0
        %v4881 = vpop.f32.mrb[0].mxu0
        %v4882 = vadd.f32 %v4721, %v4881
        %v4883 = vpop.f32.mrb[0].mxu0
        %4884 = vdwg.mxu0
        %4885 = vmatprep.subr.bf16.mxu0 0
        %4886 = vmatpush1.bf16.msra.mxu0 %v4467
        %4887 = vmatprep.subr.bf16.mxu0 0
        %4888 = vmatpush1.bf16.msra.mxu0 %v4468
        %4889 = vmatprep.subr.bf16.mxu0 0
        %4890 = vmatpush1.bf16.msra.mxu0 %v4469
        %4891 = vmatprep.subr.bf16.mxu0 0
        %4892 = vmatpush1.bf16.msra.mxu0 %v4470
        %4893 = vmatprep.subr.bf16.mxu0 0
        %4894 = vmatpush1.bf16.msra.mxu0 %v4471
        %4895 = vmatprep.subr.bf16.mxu0 0
        %4896 = vmatpush1.bf16.msra.mxu0 %v4472
        %4897 = vmatprep.subr.bf16.mxu0 0
        %4898 = vmatpush1.bf16.msra.mxu0 %v4473
        %4899 = vmatprep.subr.bf16.mxu0 0
        %4900 = vmatpush1.bf16.msra.mxu0 %v4474
        %4901 = vmatprep.subr.bf16.mxu0 0
        %4902 = vmatpush1.bf16.msra.mxu0 %v4475
        %4903 = vmatprep.subr.bf16.mxu0 0
        %4904 = vmatpush1.bf16.msra.mxu0 %v4476
        %4905 = vmatprep.subr.bf16.mxu0 0
        %4906 = vmatpush1.bf16.msra.mxu0 %v4477
        %4907 = vmatprep.subr.bf16.mxu0 0
        %4908 = vmatpush1.bf16.msra.mxu0 %v4478
        %4909 = vmatprep.subr.bf16.mxu0 0
        %4910 = vmatpush1.bf16.msra.mxu0 %v4479
        %4911 = vmatprep.subr.bf16.mxu0 0
        %4912 = vmatpush1.bf16.msra.mxu0 %v4480
        %4913 = vmatprep.subr.bf16.mxu0 0
        %4914 = vmatpush1.bf16.msra.mxu0 %v4481
        %4915 = vmatprep.subr.bf16.mxu0 0
        %4916 = vmatpush1.bf16.msra.mxu0 %v4482
        %4917 = vmatprep.mubr.bf16.mxu0 %v3928
        %4918 = vmatmul.mubr.bf16.gmra.mrb[0].mxu0 %v3927
        %v4919 = vpop.f32.mrb[0].mxu0
        %v4920 = vadd.f32 %v4759, %v4919
        %v4921 = vpop.f32.mrb[0].mxu0
        %v4922 = vpop.f32.mrb[0].mxu0
        %v4923 = vadd.f32 %v4762, %v4922
        %v4924 = vpop.f32.mrb[0].mxu0
        %4925 = vmatprep.mubr.bf16.mxu0 %v3936
        %4926 = vmatmul.mubr.bf16.gmra.mrb[0].mxu0 %v3935
        %v4927 = vpop.f32.mrb[0].mxu0
        %v4928 = vadd.f32 %v4767, %v4927
        %v4929 = vpop.f32.mrb[0].mxu0
        %v4930 = vpop.f32.mrb[0].mxu0
        %v4931 = vadd.f32 %v4770, %v4930
        %v4932 = vpop.f32.mrb[0].mxu0
        %4933 = vmatprep.mubr.bf16.mxu0 %v3944
        %4934 = vmatmul.mubr.bf16.gmra.mrb[0].mxu0 %v3943
        %v4935 = vpop.f32.mrb[0].mxu0
        %v4936 = vadd.f32 %v4775, %v4935
        %v4937 = vpop.f32.mrb[0].mxu0
        %v4938 = vpop.f32.mrb[0].mxu0
        %v4939 = vadd.f32 %v4778, %v4938
        %v4940 = vpop.f32.mrb[0].mxu0
        %4941 = vmatprep.mubr.bf16.mxu0 %v3952
        %4942 = vmatmul.mubr.bf16.gmra.mrb[0].mxu0 %v3951
        %v4943 = vpop.f32.mrb[0].mxu0
        %v4944 = vadd.f32 %v4783, %v4943
        %v4945 = vpop.f32.mrb[0].mxu0
        %v4946 = vpop.f32.mrb[0].mxu0
        %v4947 = vadd.f32 %v4786, %v4946
        %v4948 = vpop.f32.mrb[0].mxu0
        %4949 = vmatprep.mubr.bf16.mxu0 %v3960
        %4950 = vmatmul.mubr.bf16.gmra.mrb[0].mxu0 %v3959
        %v4951 = vpop.f32.mrb[0].mxu0
        %v4952 = vadd.f32 %v4791, %v4951
        %v4953 = vpop.f32.mrb[0].mxu0
        %v4954 = vpop.f32.mrb[0].mxu0
        %v4955 = vadd.f32 %v4794, %v4954
        %v4956 = vpop.f32.mrb[0].mxu0
        %4957 = vmatprep.mubr.bf16.mxu0 %v3968
        %4958 = vmatmul.mubr.bf16.gmra.mrb[0].mxu0 %v3967
        %v4959 = vpop.f32.mrb[0].mxu0
        %v4960 = vadd.f32 %v4799, %v4959
        %v4961 = vpop.f32.mrb[0].mxu0
        %v4962 = vpop.f32.mrb[0].mxu0
        %v4963 = vadd.f32 %v4802, %v4962
        %v4964 = vpop.f32.mrb[0].mxu0
        %4965 = vmatprep.mubr.bf16.mxu0 %v3976
        %4966 = vmatmul.mubr.bf16.gmra.mrb[0].mxu0 %v3975
        %v4967 = vpop.f32.mrb[0].mxu0
        %v4968 = vadd.f32 %v4807, %v4967
        %v4969 = vpop.f32.mrb[0].mxu0
        %v4970 = vpop.f32.mrb[0].mxu0
        %v4971 = vadd.f32 %v4810, %v4970
        %v4972 = vpop.f32.mrb[0].mxu0
        %4973 = vmatprep.mubr.bf16.mxu0 %v3984
        %4974 = vmatmul.mubr.bf16.gmra.mrb[0].mxu0 %v3983
        %v4975 = vpop.f32.mrb[0].mxu0
        %v4976 = vadd.f32 %v4815, %v4975
        %v4977 = vpop.f32.mrb[0].mxu0
        %v4978 = vpop.f32.mrb[0].mxu0
        %v4979 = vadd.f32 %v4818, %v4978
        %v4980 = vpop.f32.mrb[0].mxu0
        %4981 = vmatprep.mubr.bf16.mxu0 %v3992
        %4982 = vmatmul.mubr.bf16.gmra.mrb[0].mxu0 %v3991
        %v4983 = vpop.f32.mrb[0].mxu0
        %v4984 = vadd.f32 %v4823, %v4983
        %v4985 = vpop.f32.mrb[0].mxu0
        %v4986 = vpop.f32.mrb[0].mxu0
        %v4987 = vadd.f32 %v4826, %v4986
        %v4988 = vpop.f32.mrb[0].mxu0
        %4989 = vmatprep.mubr.bf16.mxu0 %v4000
        %4990 = vmatmul.mubr.bf16.gmra.mrb[0].mxu0 %v3999
        %v4991 = vpop.f32.mrb[0].mxu0
        %v4992 = vadd.f32 %v4831, %v4991
        %v4993 = vpop.f32.mrb[0].mxu0
        %v4994 = vpop.f32.mrb[0].mxu0
        %v4995 = vadd.f32 %v4834, %v4994
        %v4996 = vpop.f32.mrb[0].mxu0
        %4997 = vmatprep.mubr.bf16.mxu0 %v4008
        %4998 = vmatmul.mubr.bf16.gmra.mrb[0].mxu0 %v4007
        %v4999 = vpop.f32.mrb[0].mxu0
        %v5000 = vadd.f32 %v4839, %v4999
        %v5001 = vpop.f32.mrb[0].mxu0
        %v5002 = vpop.f32.mrb[0].mxu0
        %v5003 = vadd.f32 %v4842, %v5002
        %v5004 = vpop.f32.mrb[0].mxu0
        %5005 = vmatprep.mubr.bf16.mxu0 %v4016
        %5006 = vmatmul.mubr.bf16.gmra.mrb[0].mxu0 %v4015
        %v5007 = vpop.f32.mrb[0].mxu0
        %v5008 = vadd.f32 %v4847, %v5007
        %v5009 = vpop.f32.mrb[0].mxu0
        %v5010 = vpop.f32.mrb[0].mxu0
        %v5011 = vadd.f32 %v4850, %v5010
        %v5012 = vpop.f32.mrb[0].mxu0
        %5013 = vmatprep.mubr.bf16.mxu0 %v4024
        %5014 = vmatmul.mubr.bf16.gmra.mrb[0].mxu0 %v4023
        %v5015 = vpop.f32.mrb[0].mxu0
        %v5016 = vadd.f32 %v4855, %v5015
        %v5017 = vpop.f32.mrb[0].mxu0
        %v5018 = vpop.f32.mrb[0].mxu0
        %v5019 = vadd.f32 %v4858, %v5018
        %v5020 = vpop.f32.mrb[0].mxu0
        %5021 = vmatprep.mubr.bf16.mxu0 %v4032
        %5022 = vmatmul.mubr.bf16.gmra.mrb[0].mxu0 %v4031
        %v5023 = vpop.f32.mrb[0].mxu0
        %v5024 = vadd.f32 %v4863, %v5023
        %v5025 = vpop.f32.mrb[0].mxu0
        %v5026 = vpop.f32.mrb[0].mxu0
        %v5027 = vadd.f32 %v4866, %v5026
        %v5028 = vpop.f32.mrb[0].mxu0
        %5029 = vmatprep.mubr.bf16.mxu0 %v4040
        %5030 = vmatmul.mubr.bf16.gmra.mrb[0].mxu0 %v4039
        %v5031 = vpop.f32.mrb[0].mxu0
        %v5032 = vadd.f32 %v4871, %v5031
        %v5033 = vpop.f32.mrb[0].mxu0
        %v5034 = vpop.f32.mrb[0].mxu0
        %v5035 = vadd.f32 %v4874, %v5034
        %v5036 = vpop.f32.mrb[0].mxu0
        %5037 = vmatprep.mubr.bf16.mxu0 %v4048
        %5038 = vmatmul.mubr.bf16.gmra.mrb[0].mxu0 %v4047
        %v5039 = vpop.f32.mrb[0].mxu0
        %v5040 = vadd.f32 %v4879, %v5039
        %v5041 = vpop.f32.mrb[0].mxu0
        %v5042 = vpop.f32.mrb[0].mxu0
        %v5043 = vadd.f32 %v4882, %v5042
        %v5044 = vpop.f32.mrb[0].mxu0
        %5045 = vdwg.mxu0
        %5046 = vmatprep.subr.bf16.mxu0 0
        %5047 = vmatpush1.bf16.msra.mxu0 %v4483
        %5048 = vmatprep.subr.bf16.mxu0 0
        %5049 = vmatpush1.bf16.msra.mxu0 %v4484
        %5050 = vmatprep.subr.bf16.mxu0 0
        %5051 = vmatpush1.bf16.msra.mxu0 %v4485
        %5052 = vmatprep.subr.bf16.mxu0 0
        %5053 = vmatpush1.bf16.msra.mxu0 %v4486
        %5054 = vmatprep.subr.bf16.mxu0 0
        %5055 = vmatpush1.bf16.msra.mxu0 %v4487
        %5056 = vmatprep.subr.bf16.mxu0 0
        %5057 = vmatpush1.bf16.msra.mxu0 %v4488
        %5058 = vmatprep.subr.bf16.mxu0 0
        %5059 = vmatpush1.bf16.msra.mxu0 %v4489
        %5060 = vmatprep.subr.bf16.mxu0 0
        %5061 = vmatpush1.bf16.msra.mxu0 %v4490
        %5062 = vmatprep.subr.bf16.mxu0 0
        %5063 = vmatpush1.bf16.msra.mxu0 %v4491
        %5064 = vmatprep.subr.bf16.mxu0 0
        %5065 = vmatpush1.bf16.msra.mxu0 %v4492
        %5066 = vmatprep.subr.bf16.mxu0 0
        %5067 = vmatpush1.bf16.msra.mxu0 %v4493
        %5068 = vmatprep.subr.bf16.mxu0 0
        %5069 = vmatpush1.bf16.msra.mxu0 %v4494
        %5070 = vmatprep.subr.bf16.mxu0 0
        %5071 = vmatpush1.bf16.msra.mxu0 %v4495
        %5072 = vmatprep.subr.bf16.mxu0 0
        %5073 = vmatpush1.bf16.msra.mxu0 %v4496
        %5074 = vmatprep.subr.bf16.mxu0 0
        %5075 = vmatpush1.bf16.msra.mxu0 %v4497
        %5076 = vmatprep.subr.bf16.mxu0 0
        %5077 = vmatpush1.bf16.msra.mxu0 %v4498
        %5078 = vmatprep.mubr.bf16.mxu0 %v3930
        %5079 = vmatmul.mubr.bf16.gmra.mrb[0].mxu0 %v3929
        %v5080 = vpop.f32.mrb[0].mxu0
        %v5081 = vadd.f32 %v4920, %v5080
        %v5082 = vpop.f32.mrb[0].mxu0
        %v5083 = vpop.f32.mrb[0].mxu0
        %v5084 = vadd.f32 %v4923, %v5083
        %v5085 = vpop.f32.mrb[0].mxu0
        %5086 = vmatprep.mubr.bf16.mxu0 %v3938
        %5087 = vmatmul.mubr.bf16.gmra.mrb[0].mxu0 %v3937
        %v5088 = vpop.f32.mrb[0].mxu0
        %v5089 = vadd.f32 %v4928, %v5088
        %v5090 = vpop.f32.mrb[0].mxu0
        %v5091 = vpop.f32.mrb[0].mxu0
        %v5092 = vadd.f32 %v4931, %v5091
        %v5093 = vpop.f32.mrb[0].mxu0
        %5094 = vmatprep.mubr.bf16.mxu0 %v3946
        %5095 = vmatmul.mubr.bf16.gmra.mrb[0].mxu0 %v3945
        %v5096 = vpop.f32.mrb[0].mxu0
        %v5097 = vadd.f32 %v4936, %v5096
        %v5098 = vpop.f32.mrb[0].mxu0
        %v5099 = vpop.f32.mrb[0].mxu0
        %v5100 = vadd.f32 %v4939, %v5099
        %v5101 = vpop.f32.mrb[0].mxu0
        %5102 = vmatprep.mubr.bf16.mxu0 %v3954
        %5103 = vmatmul.mubr.bf16.gmra.mrb[0].mxu0 %v3953
        %v5104 = vpop.f32.mrb[0].mxu0
        %v5105 = vadd.f32 %v4944, %v5104
        %v5106 = vpop.f32.mrb[0].mxu0
        %v5107 = vpop.f32.mrb[0].mxu0
        %v5108 = vadd.f32 %v4947, %v5107
        %v5109 = vpop.f32.mrb[0].mxu0
        %5110 = vmatprep.mubr.bf16.mxu0 %v3962
        %5111 = vmatmul.mubr.bf16.gmra.mrb[0].mxu0 %v3961
        %v5112 = vpop.f32.mrb[0].mxu0
        %v5113 = vadd.f32 %v4952, %v5112
        %v5114 = vpop.f32.mrb[0].mxu0
        %v5115 = vpop.f32.mrb[0].mxu0
        %v5116 = vadd.f32 %v4955, %v5115
        %v5117 = vpop.f32.mrb[0].mxu0
        %5118 = vmatprep.mubr.bf16.mxu0 %v3970
        %5119 = vmatmul.mubr.bf16.gmra.mrb[0].mxu0 %v3969
        %v5120 = vpop.f32.mrb[0].mxu0
        %v5121 = vadd.f32 %v4960, %v5120
        %v5122 = vpop.f32.mrb[0].mxu0
        %v5123 = vpop.f32.mrb[0].mxu0
        %v5124 = vadd.f32 %v4963, %v5123
        %v5125 = vpop.f32.mrb[0].mxu0
        %5126 = vmatprep.mubr.bf16.mxu0 %v3978
        %5127 = vmatmul.mubr.bf16.gmra.mrb[0].mxu0 %v3977
        %v5128 = vpop.f32.mrb[0].mxu0
        %v5129 = vadd.f32 %v4968, %v5128
        %v5130 = vpop.f32.mrb[0].mxu0
        %v5131 = vpop.f32.mrb[0].mxu0
        %v5132 = vadd.f32 %v4971, %v5131
        %v5133 = vpop.f32.mrb[0].mxu0
        %5134 = vmatprep.mubr.bf16.mxu0 %v3986
        %5135 = vmatmul.mubr.bf16.gmra.mrb[0].mxu0 %v3985
        %v5136 = vpop.f32.mrb[0].mxu0
        %v5137 = vadd.f32 %v4976, %v5136
        %v5138 = vpop.f32.mrb[0].mxu0
        %v5139 = vpop.f32.mrb[0].mxu0
        %v5140 = vadd.f32 %v4979, %v5139
        %v5141 = vpop.f32.mrb[0].mxu0
        %5142 = vmatprep.mubr.bf16.mxu0 %v3994
        %5143 = vmatmul.mubr.bf16.gmra.mrb[0].mxu0 %v3993
        %v5144 = vpop.f32.mrb[0].mxu0
        %v5145 = vadd.f32 %v4984, %v5144
        %v5146 = vpop.f32.mrb[0].mxu0
        %v5147 = vpop.f32.mrb[0].mxu0
        %v5148 = vadd.f32 %v4987, %v5147
        %v5149 = vpop.f32.mrb[0].mxu0
        %5150 = vmatprep.mubr.bf16.mxu0 %v4002
        %5151 = vmatmul.mubr.bf16.gmra.mrb[0].mxu0 %v4001
        %v5152 = vpop.f32.mrb[0].mxu0
        %v5153 = vadd.f32 %v4992, %v5152
        %v5154 = vpop.f32.mrb[0].mxu0
        %v5155 = vpop.f32.mrb[0].mxu0
        %v5156 = vadd.f32 %v4995, %v5155
        %v5157 = vpop.f32.mrb[0].mxu0
        %5158 = vmatprep.mubr.bf16.mxu0 %v4010
        %5159 = vmatmul.mubr.bf16.gmra.mrb[0].mxu0 %v4009
        %v5160 = vpop.f32.mrb[0].mxu0
        %v5161 = vadd.f32 %v5000, %v5160
        %v5162 = vpop.f32.mrb[0].mxu0
        %v5163 = vpop.f32.mrb[0].mxu0
        %v5164 = vadd.f32 %v5003, %v5163
        %v5165 = vpop.f32.mrb[0].mxu0
        %5166 = vmatprep.mubr.bf16.mxu0 %v4018
        %5167 = vmatmul.mubr.bf16.gmra.mrb[0].mxu0 %v4017
        %v5168 = vpop.f32.mrb[0].mxu0
        %v5169 = vadd.f32 %v5008, %v5168
        %v5170 = vpop.f32.mrb[0].mxu0
        %v5171 = vpop.f32.mrb[0].mxu0
        %v5172 = vadd.f32 %v5011, %v5171
        %v5173 = vpop.f32.mrb[0].mxu0
        %5174 = vmatprep.mubr.bf16.mxu0 %v4026
        %5175 = vmatmul.mubr.bf16.gmra.mrb[0].mxu0 %v4025
        %v5176 = vpop.f32.mrb[0].mxu0
        %v5177 = vadd.f32 %v5016, %v5176
        %v5178 = vpop.f32.mrb[0].mxu0
        %v5179 = vpop.f32.mrb[0].mxu0
        %v5180 = vadd.f32 %v5019, %v5179
        %v5181 = vpop.f32.mrb[0].mxu0
        %5182 = vmatprep.mubr.bf16.mxu0 %v4034
        %5183 = vmatmul.mubr.bf16.gmra.mrb[0].mxu0 %v4033
        %v5184 = vpop.f32.mrb[0].mxu0
        %v5185 = vadd.f32 %v5024, %v5184
        %v5186 = vpop.f32.mrb[0].mxu0
        %v5187 = vpop.f32.mrb[0].mxu0
        %v5188 = vadd.f32 %v5027, %v5187
        %v5189 = vpop.f32.mrb[0].mxu0
        %5190 = vmatprep.mubr.bf16.mxu0 %v4042
        %5191 = vmatmul.mubr.bf16.gmra.mrb[0].mxu0 %v4041
        %v5192 = vpop.f32.mrb[0].mxu0
        %v5193 = vadd.f32 %v5032, %v5192
        %v5194 = vpop.f32.mrb[0].mxu0
        %v5195 = vpop.f32.mrb[0].mxu0
        %v5196 = vadd.f32 %v5035, %v5195
        %v5197 = vpop.f32.mrb[0].mxu0
        %5198 = vmatprep.mubr.bf16.mxu0 %v4050
        %5199 = vmatmul.mubr.bf16.gmra.mrb[0].mxu0 %v4049
        %v5200 = vpop.f32.mrb[0].mxu0
        %v5201 = vadd.f32 %v5040, %v5200
        %v5202 = vpop.f32.mrb[0].mxu0
        %v5203 = vpop.f32.mrb[0].mxu0
        %v5204 = vadd.f32 %v5043, %v5203
        %v5205 = vpop.f32.mrb[0].mxu0
        %5206 = vdwg.mxu0
        %v5207 = vpack.c.bf16 %v5084, %v5081
        %v5208 = vpack.c.bf16 %v5092, %v5089
        %v5209 = vpack.c.bf16 %v5100, %v5097
        %v5210 = vpack.c.bf16 %v5108, %v5105
        %v5211 = vpack.c.bf16 %v5116, %v5113
        %v5212 = vpack.c.bf16 %v5124, %v5121
        %v5213 = vpack.c.bf16 %v5132, %v5129
        %v5214 = vpack.c.bf16 %v5140, %v5137
        %v5215 = vpack.c.bf16 %v5148, %v5145
        %v5216 = vpack.c.bf16 %v5156, %v5153
        %v5217 = vpack.c.bf16 %v5164, %v5161
        %v5218 = vpack.c.bf16 %v5172, %v5169
        %v5219 = vpack.c.bf16 %v5180, %v5177
        %v5220 = vpack.c.bf16 %v5188, %v5185
        %v5221 = vpack.c.bf16 %v5196, %v5193
        %v5222 = vpack.c.bf16 %v5204, %v5201
        %v5239 = vunpack.c.l.b16 %v5207
        %v5240 = vunpack.c.h.b16 %v5207
        %v5241 = vunpack.c.l.b16 %v5208
        %v5242 = vunpack.c.h.b16 %v5208
        %v5243 = vunpack.c.l.b16 %v5209
        %v5244 = vunpack.c.h.b16 %v5209
        %v5245 = vunpack.c.l.b16 %v5210
        %v5246 = vunpack.c.h.b16 %v5210
        %v5247 = vunpack.c.l.b16 %v5211
        %v5248 = vunpack.c.h.b16 %v5211
        %v5249 = vunpack.c.l.b16 %v5212
        %v5250 = vunpack.c.h.b16 %v5212
        %v5251 = vunpack.c.l.b16 %v5213
        %v5252 = vunpack.c.h.b16 %v5213
        %v5253 = vunpack.c.l.b16 %v5214
        %v5254 = vunpack.c.h.b16 %v5214
        %v5255 = vunpack.c.l.b16 %v5215
        %v5256 = vunpack.c.h.b16 %v5215
        %v5257 = vunpack.c.l.b16 %v5216
        %v5258 = vunpack.c.h.b16 %v5216
        %v5259 = vunpack.c.l.b16 %v5217
        %v5260 = vunpack.c.h.b16 %v5217
        %v5261 = vunpack.c.l.b16 %v5218
        %v5262 = vunpack.c.h.b16 %v5218
        %v5263 = vunpack.c.l.b16 %v5219
        %v5264 = vunpack.c.h.b16 %v5219
        %v5265 = vunpack.c.l.b16 %v5220
        %v5266 = vunpack.c.h.b16 %v5220
        %v5267 = vunpack.c.l.b16 %v5221
        %v5268 = vunpack.c.h.b16 %v5221
        %v5269 = vunpack.c.l.b16 %v5222
        %v5270 = vunpack.c.h.b16 %v5222
        %v5271 = vpack.c.b16 %v5239, %v5239
        %v5272 = vpack.c.b16 %v5240, %v5240
        %v5273 = vpack.c.b16 %v5241, %v5241
        %v5274 = vpack.c.b16 %v5242, %v5242
        %v5275 = vpack.c.b16 %v5243, %v5243
        %v5276 = vpack.c.b16 %v5244, %v5244
        %v5277 = vpack.c.b16 %v5245, %v5245
        %v5278 = vpack.c.b16 %v5246, %v5246
        %v5279 = vpack.c.b16 %v5247, %v5247
        %v5280 = vpack.c.b16 %v5248, %v5248
        %v5281 = vpack.c.b16 %v5249, %v5249
        %v5282 = vpack.c.b16 %v5250, %v5250
        %v5283 = vpack.c.b16 %v5251, %v5251
        %v5284 = vpack.c.b16 %v5252, %v5252
        %v5285 = vpack.c.b16 %v5253, %v5253
        %v5286 = vpack.c.b16 %v5254, %v5254
        %v5287 = vpack.c.b16 %v5255, %v5255
        %v5288 = vpack.c.b16 %v5256, %v5256
        %v5289 = vpack.c.b16 %v5257, %v5257
        %v5290 = vpack.c.b16 %v5258, %v5258
        %v5291 = vpack.c.b16 %v5259, %v5259
        %v5292 = vpack.c.b16 %v5260, %v5260
        %v5293 = vpack.c.b16 %v5261, %v5261
        %v5294 = vpack.c.b16 %v5262, %v5262
        %v5295 = vpack.c.b16 %v5263, %v5263
        %v5296 = vpack.c.b16 %v5264, %v5264
        %v5297 = vpack.c.b16 %v5265, %v5265
        %v5298 = vpack.c.b16 %v5266, %v5266
        %v5299 = vpack.c.b16 %v5267, %v5267
        %v5300 = vpack.c.b16 %v5268, %v5268
        %v5301 = vpack.c.b16 %v5269, %v5269
        %v5302 = vpack.c.b16 %v5270, %v5270
        %5335 = vst [vmem:[%s297 + $0x4] sm:$0xf] %v5271
        %5336 = vst [vmem:[%s297 + $0xc] sm:$0xf] %v5272
        %5337 = vst [vmem:[%s297 + $0x14] sm:$0xf] %v5273
        %5338 = vst [vmem:[%s297 + $0x1c] sm:$0xf] %v5274
        %5339 = vst [vmem:[%s297 + $0x24] sm:$0xf] %v5275
        %5340 = vst [vmem:[%s297 + $0x2c] sm:$0xf] %v5276
        %5341 = vst [vmem:[%s297 + $0x34] sm:$0xf] %v5277
        %5342 = vst [vmem:[%s297 + $0x3c] sm:$0xf] %v5278
        %5343 = vst [vmem:[%s297 + $0x44] sm:$0xf] %v5279
        %5344 = vst [vmem:[%s297 + $0x4c] sm:$0xf] %v5280
        %5345 = vst [vmem:[%s297 + $0x54] sm:$0xf] %v5281
        %5346 = vst [vmem:[%s297 + $0x5c] sm:$0xf] %v5282
        %5347 = vst [vmem:[%s297 + $0x64] sm:$0xf] %v5283
        %5348 = vst [vmem:[%s297 + $0x6c] sm:$0xf] %v5284
        %5349 = vst [vmem:[%s297 + $0x74] sm:$0xf] %v5285
        %5350 = vst [vmem:[%s297 + $0x7c] sm:$0xf] %v5286
        %5351 = vst [vmem:[%s297 + $0x84] sm:$0xf] %v5287
        %5352 = vst [vmem:[%s297 + $0x8c] sm:$0xf] %v5288
        %5353 = vst [vmem:[%s297 + $0x94] sm:$0xf] %v5289
        %5354 = vst [vmem:[%s297 + $0x9c] sm:$0xf] %v5290
        %5355 = vst [vmem:[%s297 + $0xa4] sm:$0xf] %v5291
        %5356 = vst [vmem:[%s297 + $0xac] sm:$0xf] %v5292
        %5357 = vst [vmem:[%s297 + $0xb4] sm:$0xf] %v5293
        %5358 = vst [vmem:[%s297 + $0xbc] sm:$0xf] %v5294
        %5359 = vst [vmem:[%s297 + $0xc4] sm:$0xf] %v5295
        %5360 = vst [vmem:[%s297 + $0xcc] sm:$0xf] %v5296
        %5361 = vst [vmem:[%s297 + $0xd4] sm:$0xf] %v5297
        %5362 = vst [vmem:[%s297 + $0xdc] sm:$0xf] %v5298
        %5363 = vst [vmem:[%s297 + $0xe4] sm:$0xf] %v5299
        %5364 = vst [vmem:[%s297 + $0xec] sm:$0xf] %v5300
        %5365 = vst [vmem:[%s297 + $0xf4] sm:$0xf] %v5301
        %5366 = vst [vmem:[%s297 + $0xfc] sm:$0xf] %v5302
        %s5367 = sand.u32 %s142, 1
        %s5368 = scalar_lea.sflag [#allocation4], %s5367
        %s5369 = sand.u32 %s142, 1
        %s5370 = smul.addr %s5369, 256
        %s5371 = scalar_lea.vmem [#allocation11], %s5370
        // Predicated region
        $region61: #{tpu_custom_call.1} parent=39 // pred_check
          %p5372 = pneg %p152
        $region62: #{tpu_custom_call.1} parent=39 // pred_check_branch
          %5374 = sbr.rel (%p5372) target = $region64
        $region63: #{tpu_custom_call.1} parent=39 // pred_region
          %s5375 = smul.u32 32, %s24
          %s5377 = ssub.s32 4096, 4096
          %5378 = vsyncadd %s5368, %s5377
          %s5379 = smul.addr %s5375, 2
          %s5380 = smul.addr %s5379, 64
          %s5381 = scalar_lea.hbm %s5, %s5380
          %s5382 = sshll.u32 %s5371, 4
          %s5383 = int_to_ptr.vmem [resolvable:$true] %s5382
          %5388 = dma.vmem_to_hbm [thread:$0]  %s5383, 4096, %s5381, %s5368, 128, 128, 8
        $region64: #{tpu_custom_call.1} parent=39 // pred_fallthru
          _
      $region40: #{tpu_custom_call.1} parent=5 // pred_fallthru
        _
      %p5389 = scmp.le.s32.totalorder 2, %s19
      // Predicated region
      $region65: #{tpu_custom_call.1} parent=5 // pred_check
        %p5390 = pneg %p5389
      $region66: #{tpu_custom_call.1} parent=5 // pred_check_branch
        %5392 = sbr.rel (%p5390) target = $region68
      $region67: #{tpu_custom_call.1} parent=5 // pred_region
        %s5393 = ssub.s32 %s19, 2
        // Predicated region
        $region69: #{tpu_custom_call.1} parent=67 // pred_check
          %p5394 = pneg %p158
        $region70: #{tpu_custom_call.1} parent=67 // pred_check_branch
          %5396 = sbr.rel (%p5394) target = $region72
        $region71: #{tpu_custom_call.1} parent=67 // pred_region
          %s5397 = sand.u32 %s143, 1
          %s5398 = scalar_lea.sflag [#allocation4], %s5397
          %s5399 = sand.u32 %s143, 1
          %s5400 = smul.addr %s5399, 256
          %s5401 = scalar_lea.vmem [#allocation11], %s5400
          %5402 = dma.done %s5398, 4096
        $region72: #{tpu_custom_call.1} parent=67 // pred_fallthru
          _
      $region68: #{tpu_custom_call.1} parent=5 // pred_fallthru
        _
    $region6: #{tpu_custom_call.1} parent=1 // loop_footer
      %s23 = sadd.s32 1, %s19
    $region7: #{tpu_custom_call.1} parent=1 // loop_footer_branch
      %18 = sbr.rel target = $region3
    $region8: #{tpu_custom_call.1} parent=1 // loop_exit
      _
    %5403 = vsyncpa [#allocation3], 1
    %s5404 = scalar_lea.sflag [#allocation3], 1
    %5405 = vsyncpa %s5404, 1
    %5406 = vsyncpa [#allocation6], 1
    %5407 = vsyncpa [#allocation9], 1
    %5408 = vsyncpa [#allocation4], 1
    %s5409 = scalar_lea.sflag [#allocation4], 1
    %5410 = vsyncpa %s5409, 1

</llo_original>
